<compile_context>
chip_gen: v7x
topology: tpu7x:2x2x1
jax: 0.10.0
libtpu: 0.0.40
codegen_flags: <defaults>
</compile_context>

<pallas_src>
import math
from functools import partial

import jax
import jax.numpy as jnp
from jax.experimental import pallas as pl
from jax.experimental.pallas import tpu as pltpu

_NEG = -1e30  # finite "minus infinity" (avoids exp(-inf - -inf) NaNs)


# ------------------------------------------------------------------
# tile selection: biggest MXU-friendly tile that divides the dim,
# falling back to the full dim (allowed by the (8,128) rule).
# ------------------------------------------------------------------
def _pick_tile(dim, candidates=(512, 256, 128)):
    for c in candidates:
        if dim % c == 0:
            return c
    return dim


# ------------------------------------------------------------------
# Kernel 1: head-major fused projection
#   x (N, L, H) @ W[j] + b[j]  ->  out (N, n_mats, L, dh)
#   (n_mats = 3*heads for fused QKV, 2*heads for fused KV, heads for Q)
# ------------------------------------------------------------------
def _proj_kernel(x_ref, w_ref, b_ref, o_ref, acc_ref):
    k = pl.program_id(2)

    @pl.when(k == 0)
    def _():
        acc_ref[...] = jnp.zeros_like(acc_ref)

    acc_ref[...] += jnp.dot(x_ref[0], w_ref[0],
                            preferred_element_type=jnp.float32)

    @pl.when(k == pl.num_programs(2) - 1)
    def _():
        o_ref[0, 0] = (acc_ref[...] + b_ref[0]).astype(o_ref.dtype)


def proj_headmajor(x, w, b):
    """x: (N, L, H) bf16; w: (n_mats, H, dh) bf16; b: (n_mats, 1, dh) f32
       -> (N, n_mats, L, dh) bf16."""
    N, L, H = x.shape
    n_mats, _, dh = w.shape
    tk = _pick_tile(H)
    return pl.pallas_call(
        _proj_kernel,
        out_shape=jax.ShapeDtypeStruct((N, n_mats, L, dh), x.dtype),
        grid=(N, n_mats, H // tk),
        in_specs=[
            pl.BlockSpec((1, L, tk), lambda n, j, k: (n, 0, k)),
            pl.BlockSpec((1, tk, dh), lambda n, j, k: (j, k, 0)),
            pl.BlockSpec((1, 1, dh), lambda n, j, k: (j, 0, 0)),
        ],
        out_specs=pl.BlockSpec((1, 1, L, dh), lambda n, j, k: (n, j, 0, 0)),
        scratch_shapes=[pltpu.VMEM((L, dh), jnp.float32)],
        compiler_params=pltpu.CompilerParams(
            dimension_semantics=("parallel", "parallel", "arbitrary"),
            vmem_limit_bytes=64 << 20),
    )(x, w, b)


# ------------------------------------------------------------------
# Kernel 2: flash-style multi-head attention
#   grid (N, heads, Lq/tq, Lkv/tkv), online softmax, in-kernel causal mask.
#   Softmax scale is folded into the Q projection weights at init.
# ------------------------------------------------------------------
def _flash_kernel(q_ref, k_ref, v_ref, o_ref, m_ref, l_ref, acc_ref, *,
                  causal, tq, tkv):
    qi = pl.program_id(2)
    ki = pl.program_id(3)

    @pl.when(ki == 0)
    def _():
        m_ref[...] = jnp.full_like(m_ref, _NEG)
        l_ref[...] = jnp.zeros_like(l_ref)
        acc_ref[...] = jnp.zeros_like(acc_ref)

    def compute():
        q = q_ref[0, 0]                                   # (tq, dh)  bf16
        k = k_ref[0, 0]                                   # (tkv, dh) bf16
        v = v_ref[0, 0]                                   # (tkv, dh) bf16
        s = jax.lax.dot_general(q, k, (((1,), (1,)), ((), ())),
                                preferred_element_type=jnp.float32)  # (tq, tkv)
        if causal:
            rows = qi * tq + jax.lax.broadcasted_iota(jnp.int32, (tq, tkv), 0)
            cols = ki * tkv + jax.lax.broadcasted_iota(jnp.int32, (tq, tkv), 1)
            s = jnp.where(cols <= rows, s, _NEG)
        m_prev = m_ref[...]
        m_new = jnp.maximum(m_prev, jnp.max(s, axis=-1, keepdims=True))
        alpha = jnp.exp(m_prev - m_new)
        p = jnp.exp(s - m_new)
        l_ref[...] = alpha * l_ref[...] + jnp.sum(p, axis=-1, keepdims=True)
        acc_ref[...] = alpha * acc_ref[...] + jnp.dot(
            p.astype(v.dtype), v, preferred_element_type=jnp.float32)
        m_ref[...] = m_new

    if causal:
        # skip KV blocks entirely above the diagonal (compute only)
        pl.when(qi * tq + (tq - 1) >= ki * tkv)(compute)
    else:
        compute()

    @pl.when(ki == pl.num_programs(3) - 1)
    def _():
        # approx reciprocal -> EUP slot; ~1e-3 relative error in row sums.
        o_ref[0, 0] = (acc_ref[...] *
                       pl.reciprocal(l_ref[...], approx=True)).astype(o_ref.dtype)


def flash_mha(q_arr, kv_arr, *, heads, k_off, v_off, causal):
    """q_arr: (N, >=heads, L, dh); kv_arr holds K heads at [k_off:k_off+heads]
       and V heads at [v_off:v_off+heads]. Returns (N, heads, L, dh) bf16."""
    N, _, L, dh = q_arr.shape
    tq = _pick_tile(L)
    tkv = _pick_tile(L)
    kernel = partial(_flash_kernel, causal=causal, tq=tq, tkv=tkv)
    return pl.pallas_call(
        kernel,
        out_shape=jax.ShapeDtypeStruct((N, heads, L, dh), q_arr.dtype),
        grid=(N, heads, L // tq, L // tkv),
        in_specs=[
            pl.BlockSpec((1, 1, tq, dh), lambda n, h, qi, ki: (n, h, qi, 0)),
            pl.BlockSpec((1, 1, tkv, dh),
                         lambda n, h, qi, ki: (n, k_off + h, ki, 0)),
            pl.BlockSpec((1, 1, tkv, dh),
                         lambda n, h, qi, ki: (n, v_off + h, ki, 0)),
        ],
        out_specs=pl.BlockSpec((1, 1, tq, dh),
                               lambda n, h, qi, ki: (n, h, qi, 0)),
        scratch_shapes=[pltpu.VMEM((tq, 1), jnp.float32),
                        pltpu.VMEM((tq, 1), jnp.float32),
                        pltpu.VMEM((tq, dh), jnp.float32)],
        compiler_params=pltpu.CompilerParams(
            dimension_semantics=("parallel", "parallel", "parallel", "arbitrary"),
            vmem_limit_bytes=64 << 20),
    )(q_arr, kv_arr, kv_arr)


# ------------------------------------------------------------------
# Kernel 3: fused  LayerNorm( concat_heads(x) @ Wo + b + residual )
#   reduces over the heads axis (dh columns per step).  Reused for the
#   FFN (single Linear) by viewing x as (N, 1, L, H) and W as (1, H, H).
# ------------------------------------------------------------------
def _headproj_res_ln_kernel(x_ref, w_ref, b_ref, r_ref, g_ref, bt_ref,
                            o_ref, acc_ref):
    h = pl.program_id(2)

    @pl.when(h == 0)
    def _():
        acc_ref[...] = jnp.zeros_like(acc_ref)

    acc_ref[...] += jnp.dot(x_ref[0, 0], w_ref[0],
                            preferred_element_type=jnp.float32)

    @pl.when(h == pl.num_programs(2) - 1)
    def _():
        y = acc_ref[...] + b_ref[...] + r_ref[0].astype(jnp.float32)
        mu = jnp.mean(y, axis=-1, keepdims=True)
        var = jnp.mean((y - mu) ** 2, axis=-1, keepdims=True)
        o_ref[0] = ((y - mu) * jax.lax.rsqrt(var + 1e-5) * g_ref[...]
                    + bt_ref[...]).astype(o_ref.dtype)


def headproj_residual_layernorm(x, w, b, residual, gamma, beta):
    """x: (N, n_mats, L, dh) bf16; w: (n_mats, dh, H) bf16;
       b/gamma/beta: (1, H) f32; residual: (N, L, H) bf16 -> (N, L, H) bf16."""
    N, n_mats, L, dh = x.shape
    H = w.shape[-1]
    tl = _pick_tile(L)
    return pl.pallas_call(
        _headproj_res_ln_kernel,
        out_shape=jax.ShapeDtypeStruct((N, L, H), residual.dtype),
        grid=(N, L // tl, n_mats),
        in_specs=[
            pl.BlockSpec((1, 1, tl, dh), lambda n, li, h: (n, h, li, 0)),
            pl.BlockSpec((1, dh, H), lambda n, li, h: (h, 0, 0)),
            pl.BlockSpec((1, H), lambda n, li, h: (0, 0)),
            pl.BlockSpec((1, tl, H), lambda n, li, h: (n, li, 0)),
            pl.BlockSpec((1, H), lambda n, li, h: (0, 0)),
            pl.BlockSpec((1, H), lambda n, li, h: (0, 0)),
        ],
        out_specs=pl.BlockSpec((1, tl, H), lambda n, li, h: (n, li, 0)),
        scratch_shapes=[pltpu.VMEM((tl, H), jnp.float32)],
        compiler_params=pltpu.CompilerParams(
            dimension_semantics=("parallel", "parallel", "arbitrary"),
            vmem_limit_bytes=64 << 20),
    )(x, w, b, residual, gamma, beta)


# ------------------------------------------------------------------
# Parameter construction (deterministic synthetic init, head-major layouts,
# bf16 weights, softmax scale folded into Q projections).
# ------------------------------------------------------------------
def init_decoder_params(key, embed_size, hidden_size, heads, depth):
    assert embed_size == hidden_size, "residuals require E == H (as in dekorde)"
    assert hidden_size % heads == 0
    H = hidden_size
    dh = H // heads
    scale = 1.0 / math.sqrt(dh)

    def head_in(k):          # per-head input projection weights: (heads, H, dh)
        kw, kb = jax.random.split(k)
        w = jax.random.normal(kw, (heads, H, dh), jnp.float32) / math.sqrt(H)
        b = jax.random.normal(kb, (heads, 1, dh), jnp.float32) * 0.01
        return w, b

    def out_proj(k):         # output projection weights: (heads, dh, H)
        kw, kb = jax.random.split(k)
        w = jax.random.normal(kw, (heads, dh, H), jnp.float32) / math.sqrt(H)
        b = jax.random.normal(kb, (1, H), jnp.float32) * 0.01
        return w, b

    bf16 = lambda a: a.astype(jnp.bfloat16)
    layers = []
    for d in range(depth):
        k = jax.random.fold_in(key, d)
        ks = jax.random.split(k, 9)
        wq1, bq1 = head_in(ks[0])
        wk1, bk1 = head_in(ks[1])
        wv1, bv1 = head_in(ks[2])
        wo1, bo1 = out_proj(ks[3])
        wq2, bq2 = head_in(ks[4])
        wk2, bk2 = head_in(ks[5])
        wv2, bv2 = head_in(ks[6])
        wo2, bo2 = out_proj(ks[7])
        kwf, kbf = jax.random.split(ks[8])
        wf = jax.random.normal(kwf, (1, H, H), jnp.float32) / math.sqrt(H)
        bf = jax.random.normal(kbf, (1, H), jnp.float32) * 0.01
        ones = jnp.ones((1, H), jnp.float32)
        zeros = jnp.zeros((1, H), jnp.float32)
        # fold 1/sqrt(dh) softmax scale into the Q projections (free, host side)
        wq1, bq1 = wq1 * scale, bq1 * scale
        wq2, bq2 = wq2 * scale, bq2 * scale
        layers.append({
            # masked self-attention: fused head-major QKV projection
            "Wqkv1": bf16(jnp.concatenate([wq1, wk1, wv1], axis=0)),  # (3h, H, dh)
            "bqkv1": jnp.concatenate([bq1, bk1, bv1], axis=0),        # (3h, 1, dh)
            "Wo1": bf16(wo1), "bo1": bo1, "ln1": (ones, zeros),
            # encoder-decoder attention: Q separate, fused head-major KV
            "Wq2": bf16(wq2), "bq2": bq2,
            "Wkv2": bf16(jnp.concatenate([wk2, wv2], axis=0)),        # (2h, H, dh)
            "bkv2": jnp.concatenate([bk2, bv2], axis=0),              # (2h, 1, dh)
            "Wo2": bf16(wo2), "bo2": bo2, "ln2": (ones, zeros),
            # ffn (single Linear, as declared in the module)
            "Wf": bf16(wf), "bf": bf, "ln3": (ones, zeros),
        })
    return layers


# ------------------------------------------------------------------
# Decoder forward
# ------------------------------------------------------------------
def decoder_layer_forward(x, henc, p, heads):
    # x, henc: (N, L, H) bf16
    # 1) masked multi-head self-attention (fused QKV -> flash attn -> Wo+res+LN)
    qkv = proj_headmajor(x, p["Wqkv1"], p["bqkv1"])           # (N, 3h, L, dh)
    attn = flash_mha(qkv, qkv, heads=heads, k_off=heads, v_off=2 * heads,
                     causal=True)                              # (N, h, L, dh)
    x = headproj_residual_layernorm(attn, p["Wo1"], p["bo1"], x, *p["ln1"])

    # 2) encoder-decoder attention (no mask)
    q2 = proj_headmajor(x, p["Wq2"], p["bq2"])                 # (N, h, L, dh)
    kv2 = proj_headmajor(henc, p["Wkv2"], p["bkv2"])           # (N, 2h, L, dh)
    attn2 = flash_mha(q2, kv2, heads=heads, k_off=0, v_off=heads, causal=False)
    x = headproj_residual_layernorm(attn2, p["Wo2"], p["bo2"], x, *p["ln2"])

    # 3) position-wise ffn (single Linear) + residual + LN, fully fused
    #    (reuses the head-reduction kernel with a single "head" of size H)
    x = headproj_residual_layernorm(x[:, None], p["Wf"], p["bf"], x, *p["ln3"])
    return x


@partial(jax.jit, static_argnames=("heads",))
def decoder_forward(Y_ep, H_all_x, M, params, heads):
    """Y_ep: (N, L, E); H_all_x: (N, L, H); M: (L, L) look-ahead mask.

    The look-ahead mask is regenerated in-kernel as a causal iota mask
    (no (L,L) bias DMA); M is accepted for API parity with the PyTorch module.
    """
    del M  # causal mask generated in-kernel via broadcasted_iota
    x = Y_ep.astype(jnp.bfloat16)
    henc = H_all_x.astype(jnp.bfloat16)
    for p in params:
        x = decoder_layer_forward(x, henc, p, heads)
    return x.astype(jnp.float32)


# ------------------------------------------------------------------
if __name__ == "__main__":
    N, L = 2, 8
    E = H = 32
    heads = 4
    depth = 2

    key = jax.random.PRNGKey(0)
    k_y, k_h, k_p = jax.random.split(key, 3)

    Y_ep = jax.random.normal(k_y, (N, L, E), jnp.float32)
    H_all_x = jax.random.normal(k_h, (N, L, H), jnp.float32)
    # causal ("look-ahead") mask: 1 where attention is allowed
    M = jnp.tril(jnp.ones((L, L), jnp.float32))

    params = init_decoder_params(k_p, E, H, heads, depth)

    out = decoder_forward(Y_ep, H_all_x, M, params, heads)
    out = jax.block_until_ready(out)

    assert out.shape == (N, L, H)
    assert bool(jnp.all(jnp.isfinite(out)))
    print("KERNEL_OK")
</pallas_src>

<mosaic_0001>
module attributes {stable_mosaic.version = 11 : i64} {
  func.func @_proj_kernel(%arg0: i32, %arg1: i32, %arg2: i32, %arg3: memref<1x8x32xbf16, #tpu.memory_space<vmem>>, %arg4: memref<1x32x8xbf16, #tpu.memory_space<vmem>>, %arg5: memref<1x1x8xf32, #tpu.memory_space<vmem>>, %arg6: memref<1x1x8x8xbf16, #tpu.memory_space<vmem>>, %arg7: memref<8x8xf32, #tpu.memory_space<vmem>>) attributes {dimension_semantics = [#tpu.dimension_semantics<parallel>, #tpu.dimension_semantics<parallel>, #tpu.dimension_semantics<arbitrary>], iteration_bounds = array<i64: 2, 12, 1>, scalar_prefetch = 0 : i64, scratch_operands = 1 : i64, tpu.core_type = #tpu.core_type<tc>, window_params = [{transform_indices = @transform_0, window_bounds = array<i64: 1, 8, 32>}, {transform_indices = @transform_1, window_bounds = array<i64: 1, 32, 8>}, {transform_indices = @transform_2, window_bounds = array<i64: 1, 1, 8>}, {transform_indices = @transform_3, window_bounds = array<i64: 1, 1, 8, 8>}]} {
    %c0_i32 = arith.constant 0 : i32
    %0 = arith.cmpi eq, %arg2, %c0_i32 : i32
    %1 = arith.extui %0 : i1 to i32
    %c0_i32_0 = arith.constant 0 : i32
    %2 = arith.cmpi ne, %1, %c0_i32_0 : i32
    scf.if %2 {
      %cst_12 = arith.constant 0.000000e+00 : f32
      %14 = vector.broadcast %cst_12 : f32 to vector<8x8xf32>
      %c0_13 = arith.constant 0 : index
      %c0_14 = arith.constant 0 : index
      %15 = vector.load %arg7[%c0_13, %c0_14] : memref<8x8xf32, #tpu.memory_space<vmem>>, vector<8x8xf32>
      tpu.vector_store %arg7[%c0_13, %c0_14], %14 {strides = array<i32>} : memref<8x8xf32, #tpu.memory_space<vmem>>, vector<8x8xf32>,
    } else {
    }
    %c0 = arith.constant 0 : index
    %c0_1 = arith.constant 0 : index
    %3 = vector.load %arg7[%c0, %c0_1] : memref<8x8xf32, #tpu.memory_space<vmem>>, vector<8x8xf32>
    %c0_2 = arith.constant 0 : index
    %c0_3 = arith.constant 0 : index
    %c0_4 = arith.constant 0 : index
    %4 = vector.load %arg3[%c0_2, %c0_3, %c0_4] : memref<1x8x32xbf16, #tpu.memory_space<vmem>>, vector<1x8x32xbf16>
    %5 = vector.shape_cast %4 : vector<1x8x32xbf16> to vector<8x32xbf16>
    %c0_5 = arith.constant 0 : index
    %c0_6 = arith.constant 0 : index
    %c0_7 = arith.constant 0 : index
    %6 = vector.load %arg4[%c0_5, %c0_6, %c0_7] : memref<1x32x8xbf16, #tpu.memory_space<vmem>>, vector<1x32x8xbf16>
    %7 = vector.shape_cast %6 : vector<1x32x8xbf16> to vector<32x8xbf16>
    %cst = arith.constant dense<0.000000e+00> : vector<8x8xf32>
    %8 = tpu.matmul %5, %7, %cst {dimension_numbers = #tpu.dot_dimension_numbers<[1], [0], [0], [1], [0, 0, 1, 1], [], []>} : vector<8x32xbf16>, vector<32x8xbf16>, vector<8x8xf32> -> vector<8x8xf32>
    %9 = arith.addf %3, %8 : vector<8x8xf32>
    %c0_8 = arith.constant 0 : index
    %c0_9 = arith.constant 0 : index
    %10 = vector.load %arg7[%c0_8, %c0_9] : memref<8x8xf32, #tpu.memory_space<vmem>>, vector<8x8xf32>
    tpu.vector_store %arg7[%c0_8, %c0_9], %9 {strides = array<i32>} : memref<8x8xf32, #tpu.memory_space<vmem>>, vector<8x8xf32>,
    %c0_i32_10 = arith.constant 0 : i32
    %11 = arith.cmpi eq, %arg2, %c0_i32_10 : i32
    %12 = arith.extui %11 : i1 to i32
    %c0_i32_11 = arith.constant 0 : i32
    %13 = arith.cmpi ne, %12, %c0_i32_11 : i32
    scf.if %13 {
      %c0_12 = arith.constant 0 : index
      %c0_13 = arith.constant 0 : index
      %14 = vector.load %arg7[%c0_12, %c0_13] : memref<8x8xf32, #tpu.memory_space<vmem>>, vector<8x8xf32>
      %c0_14 = arith.constant 0 : index
      %c0_15 = arith.constant 0 : index
      %c0_16 = arith.constant 0 : index
      %15 = vector.load %arg5[%c0_14, %c0_15, %c0_16] : memref<1x1x8xf32, #tpu.memory_space<vmem>>, vector<1x1x8xf32>
      %16 = vector.shape_cast %15 : vector<1x1x8xf32> to vector<1x8xf32>
      %17 = vector.broadcast %16 : vector<1x8xf32> to vector<8x8xf32>
      %18 = arith.addf %14, %17 : vector<8x8xf32>
      %19 = arith.truncf %18 : vector<8x8xf32> to vector<8x8xbf16>
      %c0_17 = arith.constant 0 : index
      %c0_18 = arith.constant 0 : index
      %c0_19 = arith.constant 0 : index
      %c0_20 = arith.constant 0 : index
      %20 = vector.load %arg6[%c0_17, %c0_18, %c0_19, %c0_20] : memref<1x1x8x8xbf16, #tpu.memory_space<vmem>>, vector<1x1x8x8xbf16>
      %21 = vector.shape_cast %20 : vector<1x1x8x8xbf16> to vector<8x8xbf16>
      %22 = vector.shape_cast %19 : vector<8x8xbf16> to vector<1x1x8x8xbf16>
      tpu.vector_store %arg6[%c0_17, %c0_18, %c0_19, %c0_20], %22 {strides = array<i32>} : memref<1x1x8x8xbf16, #tpu.memory_space<vmem>>, vector<1x1x8x8xbf16>,
    } else {
    }
    return
  }
  func.func @transform_0(%arg0: i32, %arg1: i32, %arg2: i32) -> (i32, i32, i32) {
    %c0_i32 = arith.constant 0 : i32
    %c0_i32_0 = arith.constant 0 : i32
    return %arg0, %c0_i32, %arg2 : i32, i32, i32
  }
  func.func @transform_1(%arg0: i32, %arg1: i32, %arg2: i32) -> (i32, i32, i32) {
    %c0_i32 = arith.constant 0 : i32
    %c0_i32_0 = arith.constant 0 : i32
    return %arg1, %arg2, %c0_i32 : i32, i32, i32
  }
  func.func @transform_2(%arg0: i32, %arg1: i32, %arg2: i32) -> (i32, i32, i32) {
    %c0_i32 = arith.constant 0 : i32
    %c0_i32_0 = arith.constant 0 : i32
    %c0_i32_1 = arith.constant 0 : i32
    return %arg1, %c0_i32, %c0_i32_0 : i32, i32, i32
  }
  func.func @transform_3(%arg0: i32, %arg1: i32, %arg2: i32) -> (i32, i32, i32, i32) {
    %c0_i32 = arith.constant 0 : i32
    %c0_i32_0 = arith.constant 0 : i32
    %c0_i32_1 = arith.constant 0 : i32
    return %arg0, %arg1, %c0_i32, %c0_i32_0 : i32, i32, i32, i32
  }
}

module attributes {stable_mosaic.version = 11 : i64} {
  func.func @_headproj_res_ln_kernel(%arg0: i32, %arg1: i32, %arg2: i32, %arg3: memref<1x1x8x8xbf16, #tpu.memory_space<vmem>>, %arg4: memref<1x8x32xbf16, #tpu.memory_space<vmem>>, %arg5: memref<1x32xf32, #tpu.memory_space<vmem>>, %arg6: memref<1x8x32xbf16, #tpu.memory_space<vmem>>, %arg7: memref<1x32xf32, #tpu.memory_space<vmem>>, %arg8: memref<1x32xf32, #tpu.memory_space<vmem>>, %arg9: memref<1x8x32xbf16, #tpu.memory_space<vmem>>, %arg10: memref<8x32xf32, #tpu.memory_space<vmem>>) attributes {dimension_semantics = [#tpu.dimension_semantics<parallel>, #tpu.dimension_semantics<parallel>, #tpu.dimension_semantics<arbitrary>], iteration_bounds = array<i64: 2, 1, 4>, scalar_prefetch = 0 : i64, scratch_operands = 1 : i64, tpu.core_type = #tpu.core_type<tc>, window_params = [{transform_indices = @transform_0, window_bounds = array<i64: 1, 1, 8, 8>}, {transform_indices = @transform_1, window_bounds = array<i64: 1, 8, 32>}, {pipeline_mode = #tpu.pipeline_mode<synchronous>, transform_indices = @transform_2, window_bounds = array<i64: 1, 32>}, {transform_indices = @transform_3, window_bounds = array<i64: 1, 8, 32>}, {pipeline_mode = #tpu.pipeline_mode<synchronous>, transform_indices = @transform_4, window_bounds = array<i64: 1, 32>}, {pipeline_mode = #tpu.pipeline_mode<synchronous>, transform_indices = @transform_5, window_bounds = array<i64: 1, 32>}, {transform_indices = @transform_6, window_bounds = array<i64: 1, 8, 32>}]} {
    %c0_i32 = arith.constant 0 : i32
    %0 = arith.cmpi eq, %arg2, %c0_i32 : i32
    %1 = arith.extui %0 : i1 to i32
    %c0_i32_0 = arith.constant 0 : i32
    %2 = arith.cmpi ne, %1, %c0_i32_0 : i32
    scf.if %2 {
      %cst_12 = arith.constant 0.000000e+00 : f32
      %14 = vector.broadcast %cst_12 : f32 to vector<8x32xf32>
      %c0_13 = arith.constant 0 : index
      %c0_14 = arith.constant 0 : index
      %15 = vector.load %arg10[%c0_13, %c0_14] : memref<8x32xf32, #tpu.memory_space<vmem>>, vector<8x32xf32>
      tpu.vector_store %arg10[%c0_13, %c0_14], %14 {strides = array<i32>} : memref<8x32xf32, #tpu.memory_space<vmem>>, vector<8x32xf32>,
    } else {
    }
    %c0 = arith.constant 0 : index
    %c0_1 = arith.constant 0 : index
    %3 = vector.load %arg10[%c0, %c0_1] : memref<8x32xf32, #tpu.memory_space<vmem>>, vector<8x32xf32>
    %c0_2 = arith.constant 0 : index
    %c0_3 = arith.constant 0 : index
    %c0_4 = arith.constant 0 : index
    %c0_5 = arith.constant 0 : index
    %4 = vector.load %arg3[%c0_2, %c0_3, %c0_4, %c0_5] : memref<1x1x8x8xbf16, #tpu.memory_space<vmem>>, vector<1x1x8x8xbf16>
    %5 = vector.shape_cast %4 : vector<1x1x8x8xbf16> to vector<8x8xbf16>
    %c0_6 = arith.constant 0 : index
    %c0_7 = arith.constant 0 : index
    %c0_8 = arith.constant 0 : index
    %6 = vector.load %arg4[%c0_6, %c0_7, %c0_8] : memref<1x8x32xbf16, #tpu.memory_space<vmem>>, vector<1x8x32xbf16>
    %7 = vector.shape_cast %6 : vector<1x8x32xbf16> to vector<8x32xbf16>
    %cst = arith.constant dense<0.000000e+00> : vector<8x32xf32>
    %8 = tpu.matmul %5, %7, %cst {dimension_numbers = #tpu.dot_dimension_numbers<[1], [0], [0], [1], [0, 0, 1, 1], [], []>} : vector<8x8xbf16>, vector<8x32xbf16>, vector<8x32xf32> -> vector<8x32xf32>
    %9 = arith.addf %3, %8 : vector<8x32xf32>
    %c0_9 = arith.constant 0 : index
    %c0_10 = arith.constant 0 : index
    %10 = vector.load %arg10[%c0_9, %c0_10] : memref<8x32xf32, #tpu.memory_space<vmem>>, vector<8x32xf32>
    tpu.vector_store %arg10[%c0_9, %c0_10], %9 {strides = array<i32>} : memref<8x32xf32, #tpu.memory_space<vmem>>, vector<8x32xf32>,
    %c3_i32 = arith.constant 3 : i32
    %11 = arith.cmpi eq, %arg2, %c3_i32 : i32
    %12 = arith.extui %11 : i1 to i32
    %c0_i32_11 = arith.constant 0 : i32
    %13 = arith.cmpi ne, %12, %c0_i32_11 : i32
    scf.if %13 {
      %c0_12 = arith.constant 0 : index
      %c0_13 = arith.constant 0 : index
      %14 = vector.load %arg10[%c0_12, %c0_13] : memref<8x32xf32, #tpu.memory_space<vmem>>, vector<8x32xf32>
      %c0_14 = arith.constant 0 : index
      %c0_15 = arith.constant 0 : index
      %15 = vector.load %arg5[%c0_14, %c0_15] : memref<1x32xf32, #tpu.memory_space<vmem>>, vector<1x32xf32>
      %16 = vector.broadcast %15 : vector<1x32xf32> to vector<8x32xf32>
      %17 = arith.addf %14, %16 : vector<8x32xf32>
      %c0_16 = arith.constant 0 : index
      %c0_17 = arith.constant 0 : index
      %c0_18 = arith.constant 0 : index
      %18 = vector.load %arg6[%c0_16, %c0_17, %c0_18] : memref<1x8x32xbf16, #tpu.memory_space<vmem>>, vector<1x8x32xbf16>
      %19 = vector.shape_cast %18 : vector<1x8x32xbf16> to vector<8x32xbf16>
      %20 = arith.extf %19 : vector<8x32xbf16> to vector<8x32xf32>
      %21 = arith.addf %17, %20 : vector<8x32xf32>
      %cst_19 = arith.constant dense<0.000000e+00> : vector<8xf32>
      %22 = vector.multi_reduction <add>, %21, %cst_19 [1] : vector<8x32xf32> to vector<8xf32>
      %23 = vector.shape_cast %22 : vector<8xf32> to vector<8x1xf32>
      %cst_20 = arith.constant 3.200000e+01 : f32
      %24 = vector.broadcast %cst_20 : f32 to vector<8x1xf32>
      %25 = arith.divf %23, %24 : vector<8x1xf32>
      %26 = vector.broadcast %25 : vector<8x1xf32> to vector<8x32xf32>
      %27 = arith.subf %21, %26 : vector<8x32xf32>
      %28 = arith.mulf %27, %27 : vector<8x32xf32>
      %cst_21 = arith.constant dense<0.000000e+00> : vector<8xf32>
      %29 = vector.multi_reduction <add>, %28, %cst_21 [1] : vector<8x32xf32> to vector<8xf32>
      %30 = vector.shape_cast %29 : vector<8xf32> to vector<8x1xf32>
      %cst_22 = arith.constant 3.200000e+01 : f32
      %31 = vector.broadcast %cst_22 : f32 to vector<8x1xf32>
      %32 = arith.divf %30, %31 : vector<8x1xf32>
      %33 = vector.broadcast %25 : vector<8x1xf32> to vector<8x32xf32>
      %34 = arith.subf %21, %33 : vector<8x32xf32>
      %cst_23 = arith.constant 9.99999974E-6 : f32
      %35 = vector.broadcast %cst_23 : f32 to vector<8x1xf32>
      %36 = arith.addf %32, %35 : vector<8x1xf32>
      %37 = math.rsqrt %36 : vector<8x1xf32>
      %38 = vector.broadcast %37 : vector<8x1xf32> to vector<8x32xf32>
      %39 = arith.mulf %34, %38 : vector<8x32xf32>
      %c0_24 = arith.constant 0 : index
      %c0_25 = arith.constant 0 : index
      %40 = vector.load %arg7[%c0_24, %c0_25] : memref<1x32xf32, #tpu.memory_space<vmem>>, vector<1x32xf32>
      %41 = vector.broadcast %40 : vector<1x32xf32> to vector<8x32xf32>
      %42 = arith.mulf %39, %41 : vector<8x32xf32>
      %c0_26 = arith.constant 0 : index
      %c0_27 = arith.constant 0 : index
      %43 = vector.load %arg8[%c0_26, %c0_27] : memref<1x32xf32, #tpu.memory_space<vmem>>, vector<1x32xf32>
      %44 = vector.broadcast %43 : vector<1x32xf32> to vector<8x32xf32>
      %45 = arith.addf %42, %44 : vector<8x32xf32>
      %46 = arith.truncf %45 : vector<8x32xf32> to vector<8x32xbf16>
      %c0_28 = arith.constant 0 : index
      %c0_29 = arith.constant 0 : index
      %c0_30 = arith.constant 0 : index
      %47 = vector.load %arg9[%c0_28, %c0_29, %c0_30] : memref<1x8x32xbf16, #tpu.memory_space<vmem>>, vector<1x8x32xbf16>
      %48 = vector.shape_cast %47 : vector<1x8x32xbf16> to vector<8x32xbf16>
      %49 = vector.shape_cast %46 : vector<8x32xbf16> to vector<1x8x32xbf16>
      tpu.vector_store %arg9[%c0_28, %c0_29, %c0_30], %49 {strides = array<i32>} : memref<1x8x32xbf16, #tpu.memory_space<vmem>>, vector<1x8x32xbf16>,
    } else {
    }
    return
  }
  func.func @transform_0(%arg0: i32, %arg1: i32, %arg2: i32) -> (i32, i32, i32, i32) {
    %c0_i32 = arith.constant 0 : i32
    %c0_i32_0 = arith.constant 0 : i32
    return %arg0, %arg2, %arg1, %c0_i32 : i32, i32, i32, i32
  }
  func.func @transform_1(%arg0: i32, %arg1: i32, %arg2: i32) -> (i32, i32, i32) {
    %c0_i32 = arith.constant 0 : i32
    %c0_i32_0 = arith.constant 0 : i32
    %c0_i32_1 = arith.constant 0 : i32
    return %arg2, %c0_i32, %c0_i32_0 : i32, i32, i32
  }
  func.func @transform_2(%arg0: i32, %arg1: i32, %arg2: i32) -> (i32, i32) {
    %c0_i32 = arith.constant 0 : i32
    %c0_i32_0 = arith.constant 0 : i32
    %c0_i32_1 = arith.constant 0 : i32
    return %c0_i32, %c0_i32_0 : i32, i32
  }
  func.func @transform_3(%arg0: i32, %arg1: i32, %arg2: i32) -> (i32, i32, i32) {
    %c0_i32 = arith.constant 0 : i32
    %c0_i32_0 = arith.constant 0 : i32
    return %arg0, %arg1, %c0_i32 : i32, i32, i32
  }
  func.func @transform_4(%arg0: i32, %arg1: i32, %arg2: i32) -> (i32, i32) {
    %c0_i32 = arith.constant 0 : i32
    %c0_i32_0 = arith.constant 0 : i32
    %c0_i32_1 = arith.constant 0 : i32
    return %c0_i32, %c0_i32_0 : i32, i32
  }
  func.func @transform_5(%arg0: i32, %arg1: i32, %arg2: i32) -> (i32, i32) {
    %c0_i32 = arith.constant 0 : i32
    %c0_i32_0 = arith.constant 0 : i32
    %c0_i32_1 = arith.constant 0 : i32
    return %c0_i32, %c0_i32_0 : i32, i32
  }
  func.func @transform_6(%arg0: i32, %arg1: i32, %arg2: i32) -> (i32, i32, i32) {
    %c0_i32 = arith.constant 0 : i32
    %c0_i32_0 = arith.constant 0 : i32
    return %arg0, %arg1, %c0_i32 : i32, i32, i32
  }
}

module attributes {stable_mosaic.version = 11 : i64} {
  func.func @_flash_kernel(%arg0: i32, %arg1: i32, %arg2: i32, %arg3: i32, %arg4: memref<1x1x8x8xbf16, #tpu.memory_space<vmem>>, %arg5: memref<1x1x8x8xbf16, #tpu.memory_space<vmem>>, %arg6: memref<1x1x8x8xbf16, #tpu.memory_space<vmem>>, %arg7: memref<1x1x8x8xbf16, #tpu.memory_space<vmem>>, %arg8: memref<8x1xf32, #tpu.memory_space<vmem>>, %arg9: memref<8x1xf32, #tpu.memory_space<vmem>>, %arg10: memref<8x8xf32, #tpu.memory_space<vmem>>) attributes {dimension_semantics = [#tpu.dimension_semantics<parallel>, #tpu.dimension_semantics<parallel>, #tpu.dimension_semantics<parallel>, #tpu.dimension_semantics<arbitrary>], iteration_bounds = array<i64: 2, 4, 1, 1>, scalar_prefetch = 0 : i64, scratch_operands = 3 : i64, tpu.core_type = #tpu.core_type<tc>, window_params = [{transform_indices = @transform_0, window_bounds = array<i64: 1, 1, 8, 8>}, {transform_indices = @transform_1, window_bounds = array<i64: 1, 1, 8, 8>}, {transform_indices = @transform_2, window_bounds = array<i64: 1, 1, 8, 8>}, {transform_indices = @transform_3, window_bounds = array<i64: 1, 1, 8, 8>}]} {
    %c0_i32 = arith.constant 0 : i32
    %0 = arith.cmpi eq, %arg3, %c0_i32 : i32
    %1 = arith.extui %0 : i1 to i32
    %c0_i32_0 = arith.constant 0 : i32
    %2 = arith.cmpi ne, %1, %c0_i32_0 : i32
    scf.if %2 {
      %cst = arith.constant -1.000000e+30 : f32
      %12 = vector.broadcast %cst : f32 to vector<8x1xf32>
      %c0 = arith.constant 0 : index
      %c0_5 = arith.constant 0 : index
      %13 = vector.load %arg8[%c0, %c0_5] : memref<8x1xf32, #tpu.memory_space<vmem>>, vector<8x1xf32>
      tpu.vector_store %arg8[%c0, %c0_5], %12 {strides = array<i32>} : memref<8x1xf32, #tpu.memory_space<vmem>>, vector<8x1xf32>,
      %cst_6 = arith.constant 0.000000e+00 : f32
      %14 = vector.broadcast %cst_6 : f32 to vector<8x1xf32>
      %c0_7 = arith.constant 0 : index
      %c0_8 = arith.constant 0 : index
      %15 = vector.load %arg9[%c0_7, %c0_8] : memref<8x1xf32, #tpu.memory_space<vmem>>, vector<8x1xf32>
      tpu.vector_store %arg9[%c0_7, %c0_8], %14 {strides = array<i32>} : memref<8x1xf32, #tpu.memory_space<vmem>>, vector<8x1xf32>,
      %cst_9 = arith.constant 0.000000e+00 : f32
      %16 = vector.broadcast %cst_9 : f32 to vector<8x8xf32>
      %c0_10 = arith.constant 0 : index
      %c0_11 = arith.constant 0 : index
      %17 = vector.load %arg10[%c0_10, %c0_11] : memref<8x8xf32, #tpu.memory_space<vmem>>, vector<8x8xf32>
      tpu.vector_store %arg10[%c0_10, %c0_11], %16 {strides = array<i32>} : memref<8x8xf32, #tpu.memory_space<vmem>>, vector<8x8xf32>,
    } else {
    }
    %c8_i32 = arith.constant 8 : i32
    %3 = arith.muli %arg2, %c8_i32 : i32
    %c7_i32 = arith.constant 7 : i32
    %4 = arith.addi %3, %c7_i32 : i32
    %c8_i32_1 = arith.constant 8 : i32
    %5 = arith.muli %arg3, %c8_i32_1 : i32
    %6 = arith.cmpi sge, %4, %5 : i32
    %7 = arith.extui %6 : i1 to i32
    %c0_i32_2 = arith.constant 0 : i32
    %8 = arith.cmpi ne, %7, %c0_i32_2 : i32
    scf.if %8 {
      %c0 = arith.constant 0 : index
      %c0_5 = arith.constant 0 : index
      %c0_6 = arith.constant 0 : index
      %c0_7 = arith.constant 0 : index
      %12 = vector.load %arg4[%c0, %c0_5, %c0_6, %c0_7] : memref<1x1x8x8xbf16, #tpu.memory_space<vmem>>, vector<1x1x8x8xbf16>
      %13 = vector.shape_cast %12 : vector<1x1x8x8xbf16> to vector<8x8xbf16>
      %c0_8 = arith.constant 0 : index
      %c0_9 = arith.constant 0 : index
      %c0_10 = arith.constant 0 : index
      %c0_11 = arith.constant 0 : index
      %14 = vector.load %arg5[%c0_8, %c0_9, %c0_10, %c0_11] : memref<1x1x8x8xbf16, #tpu.memory_space<vmem>>, vector<1x1x8x8xbf16>
      %15 = vector.shape_cast %14 : vector<1x1x8x8xbf16> to vector<8x8xbf16>
      %c0_12 = arith.constant 0 : index
      %c0_13 = arith.constant 0 : index
      %c0_14 = arith.constant 0 : index
      %c0_15 = arith.constant 0 : index
      %16 = vector.load %arg6[%c0_12, %c0_13, %c0_14, %c0_15] : memref<1x1x8x8xbf16, #tpu.memory_space<vmem>>, vector<1x1x8x8xbf16>
      %17 = vector.shape_cast %16 : vector<1x1x8x8xbf16> to vector<8x8xbf16>
      %cst = arith.constant dense<0.000000e+00> : vector<8x8xf32>
      %18 = tpu.matmul %13, %15, %cst {dimension_numbers = #tpu.dot_dimension_numbers<[1], [1], [0], [0], [0, 0, 1, 0], [], []>} : vector<8x8xbf16>, vector<8x8xbf16>, vector<8x8xf32> -> vector<8x8xf32>
      %c8_i32_16 = arith.constant 8 : i32
      %19 = arith.muli %arg2, %c8_i32_16 : i32
      %20 = tpu.iota {dimensions = array<i32: 0>} : vector<8x8xi32>
      %21 = vector.broadcast %19 : i32 to vector<8x8xi32>
      %22 = arith.addi %21, %20 : vector<8x8xi32>
      %c8_i32_17 = arith.constant 8 : i32
      %23 = arith.muli %arg3, %c8_i32_17 : i32
      %24 = tpu.iota {dimensions = array<i32: 1>} : vector<8x8xi32>
      %25 = vector.broadcast %23 : i32 to vector<8x8xi32>
      %26 = arith.addi %25, %24 : vector<8x8xi32>
      %27 = arith.cmpi sle, %26, %22 : vector<8x8xi32>
      %cst_18 = arith.constant -1.000000e+30 : f32
      %28 = vector.broadcast %cst_18 : f32 to vector<8x8xf32>
      %29 = arith.select %27, %18, %28 : vector<8x8xi1>, vector<8x8xf32>
      %c0_19 = arith.constant 0 : index
      %c0_20 = arith.constant 0 : index
      %30 = vector.load %arg8[%c0_19, %c0_20] : memref<8x1xf32, #tpu.memory_space<vmem>>, vector<8x1xf32>
      %cst_21 = arith.constant dense<0xFF800000> : vector<8xf32>
      %31 = vector.multi_reduction <maximumf>, %29, %cst_21 [1] : vector<8x8xf32> to vector<8xf32>
      %32 = vector.shape_cast %31 : vector<8xf32> to vector<8x1xf32>
      %33 = arith.maximumf %30, %32 : vector<8x1xf32>
      %34 = arith.subf %30, %33 : vector<8x1xf32>
      %35 = math.exp %34 : vector<8x1xf32>
      %36 = vector.broadcast %33 : vector<8x1xf32> to vector<8x8xf32>
      %37 = arith.subf %29, %36 : vector<8x8xf32>
      %38 = math.exp %37 : vector<8x8xf32>
      %c0_22 = arith.constant 0 : index
      %c0_23 = arith.constant 0 : index
      %39 = vector.load %arg9[%c0_22, %c0_23] : memref<8x1xf32, #tpu.memory_space<vmem>>, vector<8x1xf32>
      %40 = arith.mulf %35, %39 : vector<8x1xf32>
      %cst_24 = arith.constant dense<0.000000e+00> : vector<8xf32>
      %41 = vector.multi_reduction <add>, %38, %cst_24 [1] : vector<8x8xf32> to vector<8xf32>
      %42 = vector.shape_cast %41 : vector<8xf32> to vector<8x1xf32>
      %43 = arith.addf %40, %42 : vector<8x1xf32>
      %c0_25 = arith.constant 0 : index
      %c0_26 = arith.constant 0 : index
      %44 = vector.load %arg9[%c0_25, %c0_26] : memref<8x1xf32, #tpu.memory_space<vmem>>, vector<8x1xf32>
      tpu.vector_store %arg9[%c0_25, %c0_26], %43 {strides = array<i32>} : memref<8x1xf32, #tpu.memory_space<vmem>>, vector<8x1xf32>,
      %c0_27 = arith.constant 0 : index
      %c0_28 = arith.constant 0 : index
      %45 = vector.load %arg10[%c0_27, %c0_28] : memref<8x8xf32, #tpu.memory_space<vmem>>, vector<8x8xf32>
      %46 = vector.broadcast %35 : vector<8x1xf32> to vector<8x8xf32>
      %47 = arith.mulf %46, %45 : vector<8x8xf32>
      %48 = arith.truncf %38 : vector<8x8xf32> to vector<8x8xbf16>
      %cst_29 = arith.constant dense<0.000000e+00> : vector<8x8xf32>
      %49 = tpu.matmul %48, %17, %cst_29 {dimension_numbers = #tpu.dot_dimension_numbers<[1], [0], [0], [1], [0, 0, 1, 1], [], []>} : vector<8x8xbf16>, vector<8x8xbf16>, vector<8x8xf32> -> vector<8x8xf32>
      %50 = arith.addf %47, %49 : vector<8x8xf32>
      %c0_30 = arith.constant 0 : index
      %c0_31 = arith.constant 0 : index
      %51 = vector.load %arg10[%c0_30, %c0_31] : memref<8x8xf32, #tpu.memory_space<vmem>>, vector<8x8xf32>
      tpu.vector_store %arg10[%c0_30, %c0_31], %50 {strides = array<i32>} : memref<8x8xf32, #tpu.memory_space<vmem>>, vector<8x8xf32>,
      %c0_32 = arith.constant 0 : index
      %c0_33 = arith.constant 0 : index
      %52 = vector.load %arg8[%c0_32, %c0_33] : memref<8x1xf32, #tpu.memory_space<vmem>>, vector<8x1xf32>
      tpu.vector_store %arg8[%c0_32, %c0_33], %33 {strides = array<i32>} : memref<8x1xf32, #tpu.memory_space<vmem>>, vector<8x1xf32>,
    } else {
    }
    %c0_i32_3 = arith.constant 0 : i32
    %9 = arith.cmpi eq, %arg3, %c0_i32_3 : i32
    %10 = arith.extui %9 : i1 to i32
    %c0_i32_4 = arith.constant 0 : i32
    %11 = arith.cmpi ne, %10, %c0_i32_4 : i32
    scf.if %11 {
      %c0 = arith.constant 0 : index
      %c0_5 = arith.constant 0 : index
      %12 = vector.load %arg10[%c0, %c0_5] : memref<8x8xf32, #tpu.memory_space<vmem>>, vector<8x8xf32>
      %c0_6 = arith.constant 0 : index
      %c0_7 = arith.constant 0 : index
      %13 = vector.load %arg9[%c0_6, %c0_7] : memref<8x1xf32, #tpu.memory_space<vmem>>, vector<8x1xf32>
      %14 = tpu.reciprocal %13 {approx = true} : vector<8x1xf32> -> vector<8x1xf32>
      %15 = vector.broadcast %14 : vector<8x1xf32> to vector<8x8xf32>
      %16 = arith.mulf %12, %15 : vector<8x8xf32>
      %17 = arith.truncf %16 : vector<8x8xf32> to vector<8x8xbf16>
      %c0_8 = arith.constant 0 : index
      %c0_9 = arith.constant 0 : index
      %c0_10 = arith.constant 0 : index
      %c0_11 = arith.constant 0 : index
      %18 = vector.load %arg7[%c0_8, %c0_9, %c0_10, %c0_11] : memref<1x1x8x8xbf16, #tpu.memory_space<vmem>>, vector<1x1x8x8xbf16>
      %19 = vector.shape_cast %18 : vector<1x1x8x8xbf16> to vector<8x8xbf16>
      %20 = vector.shape_cast %17 : vector<8x8xbf16> to vector<1x1x8x8xbf16>
      tpu.vector_store %arg7[%c0_8, %c0_9, %c0_10, %c0_11], %20 {strides = array<i32>} : memref<1x1x8x8xbf16, #tpu.memory_space<vmem>>, vector<1x1x8x8xbf16>,
    } else {
    }
    return
  }
  func.func @transform_0(%arg0: i32, %arg1: i32, %arg2: i32, %arg3: i32) -> (i32, i32, i32, i32) {
    %c0_i32 = arith.constant 0 : i32
    %c0_i32_0 = arith.constant 0 : i32
    return %arg0, %arg1, %arg2, %c0_i32 : i32, i32, i32, i32
  }
  func.func @transform_1(%arg0: i32, %arg1: i32, %arg2: i32, %arg3: i32) -> (i32, i32, i32, i32) {
    %c4_i32 = arith.constant 4 : i32
    %0 = arith.addi %c4_i32, %arg1 : i32
    %c0_i32 = arith.constant 0 : i32
    %c0_i32_0 = arith.constant 0 : i32
    return %arg0, %0, %arg3, %c0_i32 : i32, i32, i32, i32
  }
  func.func @transform_2(%arg0: i32, %arg1: i32, %arg2: i32, %arg3: i32) -> (i32, i32, i32, i32) {
    %c8_i32 = arith.constant 8 : i32
    %0 = arith.addi %c8_i32, %arg1 : i32
    %c0_i32 = arith.constant 0 : i32
    %c0_i32_0 = arith.constant 0 : i32
    return %arg0, %0, %arg3, %c0_i32 : i32, i32, i32, i32
  }
  func.func @transform_3(%arg0: i32, %arg1: i32, %arg2: i32, %arg3: i32) -> (i32, i32, i32, i32) {
    %c0_i32 = arith.constant 0 : i32
    %c0_i32_0 = arith.constant 0 : i32
    return %arg0, %arg1, %arg2, %c0_i32 : i32, i32, i32, i32
  }
}

module attributes {stable_mosaic.version = 11 : i64} {
  func.func @_proj_kernel(%arg0: i32, %arg1: i32, %arg2: i32, %arg3: memref<1x8x32xbf16, #tpu.memory_space<vmem>>, %arg4: memref<1x32x8xbf16, #tpu.memory_space<vmem>>, %arg5: memref<1x1x8xf32, #tpu.memory_space<vmem>>, %arg6: memref<1x1x8x8xbf16, #tpu.memory_space<vmem>>, %arg7: memref<8x8xf32, #tpu.memory_space<vmem>>) attributes {dimension_semantics = [#tpu.dimension_semantics<parallel>, #tpu.dimension_semantics<parallel>, #tpu.dimension_semantics<arbitrary>], iteration_bounds = array<i64: 2, 4, 1>, scalar_prefetch = 0 : i64, scratch_operands = 1 : i64, tpu.core_type = #tpu.core_type<tc>, window_params = [{transform_indices = @transform_0, window_bounds = array<i64: 1, 8, 32>}, {transform_indices = @transform_1, window_bounds = array<i64: 1, 32, 8>}, {transform_indices = @transform_2, window_bounds = array<i64: 1, 1, 8>}, {transform_indices = @transform_3, window_bounds = array<i64: 1, 1, 8, 8>}]} {
    %c0_i32 = arith.constant 0 : i32
    %0 = arith.cmpi eq, %arg2, %c0_i32 : i32
    %1 = arith.extui %0 : i1 to i32
    %c0_i32_0 = arith.constant 0 : i32
    %2 = arith.cmpi ne, %1, %c0_i32_0 : i32
    scf.if %2 {
      %cst_12 = arith.constant 0.000000e+00 : f32
      %14 = vector.broadcast %cst_12 : f32 to vector<8x8xf32>
      %c0_13 = arith.constant 0 : index
      %c0_14 = arith.constant 0 : index
      %15 = vector.load %arg7[%c0_13, %c0_14] : memref<8x8xf32, #tpu.memory_space<vmem>>, vector<8x8xf32>
      tpu.vector_store %arg7[%c0_13, %c0_14], %14 {strides = array<i32>} : memref<8x8xf32, #tpu.memory_space<vmem>>, vector<8x8xf32>,
    } else {
    }
    %c0 = arith.constant 0 : index
    %c0_1 = arith.constant 0 : index
    %3 = vector.load %arg7[%c0, %c0_1] : memref<8x8xf32, #tpu.memory_space<vmem>>, vector<8x8xf32>
    %c0_2 = arith.constant 0 : index
    %c0_3 = arith.constant 0 : index
    %c0_4 = arith.constant 0 : index
    %4 = vector.load %arg3[%c0_2, %c0_3, %c0_4] : memref<1x8x32xbf16, #tpu.memory_space<vmem>>, vector<1x8x32xbf16>
    %5 = vector.shape_cast %4 : vector<1x8x32xbf16> to vector<8x32xbf16>
    %c0_5 = arith.constant 0 : index
    %c0_6 = arith.constant 0 : index
    %c0_7 = arith.constant 0 : index
    %6 = vector.load %arg4[%c0_5, %c0_6, %c0_7] : memref<1x32x8xbf16, #tpu.memory_space<vmem>>, vector<1x32x8xbf16>
    %7 = vector.shape_cast %6 : vector<1x32x8xbf16> to vector<32x8xbf16>
    %cst = arith.constant dense<0.000000e+00> : vector<8x8xf32>
    %8 = tpu.matmul %5, %7, %cst {dimension_numbers = #tpu.dot_dimension_numbers<[1], [0], [0], [1], [0, 0, 1, 1], [], []>} : vector<8x32xbf16>, vector<32x8xbf16>, vector<8x8xf32> -> vector<8x8xf32>
    %9 = arith.addf %3, %8 : vector<8x8xf32>
    %c0_8 = arith.constant 0 : index
    %c0_9 = arith.constant 0 : index
    %10 = vector.load %arg7[%c0_8, %c0_9] : memref<8x8xf32, #tpu.memory_space<vmem>>, vector<8x8xf32>
    tpu.vector_store %arg7[%c0_8, %c0_9], %9 {strides = array<i32>} : memref<8x8xf32, #tpu.memory_space<vmem>>, vector<8x8xf32>,
    %c0_i32_10 = arith.constant 0 : i32
    %11 = arith.cmpi eq, %arg2, %c0_i32_10 : i32
    %12 = arith.extui %11 : i1 to i32
    %c0_i32_11 = arith.constant 0 : i32
    %13 = arith.cmpi ne, %12, %c0_i32_11 : i32
    scf.if %13 {
      %c0_12 = arith.constant 0 : index
      %c0_13 = arith.constant 0 : index
      %14 = vector.load %arg7[%c0_12, %c0_13] : memref<8x8xf32, #tpu.memory_space<vmem>>, vector<8x8xf32>
      %c0_14 = arith.constant 0 : index
      %c0_15 = arith.constant 0 : index
      %c0_16 = arith.constant 0 : index
      %15 = vector.load %arg5[%c0_14, %c0_15, %c0_16] : memref<1x1x8xf32, #tpu.memory_space<vmem>>, vector<1x1x8xf32>
      %16 = vector.shape_cast %15 : vector<1x1x8xf32> to vector<1x8xf32>
      %17 = vector.broadcast %16 : vector<1x8xf32> to vector<8x8xf32>
      %18 = arith.addf %14, %17 : vector<8x8xf32>
      %19 = arith.truncf %18 : vector<8x8xf32> to vector<8x8xbf16>
      %c0_17 = arith.constant 0 : index
      %c0_18 = arith.constant 0 : index
      %c0_19 = arith.constant 0 : index
      %c0_20 = arith.constant 0 : index
      %20 = vector.load %arg6[%c0_17, %c0_18, %c0_19, %c0_20] : memref<1x1x8x8xbf16, #tpu.memory_space<vmem>>, vector<1x1x8x8xbf16>
      %21 = vector.shape_cast %20 : vector<1x1x8x8xbf16> to vector<8x8xbf16>
      %22 = vector.shape_cast %19 : vector<8x8xbf16> to vector<1x1x8x8xbf16>
      tpu.vector_store %arg6[%c0_17, %c0_18, %c0_19, %c0_20], %22 {strides = array<i32>} : memref<1x1x8x8xbf16, #tpu.memory_space<vmem>>, vector<1x1x8x8xbf16>,
    } else {
    }
    return
  }
  func.func @transform_0(%arg0: i32, %arg1: i32, %arg2: i32) -> (i32, i32, i32) {
    %c0_i32 = arith.constant 0 : i32
    %c0_i32_0 = arith.constant 0 : i32
    return %arg0, %c0_i32, %arg2 : i32, i32, i32
  }
  func.func @transform_1(%arg0: i32, %arg1: i32, %arg2: i32) -> (i32, i32, i32) {
    %c0_i32 = arith.constant 0 : i32
    %c0_i32_0 = arith.constant 0 : i32
    return %arg1, %arg2, %c0_i32 : i32, i32, i32
  }
  func.func @transform_2(%arg0: i32, %arg1: i32, %arg2: i32) -> (i32, i32, i32) {
    %c0_i32 = arith.constant 0 : i32
    %c0_i32_0 = arith.constant 0 : i32
    %c0_i32_1 = arith.constant 0 : i32
    return %arg1, %c0_i32, %c0_i32_0 : i32, i32, i32
  }
  func.func @transform_3(%arg0: i32, %arg1: i32, %arg2: i32) -> (i32, i32, i32, i32) {
    %c0_i32 = arith.constant 0 : i32
    %c0_i32_0 = arith.constant 0 : i32
    %c0_i32_1 = arith.constant 0 : i32
    return %arg0, %arg1, %c0_i32, %c0_i32_0 : i32, i32, i32, i32
  }
}

module attributes {stable_mosaic.version = 11 : i64} {
  func.func @_proj_kernel(%arg0: i32, %arg1: i32, %arg2: i32, %arg3: memref<1x8x32xbf16, #tpu.memory_space<vmem>>, %arg4: memref<1x32x8xbf16, #tpu.memory_space<vmem>>, %arg5: memref<1x1x8xf32, #tpu.memory_space<vmem>>, %arg6: memref<1x1x8x8xbf16, #tpu.memory_space<vmem>>, %arg7: memref<8x8xf32, #tpu.memory_space<vmem>>) attributes {dimension_semantics = [#tpu.dimension_semantics<parallel>, #tpu.dimension_semantics<parallel>, #tpu.dimension_semantics<arbitrary>], iteration_bounds = array<i64: 2, 8, 1>, scalar_prefetch = 0 : i64, scratch_operands = 1 : i64, tpu.core_type = #tpu.core_type<tc>, window_params = [{transform_indices = @transform_0, window_bounds = array<i64: 1, 8, 32>}, {transform_indices = @transform_1, window_bounds = array<i64: 1, 32, 8>}, {transform_indices = @transform_2, window_bounds = array<i64: 1, 1, 8>}, {transform_indices = @transform_3, window_bounds = array<i64: 1, 1, 8, 8>}]} {
    %c0_i32 = arith.constant 0 : i32
    %0 = arith.cmpi eq, %arg2, %c0_i32 : i32
    %1 = arith.extui %0 : i1 to i32
    %c0_i32_0 = arith.constant 0 : i32
    %2 = arith.cmpi ne, %1, %c0_i32_0 : i32
    scf.if %2 {
      %cst_12 = arith.constant 0.000000e+00 : f32
      %14 = vector.broadcast %cst_12 : f32 to vector<8x8xf32>
      %c0_13 = arith.constant 0 : index
      %c0_14 = arith.constant 0 : index
      %15 = vector.load %arg7[%c0_13, %c0_14] : memref<8x8xf32, #tpu.memory_space<vmem>>, vector<8x8xf32>
      tpu.vector_store %arg7[%c0_13, %c0_14], %14 {strides = array<i32>} : memref<8x8xf32, #tpu.memory_space<vmem>>, vector<8x8xf32>,
    } else {
    }
    %c0 = arith.constant 0 : index
    %c0_1 = arith.constant 0 : index
    %3 = vector.load %arg7[%c0, %c0_1] : memref<8x8xf32, #tpu.memory_space<vmem>>, vector<8x8xf32>
    %c0_2 = arith.constant 0 : index
    %c0_3 = arith.constant 0 : index
    %c0_4 = arith.constant 0 : index
    %4 = vector.load %arg3[%c0_2, %c0_3, %c0_4] : memref<1x8x32xbf16, #tpu.memory_space<vmem>>, vector<1x8x32xbf16>
    %5 = vector.shape_cast %4 : vector<1x8x32xbf16> to vector<8x32xbf16>
    %c0_5 = arith.constant 0 : index
    %c0_6 = arith.constant 0 : index
    %c0_7 = arith.constant 0 : index
    %6 = vector.load %arg4[%c0_5, %c0_6, %c0_7] : memref<1x32x8xbf16, #tpu.memory_space<vmem>>, vector<1x32x8xbf16>
    %7 = vector.shape_cast %6 : vector<1x32x8xbf16> to vector<32x8xbf16>
    %cst = arith.constant dense<0.000000e+00> : vector<8x8xf32>
    %8 = tpu.matmul %5, %7, %cst {dimension_numbers = #tpu.dot_dimension_numbers<[1], [0], [0], [1], [0, 0, 1, 1], [], []>} : vector<8x32xbf16>, vector<32x8xbf16>, vector<8x8xf32> -> vector<8x8xf32>
    %9 = arith.addf %3, %8 : vector<8x8xf32>
    %c0_8 = arith.constant 0 : index
    %c0_9 = arith.constant 0 : index
    %10 = vector.load %arg7[%c0_8, %c0_9] : memref<8x8xf32, #tpu.memory_space<vmem>>, vector<8x8xf32>
    tpu.vector_store %arg7[%c0_8, %c0_9], %9 {strides = array<i32>} : memref<8x8xf32, #tpu.memory_space<vmem>>, vector<8x8xf32>,
    %c0_i32_10 = arith.constant 0 : i32
    %11 = arith.cmpi eq, %arg2, %c0_i32_10 : i32
    %12 = arith.extui %11 : i1 to i32
    %c0_i32_11 = arith.constant 0 : i32
    %13 = arith.cmpi ne, %12, %c0_i32_11 : i32
    scf.if %13 {
      %c0_12 = arith.constant 0 : index
      %c0_13 = arith.constant 0 : index
      %14 = vector.load %arg7[%c0_12, %c0_13] : memref<8x8xf32, #tpu.memory_space<vmem>>, vector<8x8xf32>
      %c0_14 = arith.constant 0 : index
      %c0_15 = arith.constant 0 : index
      %c0_16 = arith.constant 0 : index
      %15 = vector.load %arg5[%c0_14, %c0_15, %c0_16] : memref<1x1x8xf32, #tpu.memory_space<vmem>>, vector<1x1x8xf32>
      %16 = vector.shape_cast %15 : vector<1x1x8xf32> to vector<1x8xf32>
      %17 = vector.broadcast %16 : vector<1x8xf32> to vector<8x8xf32>
      %18 = arith.addf %14, %17 : vector<8x8xf32>
      %19 = arith.truncf %18 : vector<8x8xf32> to vector<8x8xbf16>
      %c0_17 = arith.constant 0 : index
      %c0_18 = arith.constant 0 : index
      %c0_19 = arith.constant 0 : index
      %c0_20 = arith.constant 0 : index
      %20 = vector.load %arg6[%c0_17, %c0_18, %c0_19, %c0_20] : memref<1x1x8x8xbf16, #tpu.memory_space<vmem>>, vector<1x1x8x8xbf16>
      %21 = vector.shape_cast %20 : vector<1x1x8x8xbf16> to vector<8x8xbf16>
      %22 = vector.shape_cast %19 : vector<8x8xbf16> to vector<1x1x8x8xbf16>
      tpu.vector_store %arg6[%c0_17, %c0_18, %c0_19, %c0_20], %22 {strides = array<i32>} : memref<1x1x8x8xbf16, #tpu.memory_space<vmem>>, vector<1x1x8x8xbf16>,
    } else {
    }
    return
  }
  func.func @transform_0(%arg0: i32, %arg1: i32, %arg2: i32) -> (i32, i32, i32) {
    %c0_i32 = arith.constant 0 : i32
    %c0_i32_0 = arith.constant 0 : i32
    return %arg0, %c0_i32, %arg2 : i32, i32, i32
  }
  func.func @transform_1(%arg0: i32, %arg1: i32, %arg2: i32) -> (i32, i32, i32) {
    %c0_i32 = arith.constant 0 : i32
    %c0_i32_0 = arith.constant 0 : i32
    return %arg1, %arg2, %c0_i32 : i32, i32, i32
  }
  func.func @transform_2(%arg0: i32, %arg1: i32, %arg2: i32) -> (i32, i32, i32) {
    %c0_i32 = arith.constant 0 : i32
    %c0_i32_0 = arith.constant 0 : i32
    %c0_i32_1 = arith.constant 0 : i32
    return %arg1, %c0_i32, %c0_i32_0 : i32, i32, i32
  }
  func.func @transform_3(%arg0: i32, %arg1: i32, %arg2: i32) -> (i32, i32, i32, i32) {
    %c0_i32 = arith.constant 0 : i32
    %c0_i32_0 = arith.constant 0 : i32
    %c0_i32_1 = arith.constant 0 : i32
    return %arg0, %arg1, %c0_i32, %c0_i32_0 : i32, i32, i32, i32
  }
}

module attributes {stable_mosaic.version = 11 : i64} {
  func.func @_flash_kernel(%arg0: i32, %arg1: i32, %arg2: i32, %arg3: i32, %arg4: memref<1x1x8x8xbf16, #tpu.memory_space<vmem>>, %arg5: memref<1x1x8x8xbf16, #tpu.memory_space<vmem>>, %arg6: memref<1x1x8x8xbf16, #tpu.memory_space<vmem>>, %arg7: memref<1x1x8x8xbf16, #tpu.memory_space<vmem>>, %arg8: memref<8x1xf32, #tpu.memory_space<vmem>>, %arg9: memref<8x1xf32, #tpu.memory_space<vmem>>, %arg10: memref<8x8xf32, #tpu.memory_space<vmem>>) attributes {dimension_semantics = [#tpu.dimension_semantics<parallel>, #tpu.dimension_semantics<parallel>, #tpu.dimension_semantics<parallel>, #tpu.dimension_semantics<arbitrary>], iteration_bounds = array<i64: 2, 4, 1, 1>, scalar_prefetch = 0 : i64, scratch_operands = 3 : i64, tpu.core_type = #tpu.core_type<tc>, window_params = [{transform_indices = @transform_0, window_bounds = array<i64: 1, 1, 8, 8>}, {transform_indices = @transform_1, window_bounds = array<i64: 1, 1, 8, 8>}, {transform_indices = @transform_2, window_bounds = array<i64: 1, 1, 8, 8>}, {transform_indices = @transform_3, window_bounds = array<i64: 1, 1, 8, 8>}]} {
    %c0_i32 = arith.constant 0 : i32
    %0 = arith.cmpi eq, %arg3, %c0_i32 : i32
    %1 = arith.extui %0 : i1 to i32
    %c0_i32_0 = arith.constant 0 : i32
    %2 = arith.cmpi ne, %1, %c0_i32_0 : i32
    scf.if %2 {
      %cst_29 = arith.constant -1.000000e+30 : f32
      %36 = vector.broadcast %cst_29 : f32 to vector<8x1xf32>
      %c0_30 = arith.constant 0 : index
      %c0_31 = arith.constant 0 : index
      %37 = vector.load %arg8[%c0_30, %c0_31] : memref<8x1xf32, #tpu.memory_space<vmem>>, vector<8x1xf32>
      tpu.vector_store %arg8[%c0_30, %c0_31], %36 {strides = array<i32>} : memref<8x1xf32, #tpu.memory_space<vmem>>, vector<8x1xf32>,
      %cst_32 = arith.constant 0.000000e+00 : f32
      %38 = vector.broadcast %cst_32 : f32 to vector<8x1xf32>
      %c0_33 = arith.constant 0 : index
      %c0_34 = arith.constant 0 : index
      %39 = vector.load %arg9[%c0_33, %c0_34] : memref<8x1xf32, #tpu.memory_space<vmem>>, vector<8x1xf32>
      tpu.vector_store %arg9[%c0_33, %c0_34], %38 {strides = array<i32>} : memref<8x1xf32, #tpu.memory_space<vmem>>, vector<8x1xf32>,
      %cst_35 = arith.constant 0.000000e+00 : f32
      %40 = vector.broadcast %cst_35 : f32 to vector<8x8xf32>
      %c0_36 = arith.constant 0 : index
      %c0_37 = arith.constant 0 : index
      %41 = vector.load %arg10[%c0_36, %c0_37] : memref<8x8xf32, #tpu.memory_space<vmem>>, vector<8x8xf32>
      tpu.vector_store %arg10[%c0_36, %c0_37], %40 {strides = array<i32>} : memref<8x8xf32, #tpu.memory_space<vmem>>, vector<8x8xf32>,
    } else {
    }
    %c0 = arith.constant 0 : index
    %c0_1 = arith.constant 0 : index
    %c0_2 = arith.constant 0 : index
    %c0_3 = arith.constant 0 : index
    %3 = vector.load %arg4[%c0, %c0_1, %c0_2, %c0_3] : memref<1x1x8x8xbf16, #tpu.memory_space<vmem>>, vector<1x1x8x8xbf16>
    %4 = vector.shape_cast %3 : vector<1x1x8x8xbf16> to vector<8x8xbf16>
    %c0_4 = arith.constant 0 : index
    %c0_5 = arith.constant 0 : index
    %c0_6 = arith.constant 0 : index
    %c0_7 = arith.constant 0 : index
    %5 = vector.load %arg5[%c0_4, %c0_5, %c0_6, %c0_7] : memref<1x1x8x8xbf16, #tpu.memory_space<vmem>>, vector<1x1x8x8xbf16>
    %6 = vector.shape_cast %5 : vector<1x1x8x8xbf16> to vector<8x8xbf16>
    %c0_8 = arith.constant 0 : index
    %c0_9 = arith.constant 0 : index
    %c0_10 = arith.constant 0 : index
    %c0_11 = arith.constant 0 : index
    %7 = vector.load %arg6[%c0_8, %c0_9, %c0_10, %c0_11] : memref<1x1x8x8xbf16, #tpu.memory_space<vmem>>, vector<1x1x8x8xbf16>
    %8 = vector.shape_cast %7 : vector<1x1x8x8xbf16> to vector<8x8xbf16>
    %cst = arith.constant dense<0.000000e+00> : vector<8x8xf32>
    %9 = tpu.matmul %4, %6, %cst {dimension_numbers = #tpu.dot_dimension_numbers<[1], [1], [0], [0], [0, 0, 1, 0], [], []>} : vector<8x8xbf16>, vector<8x8xbf16>, vector<8x8xf32> -> vector<8x8xf32>
    %c0_12 = arith.constant 0 : index
    %c0_13 = arith.constant 0 : index
    %10 = vector.load %arg8[%c0_12, %c0_13] : memref<8x1xf32, #tpu.memory_space<vmem>>, vector<8x1xf32>
    %cst_14 = arith.constant dense<0xFF800000> : vector<8xf32>
    %11 = vector.multi_reduction <maximumf>, %9, %cst_14 [1] : vector<8x8xf32> to vector<8xf32>
    %12 = vector.shape_cast %11 : vector<8xf32> to vector<8x1xf32>
    %13 = arith.maximumf %10, %12 : vector<8x1xf32>
    %14 = arith.subf %10, %13 : vector<8x1xf32>
    %15 = math.exp %14 : vector<8x1xf32>
    %16 = vector.broadcast %13 : vector<8x1xf32> to vector<8x8xf32>
    %17 = arith.subf %9, %16 : vector<8x8xf32>
    %18 = math.exp %17 : vector<8x8xf32>
    %c0_15 = arith.constant 0 : index
    %c0_16 = arith.constant 0 : index
    %19 = vector.load %arg9[%c0_15, %c0_16] : memref<8x1xf32, #tpu.memory_space<vmem>>, vector<8x1xf32>
    %20 = arith.mulf %15, %19 : vector<8x1xf32>
    %cst_17 = arith.constant dense<0.000000e+00> : vector<8xf32>
    %21 = vector.multi_reduction <add>, %18, %cst_17 [1] : vector<8x8xf32> to vector<8xf32>
    %22 = vector.shape_cast %21 : vector<8xf32> to vector<8x1xf32>
    %23 = arith.addf %20, %22 : vector<8x1xf32>
    %c0_18 = arith.constant 0 : index
    %c0_19 = arith.constant 0 : index
    %24 = vector.load %arg9[%c0_18, %c0_19] : memref<8x1xf32, #tpu.memory_space<vmem>>, vector<8x1xf32>
    tpu.vector_store %arg9[%c0_18, %c0_19], %23 {strides = array<i32>} : memref<8x1xf32, #tpu.memory_space<vmem>>, vector<8x1xf32>,
    %c0_20 = arith.constant 0 : index
    %c0_21 = arith.constant 0 : index
    %25 = vector.load %arg10[%c0_20, %c0_21] : memref<8x8xf32, #tpu.memory_space<vmem>>, vector<8x8xf32>
    %26 = vector.broadcast %15 : vector<8x1xf32> to vector<8x8xf32>
    %27 = arith.mulf %26, %25 : vector<8x8xf32>
    %28 = arith.truncf %18 : vector<8x8xf32> to vector<8x8xbf16>
    %cst_22 = arith.constant dense<0.000000e+00> : vector<8x8xf32>
    %29 = tpu.matmul %28, %8, %cst_22 {dimension_numbers = #tpu.dot_dimension_numbers<[1], [0], [0], [1], [0, 0, 1, 1], [], []>} : vector<8x8xbf16>, vector<8x8xbf16>, vector<8x8xf32> -> vector<8x8xf32>
    %30 = arith.addf %27, %29 : vector<8x8xf32>
    %c0_23 = arith.constant 0 : index
    %c0_24 = arith.constant 0 : index
    %31 = vector.load %arg10[%c0_23, %c0_24] : memref<8x8xf32, #tpu.memory_space<vmem>>, vector<8x8xf32>
    tpu.vector_store %arg10[%c0_23, %c0_24], %30 {strides = array<i32>} : memref<8x8xf32, #tpu.memory_space<vmem>>, vector<8x8xf32>,
    %c0_25 = arith.constant 0 : index
    %c0_26 = arith.constant 0 : index
    %32 = vector.load %arg8[%c0_25, %c0_26] : memref<8x1xf32, #tpu.memory_space<vmem>>, vector<8x1xf32>
    tpu.vector_store %arg8[%c0_25, %c0_26], %13 {strides = array<i32>} : memref<8x1xf32, #tpu.memory_space<vmem>>, vector<8x1xf32>,
    %c0_i32_27 = arith.constant 0 : i32
    %33 = arith.cmpi eq, %arg3, %c0_i32_27 : i32
    %34 = arith.extui %33 : i1 to i32
    %c0_i32_28 = arith.constant 0 : i32
    %35 = arith.cmpi ne, %34, %c0_i32_28 : i32
    scf.if %35 {
      %c0_29 = arith.constant 0 : index
      %c0_30 = arith.constant 0 : index
      %36 = vector.load %arg10[%c0_29, %c0_30] : memref<8x8xf32, #tpu.memory_space<vmem>>, vector<8x8xf32>
      %c0_31 = arith.constant 0 : index
      %c0_32 = arith.constant 0 : index
      %37 = vector.load %arg9[%c0_31, %c0_32] : memref<8x1xf32, #tpu.memory_space<vmem>>, vector<8x1xf32>
      %38 = tpu.reciprocal %37 {approx = true} : vector<8x1xf32> -> vector<8x1xf32>
      %39 = vector.broadcast %38 : vector<8x1xf32> to vector<8x8xf32>
      %40 = arith.mulf %36, %39 : vector<8x8xf32>
      %41 = arith.truncf %40 : vector<8x8xf32> to vector<8x8xbf16>
      %c0_33 = arith.constant 0 : index
      %c0_34 = arith.constant 0 : index
      %c0_35 = arith.constant 0 : index
      %c0_36 = arith.constant 0 : index
      %42 = vector.load %arg7[%c0_33, %c0_34, %c0_35, %c0_36] : memref<1x1x8x8xbf16, #tpu.memory_space<vmem>>, vector<1x1x8x8xbf16>
      %43 = vector.shape_cast %42 : vector<1x1x8x8xbf16> to vector<8x8xbf16>
      %44 = vector.shape_cast %41 : vector<8x8xbf16> to vector<1x1x8x8xbf16>
      tpu.vector_store %arg7[%c0_33, %c0_34, %c0_35, %c0_36], %44 {strides = array<i32>} : memref<1x1x8x8xbf16, #tpu.memory_space<vmem>>, vector<1x1x8x8xbf16>,
    } else {
    }
    return
  }
  func.func @transform_0(%arg0: i32, %arg1: i32, %arg2: i32, %arg3: i32) -> (i32, i32, i32, i32) {
    %c0_i32 = arith.constant 0 : i32
    %c0_i32_0 = arith.constant 0 : i32
    return %arg0, %arg1, %arg2, %c0_i32 : i32, i32, i32, i32
  }
  func.func @transform_1(%arg0: i32, %arg1: i32, %arg2: i32, %arg3: i32) -> (i32, i32, i32, i32) {
    %c0_i32 = arith.constant 0 : i32
    %0 = arith.addi %c0_i32, %arg1 : i32
    %c0_i32_0 = arith.constant 0 : i32
    %c0_i32_1 = arith.constant 0 : i32
    return %arg0, %0, %arg3, %c0_i32_0 : i32, i32, i32, i32
  }
  func.func @transform_2(%arg0: i32, %arg1: i32, %arg2: i32, %arg3: i32) -> (i32, i32, i32, i32) {
    %c4_i32 = arith.constant 4 : i32
    %0 = arith.addi %c4_i32, %arg1 : i32
    %c0_i32 = arith.constant 0 : i32
    %c0_i32_0 = arith.constant 0 : i32
    return %arg0, %0, %arg3, %c0_i32 : i32, i32, i32, i32
  }
  func.func @transform_3(%arg0: i32, %arg1: i32, %arg2: i32, %arg3: i32) -> (i32, i32, i32, i32) {
    %c0_i32 = arith.constant 0 : i32
    %c0_i32_0 = arith.constant 0 : i32
    return %arg0, %arg1, %arg2, %c0_i32 : i32, i32, i32, i32
  }
}

module attributes {stable_mosaic.version = 11 : i64} {
  func.func @_headproj_res_ln_kernel(%arg0: i32, %arg1: i32, %arg2: i32, %arg3: memref<1x1x8x32xbf16, #tpu.memory_space<vmem>>, %arg4: memref<1x32x32xbf16, #tpu.memory_space<vmem>>, %arg5: memref<1x32xf32, #tpu.memory_space<vmem>>, %arg6: memref<1x8x32xbf16, #tpu.memory_space<vmem>>, %arg7: memref<1x32xf32, #tpu.memory_space<vmem>>, %arg8: memref<1x32xf32, #tpu.memory_space<vmem>>, %arg9: memref<1x8x32xbf16, #tpu.memory_space<vmem>>, %arg10: memref<8x32xf32, #tpu.memory_space<vmem>>) attributes {dimension_semantics = [#tpu.dimension_semantics<parallel>, #tpu.dimension_semantics<parallel>, #tpu.dimension_semantics<arbitrary>], iteration_bounds = array<i64: 2, 1, 1>, scalar_prefetch = 0 : i64, scratch_operands = 1 : i64, tpu.core_type = #tpu.core_type<tc>, window_params = [{transform_indices = @transform_0, window_bounds = array<i64: 1, 1, 8, 32>}, {transform_indices = @transform_1, window_bounds = array<i64: 1, 32, 32>}, {pipeline_mode = #tpu.pipeline_mode<synchronous>, transform_indices = @transform_2, window_bounds = array<i64: 1, 32>}, {transform_indices = @transform_3, window_bounds = array<i64: 1, 8, 32>}, {pipeline_mode = #tpu.pipeline_mode<synchronous>, transform_indices = @transform_4, window_bounds = array<i64: 1, 32>}, {pipeline_mode = #tpu.pipeline_mode<synchronous>, transform_indices = @transform_5, window_bounds = array<i64: 1, 32>}, {transform_indices = @transform_6, window_bounds = array<i64: 1, 8, 32>}]} {
    %c0_i32 = arith.constant 0 : i32
    %0 = arith.cmpi eq, %arg2, %c0_i32 : i32
    %1 = arith.extui %0 : i1 to i32
    %c0_i32_0 = arith.constant 0 : i32
    %2 = arith.cmpi ne, %1, %c0_i32_0 : i32
    scf.if %2 {
      %cst_13 = arith.constant 0.000000e+00 : f32
      %14 = vector.broadcast %cst_13 : f32 to vector<8x32xf32>
      %c0_14 = arith.constant 0 : index
      %c0_15 = arith.constant 0 : index
      %15 = vector.load %arg10[%c0_14, %c0_15] : memref<8x32xf32, #tpu.memory_space<vmem>>, vector<8x32xf32>
      tpu.vector_store %arg10[%c0_14, %c0_15], %14 {strides = array<i32>} : memref<8x32xf32, #tpu.memory_space<vmem>>, vector<8x32xf32>,
    } else {
    }
    %c0 = arith.constant 0 : index
    %c0_1 = arith.constant 0 : index
    %3 = vector.load %arg10[%c0, %c0_1] : memref<8x32xf32, #tpu.memory_space<vmem>>, vector<8x32xf32>
    %c0_2 = arith.constant 0 : index
    %c0_3 = arith.constant 0 : index
    %c0_4 = arith.constant 0 : index
    %c0_5 = arith.constant 0 : index
    %4 = vector.load %arg3[%c0_2, %c0_3, %c0_4, %c0_5] : memref<1x1x8x32xbf16, #tpu.memory_space<vmem>>, vector<1x1x8x32xbf16>
    %5 = vector.shape_cast %4 : vector<1x1x8x32xbf16> to vector<8x32xbf16>
    %c0_6 = arith.constant 0 : index
    %c0_7 = arith.constant 0 : index
    %c0_8 = arith.constant 0 : index
    %6 = vector.load %arg4[%c0_6, %c0_7, %c0_8] : memref<1x32x32xbf16, #tpu.memory_space<vmem>>, vector<1x32x32xbf16>
    %7 = vector.shape_cast %6 : vector<1x32x32xbf16> to vector<32x32xbf16>
    %cst = arith.constant dense<0.000000e+00> : vector<8x32xf32>
    %8 = tpu.matmul %5, %7, %cst {dimension_numbers = #tpu.dot_dimension_numbers<[1], [0], [0], [1], [0, 0, 1, 1], [], []>} : vector<8x32xbf16>, vector<32x32xbf16>, vector<8x32xf32> -> vector<8x32xf32>
    %9 = arith.addf %3, %8 : vector<8x32xf32>
    %c0_9 = arith.constant 0 : index
    %c0_10 = arith.constant 0 : index
    %10 = vector.load %arg10[%c0_9, %c0_10] : memref<8x32xf32, #tpu.memory_space<vmem>>, vector<8x32xf32>
    tpu.vector_store %arg10[%c0_9, %c0_10], %9 {strides = array<i32>} : memref<8x32xf32, #tpu.memory_space<vmem>>, vector<8x32xf32>,
    %c0_i32_11 = arith.constant 0 : i32
    %11 = arith.cmpi eq, %arg2, %c0_i32_11 : i32
    %12 = arith.extui %11 : i1 to i32
    %c0_i32_12 = arith.constant 0 : i32
    %13 = arith.cmpi ne, %12, %c0_i32_12 : i32
    scf.if %13 {
      %c0_13 = arith.constant 0 : index
      %c0_14 = arith.constant 0 : index
      %14 = vector.load %arg10[%c0_13, %c0_14] : memref<8x32xf32, #tpu.memory_space<vmem>>, vector<8x32xf32>
      %c0_15 = arith.constant 0 : index
      %c0_16 = arith.constant 0 : index
      %15 = vector.load %arg5[%c0_15, %c0_16] : memref<1x32xf32, #tpu.memory_space<vmem>>, vector<1x32xf32>
      %16 = vector.broadcast %15 : vector<1x32xf32> to vector<8x32xf32>
      %17 = arith.addf %14, %16 : vector<8x32xf32>
      %c0_17 = arith.constant 0 : index
      %c0_18 = arith.constant 0 : index
      %c0_19 = arith.constant 0 : index
      %18 = vector.load %arg6[%c0_17, %c0_18, %c0_19] : memref<1x8x32xbf16, #tpu.memory_space<vmem>>, vector<1x8x32xbf16>
      %19 = vector.shape_cast %18 : vector<1x8x32xbf16> to vector<8x32xbf16>
      %20 = arith.extf %19 : vector<8x32xbf16> to vector<8x32xf32>
      %21 = arith.addf %17, %20 : vector<8x32xf32>
      %cst_20 = arith.constant dense<0.000000e+00> : vector<8xf32>
      %22 = vector.multi_reduction <add>, %21, %cst_20 [1] : vector<8x32xf32> to vector<8xf32>
      %23 = vector.shape_cast %22 : vector<8xf32> to vector<8x1xf32>
      %cst_21 = arith.constant 3.200000e+01 : f32
      %24 = vector.broadcast %cst_21 : f32 to vector<8x1xf32>
      %25 = arith.divf %23, %24 : vector<8x1xf32>
      %26 = vector.broadcast %25 : vector<8x1xf32> to vector<8x32xf32>
      %27 = arith.subf %21, %26 : vector<8x32xf32>
      %28 = arith.mulf %27, %27 : vector<8x32xf32>
      %cst_22 = arith.constant dense<0.000000e+00> : vector<8xf32>
      %29 = vector.multi_reduction <add>, %28, %cst_22 [1] : vector<8x32xf32> to vector<8xf32>
      %30 = vector.shape_cast %29 : vector<8xf32> to vector<8x1xf32>
      %cst_23 = arith.constant 3.200000e+01 : f32
      %31 = vector.broadcast %cst_23 : f32 to vector<8x1xf32>
      %32 = arith.divf %30, %31 : vector<8x1xf32>
      %33 = vector.broadcast %25 : vector<8x1xf32> to vector<8x32xf32>
      %34 = arith.subf %21, %33 : vector<8x32xf32>
      %cst_24 = arith.constant 9.99999974E-6 : f32
      %35 = vector.broadcast %cst_24 : f32 to vector<8x1xf32>
      %36 = arith.addf %32, %35 : vector<8x1xf32>
      %37 = math.rsqrt %36 : vector<8x1xf32>
      %38 = vector.broadcast %37 : vector<8x1xf32> to vector<8x32xf32>
      %39 = arith.mulf %34, %38 : vector<8x32xf32>
      %c0_25 = arith.constant 0 : index
      %c0_26 = arith.constant 0 : index
      %40 = vector.load %arg7[%c0_25, %c0_26] : memref<1x32xf32, #tpu.memory_space<vmem>>, vector<1x32xf32>
      %41 = vector.broadcast %40 : vector<1x32xf32> to vector<8x32xf32>
      %42 = arith.mulf %39, %41 : vector<8x32xf32>
      %c0_27 = arith.constant 0 : index
      %c0_28 = arith.constant 0 : index
      %43 = vector.load %arg8[%c0_27, %c0_28] : memref<1x32xf32, #tpu.memory_space<vmem>>, vector<1x32xf32>
      %44 = vector.broadcast %43 : vector<1x32xf32> to vector<8x32xf32>
      %45 = arith.addf %42, %44 : vector<8x32xf32>
      %46 = arith.truncf %45 : vector<8x32xf32> to vector<8x32xbf16>
      %c0_29 = arith.constant 0 : index
      %c0_30 = arith.constant 0 : index
      %c0_31 = arith.constant 0 : index
      %47 = vector.load %arg9[%c0_29, %c0_30, %c0_31] : memref<1x8x32xbf16, #tpu.memory_space<vmem>>, vector<1x8x32xbf16>
      %48 = vector.shape_cast %47 : vector<1x8x32xbf16> to vector<8x32xbf16>
      %49 = vector.shape_cast %46 : vector<8x32xbf16> to vector<1x8x32xbf16>
      tpu.vector_store %arg9[%c0_29, %c0_30, %c0_31], %49 {strides = array<i32>} : memref<1x8x32xbf16, #tpu.memory_space<vmem>>, vector<1x8x32xbf16>,
    } else {
    }
    return
  }
  func.func @transform_0(%arg0: i32, %arg1: i32, %arg2: i32) -> (i32, i32, i32, i32) {
    %c0_i32 = arith.constant 0 : i32
    %c0_i32_0 = arith.constant 0 : i32
    return %arg0, %arg2, %arg1, %c0_i32 : i32, i32, i32, i32
  }
  func.func @transform_1(%arg0: i32, %arg1: i32, %arg2: i32) -> (i32, i32, i32) {
    %c0_i32 = arith.constant 0 : i32
    %c0_i32_0 = arith.constant 0 : i32
    %c0_i32_1 = arith.constant 0 : i32
    return %arg2, %c0_i32, %c0_i32_0 : i32, i32, i32
  }
  func.func @transform_2(%arg0: i32, %arg1: i32, %arg2: i32) -> (i32, i32) {
    %c0_i32 = arith.constant 0 : i32
    %c0_i32_0 = arith.constant 0 : i32
    %c0_i32_1 = arith.constant 0 : i32
    return %c0_i32, %c0_i32_0 : i32, i32
  }
  func.func @transform_3(%arg0: i32, %arg1: i32, %arg2: i32) -> (i32, i32, i32) {
    %c0_i32 = arith.constant 0 : i32
    %c0_i32_0 = arith.constant 0 : i32
    return %arg0, %arg1, %c0_i32 : i32, i32, i32
  }
  func.func @transform_4(%arg0: i32, %arg1: i32, %arg2: i32) -> (i32, i32) {
    %c0_i32 = arith.constant 0 : i32
    %c0_i32_0 = arith.constant 0 : i32
    %c0_i32_1 = arith.constant 0 : i32
    return %c0_i32, %c0_i32_0 : i32, i32
  }
  func.func @transform_5(%arg0: i32, %arg1: i32, %arg2: i32) -> (i32, i32) {
    %c0_i32 = arith.constant 0 : i32
    %c0_i32_0 = arith.constant 0 : i32
    %c0_i32_1 = arith.constant 0 : i32
    return %c0_i32, %c0_i32_0 : i32, i32
  }
  func.func @transform_6(%arg0: i32, %arg1: i32, %arg2: i32) -> (i32, i32, i32) {
    %c0_i32 = arith.constant 0 : i32
    %c0_i32_0 = arith.constant 0 : i32
    return %arg0, %arg1, %c0_i32 : i32, i32, i32
  }
}

</mosaic_0001>

<llo_original>
// kernel: decoder_forward.16
$region0: #{decoder_forward.16}
  #allocation0 [shape = 'u32[]', space=smem, size = 0x4, offset = 0x4, fixed_abs, tag = 'smem constant byte address 0x4 - core index']
  #allocation1 [shape = 'u32[144,128]{1,0:T(1,128)}', space=vmem, size = 0x12000, scoped, tag = 'internal scratch']
  #allocation2 [shape = 'f32[8,8]{1,0:T(8,128)}', space=vmem, size = 0x1000, scoped, tag = 'scratch operand']
  %s0 = inlined_call_operand.hbm [shape: bf16[2,8,32], index: 0, kind: input, shape index: {}]
  %s1 = inlined_call_operand.hbm [shape: bf16[12,32,8], index: 1, kind: input, shape index: {}]
  %s2 = inlined_call_operand.hbm [shape: f32[12,1,8], index: 2, kind: input, shape index: {}]
  %s3 = inlined_call_operand.hbm [shape: bf16[2,12,8,8], index: 3, kind: output, shape index: {}]
  %s4 = sld [smem:[#allocation0]]
  $region65: #{decoder_forward.16} parent=0
    _
  %s6 = ssub.s32 1, %s4
  %s7 = scalar_select 0, %s6, %s4
  $region1: #{decoder_forward.16} parent=0
    #allocation3 [shape = 'u8[4096]{0}', space=vmem, size = 0x1000, scoped, tag = 'input window, operand 0']
    #allocation4 [shape = 's32[2]{0}', space=sflag, size = 0x8, scoped, tag = 'scoped memory for decoder_forward.16']
    #allocation5 [shape = 's32[2]{0}', space=sflag, size = 0x8, scoped, tag = 'scoped memory for decoder_forward.16']
    #allocation6 [shape = 'u8[16384]{0}', space=vmem, size = 0x4000, scoped, tag = 'input window, operand 1']
    #allocation7 [shape = 's32[2]{0}', space=sflag, size = 0x8, scoped, tag = 'scoped memory for decoder_forward.16']
    #allocation8 [shape = 'u8[1024]{0}', space=vmem, size = 0x400, scoped, tag = 'input window, operand 2']
    #allocation9 [shape = 'u8[4096]{0}', space=vmem, size = 0x1000, scoped, tag = 'output window, operand 0']
    %8 = vsyncpa [#allocation4], 0
    %s9 = scalar_lea.sflag [#allocation4], 1
    %10 = vsyncpa %s9, 0
    %11 = vsyncpa [#allocation7], 0
    %s12 = scalar_lea.sflag [#allocation7], 1
    %13 = vsyncpa %s12, 0
    %14 = vsyncpa [#allocation5], 0
    %s15 = scalar_lea.sflag [#allocation5], 1
    %16 = vsyncpa %s15, 0
    loop: start=0, step=1, limit=26
    $region2: #{decoder_forward.16} parent=1 // loop_pre_header
      _
    $region3: #{decoder_forward.16} parent=1 // loop_header
      %s18 = sphi 0, %s22
      %p19 = scmp.ge.s32.totalorder %s18, 26
      %s25 = sphi 0, %s44
      %s26 = sphi 0, %s40
      %s27 = sphi 0, %s36
      %s28 = sphi 0, %s25
      %s29 = sphi 0, %s26
      %s30 = sphi 0, %s27
      %s31 = sphi 0, %s28
      %s32 = sphi 0, %s29
      %s33 = sphi 0, %s30
      %s49 = sphi 0, %s51
      %s52 = sphi 0, %s49
      %s53 = sphi 0, %s52
      %s69 = sphi 0, %s53
      %s77 = sphi 0, %s79
      %s80 = sphi 0, %s77
      %s81 = sphi 0, %s80
      %s97 = sphi 0, %s81
      %s103 = sphi 0, %s105
      %s106 = sphi 0, %s103
      %s107 = sphi 0, %s106
      %s123 = sphi 0, %s107
      %s131 = sphi 0, %s133
      %s134 = sphi 0, %s131
      %s135 = sphi 0, %s134
      %s151 = sphi 0, %s135
    $region4: #{decoder_forward.16} parent=1 // loop_header_branch
      %21 = sbr.rel (%p19) target = $region8
    $region5: #{decoder_forward.16} parent=1 // loop_body
      %s23 = ssub.s32 %s18, 1
      %s24 = ssub.s32 %s18, 2
      %s34 = sadd.s32 1, %s27
      %p35 = scmp.ge.s32.totalorder %s34, 1
      %s36 = scalar_select %p35, 0, %s34
      %s37 = sadd.s32 1, %s26
      %s38 = scalar_select %p35, %s37, %s26
      %p39 = scmp.ge.s32.totalorder %s38, 12
      %s40 = scalar_select %p39, 0, %s38
      %s41 = sadd.s32 1, %s25
      %s42 = scalar_select %p39, %s41, %s25
      %p43 = scmp.ge.s32.totalorder %s42, 2
      %s44 = scalar_select %p43, 0, %s42
      %s45 = ssub.s32 %s25, %s44
      %s46 = ssub.s32 %s27, %s36
      %s47 = sor.u32 %s45, %s46
      %p48 = scmp.eq.s32.totalorder %s47, 0
      %s50 = sadd.s32 %s49, 1
      %s51 = scalar_select %p48, %s49, %s50
      %p54 = pneg %p48
      %p55 = scmp.eq.s32.totalorder %s18, 23
      %p56 = por %p54, %p55
      %p57 = scmp.ne.s32.totalorder %s49, %s52
      %p58 = scmp.eq.s32.totalorder %s18, 0
      %p59 = por %p57, %p58
      %p60 = scmp.ne.s32.totalorder %s49, %s52
      %p61 = scmp.eq.s32.totalorder %s23, 23
      %p62 = por %p60, %p61
      %p63 = scmp.ne.s32.totalorder %s52, %s53
      %p64 = scmp.eq.s32.totalorder %s23, 0
      %p65 = por %p63, %p64
      %p66 = scmp.ne.s32.totalorder %s52, %s53
      %p67 = scmp.eq.s32.totalorder %s24, 23
      %p68 = por %p66, %p67
      %p70 = scmp.ne.s32.totalorder %s53, %s69
      %p71 = scmp.eq.s32.totalorder %s24, 0
      %p72 = por %p70, %p71
      %s73 = ssub.s32 %s26, %s40
      %s74 = ssub.s32 %s27, %s36
      %s75 = sor.u32 %s73, %s74
      %p76 = scmp.eq.s32.totalorder %s75, 0
      %s78 = sadd.s32 %s77, 1
      %s79 = scalar_select %p76, %s77, %s78
      %p82 = pneg %p76
      %p83 = scmp.eq.s32.totalorder %s18, 23
      %p84 = por %p82, %p83
      %p85 = scmp.ne.s32.totalorder %s77, %s80
      %p86 = scmp.eq.s32.totalorder %s18, 0
      %p87 = por %p85, %p86
      %p88 = scmp.ne.s32.totalorder %s77, %s80
      %p89 = scmp.eq.s32.totalorder %s23, 23
      %p90 = por %p88, %p89
      %p91 = scmp.ne.s32.totalorder %s80, %s81
      %p92 = scmp.eq.s32.totalorder %s23, 0
      %p93 = por %p91, %p92
      %p94 = scmp.ne.s32.totalorder %s80, %s81
      %p95 = scmp.eq.s32.totalorder %s24, 23
      %p96 = por %p94, %p95
      %p98 = scmp.ne.s32.totalorder %s81, %s97
      %p99 = scmp.eq.s32.totalorder %s24, 0
      %p100 = por %p98, %p99
      %s101 = ssub.s32 %s26, %s40
      %p102 = scmp.eq.s32.totalorder %s101, 0
      %s104 = sadd.s32 %s103, 1
      %s105 = scalar_select %p102, %s103, %s104
      %p108 = pneg %p102
      %p109 = scmp.eq.s32.totalorder %s18, 23
      %p110 = por %p108, %p109
      %p111 = scmp.ne.s32.totalorder %s103, %s106
      %p112 = scmp.eq.s32.totalorder %s18, 0
      %p113 = por %p111, %p112
      %p114 = scmp.ne.s32.totalorder %s103, %s106
      %p115 = scmp.eq.s32.totalorder %s23, 23
      %p116 = por %p114, %p115
      %p117 = scmp.ne.s32.totalorder %s106, %s107
      %p118 = scmp.eq.s32.totalorder %s23, 0
      %p119 = por %p117, %p118
      %p120 = scmp.ne.s32.totalorder %s106, %s107
      %p121 = scmp.eq.s32.totalorder %s24, 23
      %p122 = por %p120, %p121
      %p124 = scmp.ne.s32.totalorder %s107, %s123
      %p125 = scmp.eq.s32.totalorder %s24, 0
      %p126 = por %p124, %p125
      %s127 = ssub.s32 %s25, %s44
      %s128 = ssub.s32 %s26, %s40
      %s129 = sor.u32 %s127, %s128
      %p130 = scmp.eq.s32.totalorder %s129, 0
      %s132 = sadd.s32 %s131, 1
      %s133 = scalar_select %p130, %s131, %s132
      %p136 = pneg %p130
      %p137 = scmp.eq.s32.totalorder %s18, 23
      %p138 = por %p136, %p137
      %p139 = scmp.ne.s32.totalorder %s131, %s134
      %p140 = scmp.eq.s32.totalorder %s18, 0
      %p141 = por %p139, %p140
      %p142 = scmp.ne.s32.totalorder %s131, %s134
      %p143 = scmp.eq.s32.totalorder %s23, 23
      %p144 = por %p142, %p143
      %p145 = scmp.ne.s32.totalorder %s134, %s135
      %p146 = scmp.eq.s32.totalorder %s23, 0
      %p147 = por %p145, %p146
      %p148 = scmp.ne.s32.totalorder %s134, %s135
      %p149 = scmp.eq.s32.totalorder %s24, 23
      %p150 = por %p148, %p149
      %p152 = scmp.ne.s32.totalorder %s135, %s151
      %p153 = scmp.eq.s32.totalorder %s24, 0
      %p154 = por %p152, %p153
      %p155 = scmp.le.s32.totalorder 1, %s18
      %p156 = scmp.lt.s32.totalorder %s18, 25
      %p157 = pnand %p155, %p156
      %p158 = pneg %p157
      // Predicated region
      $region9: #{decoder_forward.16} parent=5 // pred_check
        _
      $region10: #{decoder_forward.16} parent=5 // pred_check_branch
        %160 = sbr.rel (%p157) target = $region12
      $region11: #{decoder_forward.16} parent=5 // pred_region
        %s161 = ssub.s32 %s18, 1
      $region12: #{decoder_forward.16} parent=5 // pred_fallthru
        _
      %p162 = scmp.lt.s32.totalorder %s18, 24
      // Predicated region
      $region13: #{decoder_forward.16} parent=5 // pred_check
        %p163 = pneg %p162
      $region14: #{decoder_forward.16} parent=5 // pred_check_branch
        %165 = sbr.rel (%p163) target = $region16
      $region15: #{decoder_forward.16} parent=5 // pred_region
        // Predicated region
        $region17: #{decoder_forward.16} parent=15 // pred_check
          %p166 = pneg %p59
        $region18: #{decoder_forward.16} parent=15 // pred_check_branch
          %168 = sbr.rel (%p166) target = $region20
        $region19: #{decoder_forward.16} parent=15 // pred_region
          %s169 = sand.u32 %s49, 1
          %s170 = scalar_lea.sflag [#allocation4], %s169
          %s171 = sand.u32 %s49, 1
          %s172 = smul.addr %s171, 4
          %s173 = scalar_lea.vmem [#allocation3], %s172
          %s175 = ssub.s32 64, 64
          %176 = vsyncadd %s170, %s175
          %s177 = sadd.s32 %s27, %s25
          %s178 = smul.addr %s177, 64
          %s179 = scalar_lea.hbm %s0, %s178
          %s181 = sshll.u32 %s173, 4
          %s182 = int_to_ptr.vmem [resolvable:$true] %s181
          %184 = dma.hbm_to_vmem [thread:$0]  %s179, 64, %s182, %s170
        $region20: #{decoder_forward.16} parent=15 // pred_fallthru
          _
        // Predicated region
        $region21: #{decoder_forward.16} parent=15 // pred_check
          %p185 = pneg %p87
        $region22: #{decoder_forward.16} parent=15 // pred_check_branch
          %187 = sbr.rel (%p185) target = $region24
        $region23: #{decoder_forward.16} parent=15 // pred_region
          %s188 = sand.u32 %s18, 1
          %s189 = scalar_lea.sflag [#allocation7], %s188
          %s190 = sand.u32 %s77, 1
          %s191 = smul.addr %s190, 16
          %s192 = scalar_lea.vmem [#allocation6], %s191
          %s193 = smul.u32 4, %s27
          %s195 = ssub.s32 256, 256
          %196 = vsyncadd %s189, %s195
          %s197 = smul.addr %s26, 4
          %s198 = sadd.s32 %s193, %s197
          %s199 = smul.addr %s198, 64
          %s200 = scalar_lea.hbm %s1, %s199
          %s201 = sshll.u32 %s192, 4
          %s202 = int_to_ptr.vmem [resolvable:$true] %s201
          %207 = dma.hbm_to_vmem [thread:$0]  %s200, 256, %s202, %s189, 64, 64, 4
        $region24: #{decoder_forward.16} parent=15 // pred_fallthru
          _
        // Predicated region
        $region25: #{decoder_forward.16} parent=15 // pred_check
          %p208 = pneg %p113
        $region26: #{decoder_forward.16} parent=15 // pred_check_branch
          %210 = sbr.rel (%p208) target = $region28
        $region27: #{decoder_forward.16} parent=15 // pred_region
          %s211 = sand.u32 %s18, 1
          %s212 = scalar_lea.sflag [#allocation7], %s211
          %s213 = sand.u32 %s103, 1
          %s214 = scalar_lea.vmem [#allocation8], %s213
          %s216 = ssub.s32 16, 16
          %217 = vsyncadd %s212, %s216
          %s218 = smul.addr %s26, 16
          %s219 = scalar_lea.hbm %s2, %s218
          %s221 = sshll.u32 %s214, 4
          %s222 = int_to_ptr.vmem [resolvable:$true] %s221
          %224 = dma.hbm_to_vmem [thread:$0]  %s219, 16, %s222, %s212
        $region28: #{decoder_forward.16} parent=15 // pred_fallthru
          _
      $region16: #{decoder_forward.16} parent=5 // pred_fallthru
        _
      %p225 = scmp.le.s32.totalorder 1, %s18
      %p226 = scmp.lt.s32.totalorder %s18, 25
      %p227 = pnand %p225, %p226
      %p228 = pneg %p227
      // Predicated region
      $region29: #{decoder_forward.16} parent=5 // pred_check
        _
      $region30: #{decoder_forward.16} parent=5 // pred_check_branch
        %230 = sbr.rel (%p227) target = $region32
      $region31: #{decoder_forward.16} parent=5 // pred_region
        %s231 = ssub.s32 %s18, 1
        %s232 = sand.u32 %s52, 1
        %s233 = scalar_lea.sflag [#allocation4], %s232
        %s234 = sand.u32 %s52, 1
        %s235 = smul.addr %s234, 4
        %s236 = scalar_lea.vmem [#allocation3], %s235
        // Predicated region
        $region33: #{decoder_forward.16} parent=31 // pred_check
          %p237 = pneg %p65
        $region34: #{decoder_forward.16} parent=31 // pred_check_branch
          %239 = sbr.rel (%p237) target = $region36
        $region35: #{decoder_forward.16} parent=31 // pred_region
          %240 = dma.done %s233, 64
        $region36: #{decoder_forward.16} parent=31 // pred_fallthru
          _
        %s241 = sand.u32 %s23, 1
        %s242 = scalar_lea.sflag [#allocation7], %s241
        %s243 = sand.u32 %s80, 1
        %s244 = smul.addr %s243, 16
        %s245 = scalar_lea.vmem [#allocation6], %s244
        // Predicated region
        $region37: #{decoder_forward.16} parent=31 // pred_check
          %p246 = pneg %p93
        $region38: #{decoder_forward.16} parent=31 // pred_check_branch
          %248 = sbr.rel (%p246) target = $region40
        $region39: #{decoder_forward.16} parent=31 // pred_region
          %249 = dma.done %s242, 256
        $region40: #{decoder_forward.16} parent=31 // pred_fallthru
          _
        %s250 = sand.u32 %s23, 1
        %s251 = scalar_lea.sflag [#allocation7], %s250
        %s252 = sand.u32 %s106, 1
        %s253 = scalar_lea.vmem [#allocation8], %s252
        // Predicated region
        $region41: #{decoder_forward.16} parent=31 // pred_check
          %p254 = pneg %p119
        $region42: #{decoder_forward.16} parent=31 // pred_check_branch
          %256 = sbr.rel (%p254) target = $region44
        $region43: #{decoder_forward.16} parent=31 // pred_region
          %257 = dma.done %s251, 16
        $region44: #{decoder_forward.16} parent=31 // pred_fallthru
          _
        %s258 = sand.u32 %s52, 1
        %s259 = scalar_lea.sflag [#allocation4], %s258
        %s260 = sand.u32 %s52, 1
        %s261 = smul.addr %s260, 4
        %s262 = scalar_lea.vmem [#allocation3], %s261
        %p263 = pneg %p65
        %p264 = pneg %p62
        %s265 = sand.u32 %s23, 1
        %s266 = scalar_lea.sflag [#allocation7], %s265
        %s267 = sand.u32 %s80, 1
        %s268 = smul.addr %s267, 16
        %s269 = scalar_lea.vmem [#allocation6], %s268
        %p270 = pneg %p93
        %p271 = pneg %p90
        %s272 = sand.u32 %s23, 1
        %s273 = scalar_lea.sflag [#allocation7], %s272
        %s274 = sand.u32 %s106, 1
        %s275 = scalar_lea.vmem [#allocation8], %s274
        %p276 = pneg %p119
        %p277 = pneg %p116
        %p278 = pneg %p147
        %p279 = pneg %p144
        %s280 = sand.u32 %s134, 1
        %s281 = scalar_lea.sflag [#allocation5], %s280
        %s282 = sand.u32 %s134, 1
        %s283 = smul.addr %s282, 4
        %s284 = scalar_lea.vmem [#allocation9], %s283
        %s285 = smul.u32 4, %s30
        %p287 = scmp.eq.s32.totalorder %s30, 0
        // Predicated region
        $region45: #{decoder_forward.16} parent=31 // pred_check
          %p288 = pneg %p287
        $region46: #{decoder_forward.16} parent=31 // pred_check_branch
          %290 = sbr.rel (%p288) target = $region48
        $region47: #{decoder_forward.16} parent=31 // pred_region
          %vm291 = vcmask 64512
          %292 = vst.msk [vmem:[#allocation2] sm:$0xff] %vm291, 0.0
        $region48: #{decoder_forward.16} parent=31 // pred_fallthru
          _
        %v293 = vld [vmem:[#allocation2] sm:$0xff]
        %v294 = vld [vmem:[%s236] sm:$0xf]
        %v295 = vld [vmem:[%s245] sm:$0xf]
        %v296 = vld [vmem:[%s245 + $0x4] sm:$0xf]
        %v297 = vld [vmem:[%s245 + $0x8] sm:$0xf]
        %v298 = vld [vmem:[%s245 + $0xc] sm:$0xf]
        %v303 = vunpack.c.l.b16 %v295
        %v304 = vunpack.c.l.b16 %v296
        %v305 = vunpack.c.l.b16 %v297
        %v306 = vunpack.c.l.b16 %v298
        %v307 = vpack.c.b16 %v304, %v303
        %v308 = vpack.c.b16 %v306, %v305
        %vm311 = vcmask 261120
        %v313 = vsel %vm311, %v294, 0
        %315 = vmatprep.subr.bf16.mxu0 0
        %316 = vmatpush1.bf16.msra.mxu0 %v307
        %317 = vmatprep.subr.bf16.mxu0 0
        %318 = vmatpush1.bf16.msra.mxu0 %v308
        %319 = vmatprep.subr.bf16.mxu0 0
        %320 = vmatpush1.bf16.msra.mxu0 0
        %321 = vmatprep.subr.bf16.mxu0 0
        %322 = vmatpush1.bf16.msra.mxu0 0
        %323 = vmatprep.subr.bf16.mxu0 0
        %324 = vmatpush1.bf16.msra.mxu0 0
        %325 = vmatprep.subr.bf16.mxu0 0
        %326 = vmatpush1.bf16.msra.mxu0 0
        %327 = vmatprep.subr.bf16.mxu0 0
        %328 = vmatpush1.bf16.msra.mxu0 0
        %329 = vmatprep.subr.bf16.mxu0 0
        %330 = vmatpush1.bf16.msra.mxu0 0
        %331 = vmatprep.subr.bf16.mxu0 0
        %332 = vmatpush1.bf16.msra.mxu0 0
        %333 = vmatprep.subr.bf16.mxu0 0
        %334 = vmatpush1.bf16.msra.mxu0 0
        %335 = vmatprep.subr.bf16.mxu0 0
        %336 = vmatpush1.bf16.msra.mxu0 0
        %337 = vmatprep.subr.bf16.mxu0 0
        %338 = vmatpush1.bf16.msra.mxu0 0
        %339 = vmatprep.subr.bf16.mxu0 0
        %340 = vmatpush1.bf16.msra.mxu0 0
        %341 = vmatprep.subr.bf16.mxu0 0
        %342 = vmatpush1.bf16.msra.mxu0 0
        %343 = vmatprep.subr.bf16.mxu0 0
        %344 = vmatpush1.bf16.msra.mxu0 0
        %345 = vmatprep.subr.bf16.mxu0 0
        %346 = vmatpush1.bf16.msra.mxu0 0
        %347 = vmatprep.mubr.bf16.mxu0 0
        %348 = vmatmul.mubr.bf16.gmra.mrb[0].mxu0 %v313
        %v349 = vpop.f32.mrb[0].mxu0
        %v350 = vadd.f32 0.0, %v349
        %v351 = vpop.f32.mrb[0].mxu0
        %v352 = vpop.f32.mrb[0].mxu0
        %v353 = vpop.f32.mrb[0].mxu0
        %354 = vdwg.mxu0
        %v355 = vadd.f32 %v293, %v350
        %vm356 = vcmask 64512
        %357 = vst.msk [vmem:[#allocation2] sm:$0xff] %vm356, %v355
        // Predicated region
        $region49: #{decoder_forward.16} parent=31 // pred_check
          %p358 = pneg %p287
        $region50: #{decoder_forward.16} parent=31 // pred_check_branch
          %360 = sbr.rel (%p358) target = $region52
        $region51: #{decoder_forward.16} parent=31 // pred_region
          %v361 = vld [vmem:[#allocation2] sm:$0xff]
          %v362 = vld [vmem:[%s253] sm:$0x1]
          %v364 = vlaneseq
          %v365 = vshrl.u32 %v364, 7
          %v366 = vsub.s32 0, %v365
          %v367 = vrot.slane %v362, %v366
          %v369 = vadd.f32 %v361, %v367
          %v370 = vpack.c.bf16 %v369, %v369
          %vm371 = vcmask 60416
          %372 = vst.msk [vmem:[%s284] sm:$0xf] %vm371, %v370
        $region52: #{decoder_forward.16} parent=31 // pred_fallthru
          _
        %s373 = sand.u32 %s134, 1
        %s374 = scalar_lea.sflag [#allocation5], %s373
        %s375 = sand.u32 %s134, 1
        %s376 = smul.addr %s375, 4
        %s377 = scalar_lea.vmem [#allocation9], %s376
        // Predicated region
        $region53: #{decoder_forward.16} parent=31 // pred_check
          %p378 = pneg %p144
        $region54: #{decoder_forward.16} parent=31 // pred_check_branch
          %380 = sbr.rel (%p378) target = $region56
        $region55: #{decoder_forward.16} parent=31 // pred_region
          %s382 = ssub.s32 64, 64
          %383 = vsyncadd %s374, %s382
          %s384 = smul.addr %s28, 12
          %s385 = sadd.s32 %s29, %s384
          %s386 = smul.addr %s385, 64
          %s387 = scalar_lea.hbm %s3, %s386
          %s389 = sshll.u32 %s377, 4
          %s390 = int_to_ptr.vmem [resolvable:$true] %s389
          %392 = dma.vmem_to_hbm [thread:$0]  %s390, 64, %s387, %s374
        $region56: #{decoder_forward.16} parent=31 // pred_fallthru
          _
      $region32: #{decoder_forward.16} parent=5 // pred_fallthru
        _
      %p393 = scmp.le.s32.totalorder 2, %s18
      // Predicated region
      $region57: #{decoder_forward.16} parent=5 // pred_check
        %p394 = pneg %p393
      $region58: #{decoder_forward.16} parent=5 // pred_check_branch
        %396 = sbr.rel (%p394) target = $region60
      $region59: #{decoder_forward.16} parent=5 // pred_region
        %s397 = ssub.s32 %s18, 2
        // Predicated region
        $region61: #{decoder_forward.16} parent=59 // pred_check
          %p398 = pneg %p150
        $region62: #{decoder_forward.16} parent=59 // pred_check_branch
          %400 = sbr.rel (%p398) target = $region64
        $region63: #{decoder_forward.16} parent=59 // pred_region
          %s401 = sand.u32 %s135, 1
          %s402 = scalar_lea.sflag [#allocation5], %s401
          %s403 = sand.u32 %s135, 1
          %s404 = smul.addr %s403, 4
          %s405 = scalar_lea.vmem [#allocation9], %s404
          %406 = dma.done %s402, 64
        $region64: #{decoder_forward.16} parent=59 // pred_fallthru
          _
      $region60: #{decoder_forward.16} parent=5 // pred_fallthru
        _
    $region6: #{decoder_forward.16} parent=1 // loop_footer
      %s22 = sadd.s32 1, %s18
    $region7: #{decoder_forward.16} parent=1 // loop_footer_branch
      %17 = sbr.rel target = $region3
    $region8: #{decoder_forward.16} parent=1 // loop_exit
      _
    %407 = vsyncpa [#allocation4], 1
    %s408 = scalar_lea.sflag [#allocation4], 1
    %409 = vsyncpa %s408, 1
    %410 = vsyncpa [#allocation7], 1
    %s411 = scalar_lea.sflag [#allocation7], 1
    %412 = vsyncpa %s411, 1
    %413 = vsyncpa [#allocation5], 1
    %s414 = scalar_lea.sflag [#allocation5], 1
    %415 = vsyncpa %s414, 1

// kernel: decoder_forward.18
$region0: #{decoder_forward.18}
  #allocation0 [shape = 'u32[]', space=smem, size = 0x4, offset = 0x4, fixed_abs, tag = 'smem constant byte address 0x4 - core index']
  #allocation1 [shape = 'u32[144,128]{1,0:T(1,128)}', space=vmem, size = 0x12000, scoped, tag = 'internal scratch']
  #allocation2 [shape = 'f32[8,32]{1,0:T(8,128)}', space=vmem, size = 0x1000, scoped, tag = 'scratch operand']
  %s0 = inlined_call_operand.hbm [shape: bf16[2,4,8,8], index: 0, kind: input, shape index: {}]
  %s1 = inlined_call_operand.hbm [shape: bf16[4,8,32], index: 1, kind: input, shape index: {}]
  %s2 = inlined_call_operand.hbm [shape: f32[1,32], index: 2, kind: input, shape index: {}]
  %s3 = inlined_call_operand.hbm [shape: bf16[2,8,32], index: 3, kind: input, shape index: {}]
  %s4 = inlined_call_operand.hbm [shape: f32[1,32], index: 4, kind: input, shape index: {}]
  %s5 = inlined_call_operand.hbm [shape: f32[1,32], index: 5, kind: input, shape index: {}]
  %s6 = inlined_call_operand.hbm [shape: bf16[2,8,32], index: 6, kind: output, shape index: {}]
  %s7 = sld [smem:[#allocation0]]
  $region89: #{decoder_forward.18} parent=0
    _
  %s9 = ssub.s32 1, %s7
  %s10 = scalar_select 0, %s9, %s7
  $region1: #{decoder_forward.18} parent=0
    #allocation3 [shape = 'u8[4096]{0}', space=vmem, size = 0x1000, scoped, tag = 'input window, operand 0']
    #allocation4 [shape = 's32[2]{0}', space=sflag, size = 0x8, scoped, tag = 'scoped memory for decoder_forward.18']
    #allocation5 [shape = 's32[2]{0}', space=sflag, size = 0x8, scoped, tag = 'scoped memory for decoder_forward.18']
    #allocation6 [shape = 'u8[4096]{0}', space=vmem, size = 0x1000, scoped, tag = 'input window, operand 1']
    #allocation7 [shape = 's32[2]{0}', space=sflag, size = 0x8, scoped, tag = 'scoped memory for decoder_forward.18']
    #allocation8 [shape = 'u8[512]{0}', space=vmem, size = 0x400, scoped, tag = 'input window, operand 2, single buffered']
    #allocation9 [shape = 'u8[4096]{0}', space=vmem, size = 0x1000, scoped, tag = 'input window, operand 3']
    #allocation10 [shape = 's32[2]{0}', space=sflag, size = 0x8, scoped, tag = 'scoped memory for decoder_forward.18']
    #allocation11 [shape = 'u8[512]{0}', space=vmem, size = 0x400, scoped, tag = 'input window, operand 4, single buffered']
    #allocation12 [shape = 'u8[512]{0}', space=vmem, size = 0x400, scoped, tag = 'input window, operand 5, single buffered']
    #allocation13 [shape = 's32[1]{0}', space=sflag, size = 0x4, scoped, tag = 'scoped memory for decoder_forward.18']
    #allocation14 [shape = 'u8[4096]{0}', space=vmem, size = 0x1000, scoped, tag = 'output window, operand 0']
    %11 = vsyncpa [#allocation4], 0
    %s12 = scalar_lea.sflag [#allocation4], 1
    %13 = vsyncpa %s12, 0
    %14 = vsyncpa [#allocation7], 0
    %s15 = scalar_lea.sflag [#allocation7], 1
    %16 = vsyncpa %s15, 0
    %17 = vsyncpa [#allocation10], 0
    %s18 = scalar_lea.sflag [#allocation10], 1
    %19 = vsyncpa %s18, 0
    %20 = vsyncpa [#allocation13], 0
    %21 = vsyncpa [#allocation5], 0
    %s22 = scalar_lea.sflag [#allocation5], 1
    %23 = vsyncpa %s22, 0
    loop: start=0, step=1, limit=10
    $region2: #{decoder_forward.18} parent=1 // loop_pre_header
      _
    $region3: #{decoder_forward.18} parent=1 // loop_header
      %s25 = sphi 0, %s29
      %p26 = scmp.ge.s32.totalorder %s25, 10
      %s32 = sphi 0, %s51
      %s33 = sphi 0, %s47
      %s34 = sphi 0, %s43
      %s35 = sphi 0, %s32
      %s36 = sphi 0, %s33
      %s37 = sphi 0, %s34
      %s38 = sphi 0, %s35
      %s39 = sphi 0, %s36
      %s40 = sphi 0, %s37
      %s58 = sphi 0, %s60
      %s61 = sphi 0, %s58
      %s62 = sphi 0, %s61
      %s78 = sphi 0, %s62
      %s84 = sphi 0, %s86
      %s87 = sphi 0, %s84
      %s88 = sphi 0, %s87
      %s104 = sphi 0, %s88
      %s108 = sphi 0, %s108
      %s110 = sphi 0, %s108
      %s111 = sphi 0, %s110
      %s125 = sphi 0, %s111
      %s133 = sphi 0, %s135
      %s136 = sphi 0, %s133
      %s137 = sphi 0, %s136
      %s153 = sphi 0, %s137
      %s157 = sphi 0, %s157
      %s159 = sphi 0, %s157
      %s160 = sphi 0, %s159
      %s174 = sphi 0, %s160
      %s178 = sphi 0, %s178
      %s180 = sphi 0, %s178
      %s181 = sphi 0, %s180
      %s195 = sphi 0, %s181
      %s203 = sphi 0, %s205
      %s206 = sphi 0, %s203
      %s207 = sphi 0, %s206
      %s223 = sphi 0, %s207
    $region4: #{decoder_forward.18} parent=1 // loop_header_branch
      %28 = sbr.rel (%p26) target = $region8
    $region5: #{decoder_forward.18} parent=1 // loop_body
      %s30 = ssub.s32 %s25, 1
      %s31 = ssub.s32 %s25, 2
      %s41 = sadd.s32 1, %s34
      %p42 = scmp.ge.s32.totalorder %s41, 4
      %s43 = scalar_select %p42, 0, %s41
      %s44 = sadd.s32 1, %s33
      %s45 = scalar_select %p42, %s44, %s33
      %p46 = scmp.ge.s32.totalorder %s45, 1
      %s47 = scalar_select %p46, 0, %s45
      %s48 = sadd.s32 1, %s32
      %s49 = scalar_select %p46, %s48, %s32
      %p50 = scmp.ge.s32.totalorder %s49, 2
      %s51 = scalar_select %p50, 0, %s49
      %s52 = ssub.s32 %s32, %s51
      %s53 = ssub.s32 %s34, %s43
      %s54 = sor.u32 %s52, %s53
      %s55 = ssub.s32 %s33, %s47
      %s56 = sor.u32 %s54, %s55
      %p57 = scmp.eq.s32.totalorder %s56, 0
      %s59 = sadd.s32 %s58, 1
      %s60 = scalar_select %p57, %s58, %s59
      %p63 = pneg %p57
      %p64 = scmp.eq.s32.totalorder %s25, 7
      %p65 = por %p63, %p64
      %p66 = scmp.ne.s32.totalorder %s58, %s61
      %p67 = scmp.eq.s32.totalorder %s25, 0
      %p68 = por %p66, %p67
      %p69 = scmp.ne.s32.totalorder %s58, %s61
      %p70 = scmp.eq.s32.totalorder %s30, 7
      %p71 = por %p69, %p70
      %p72 = scmp.ne.s32.totalorder %s61, %s62
      %p73 = scmp.eq.s32.totalorder %s30, 0
      %p74 = por %p72, %p73
      %p75 = scmp.ne.s32.totalorder %s61, %s62
      %p76 = scmp.eq.s32.totalorder %s31, 7
      %p77 = por %p75, %p76
      %p79 = scmp.ne.s32.totalorder %s62, %s78
      %p80 = scmp.eq.s32.totalorder %s31, 0
      %p81 = por %p79, %p80
      %s82 = ssub.s32 %s34, %s43
      %p83 = scmp.eq.s32.totalorder %s82, 0
      %s85 = sadd.s32 %s84, 1
      %s86 = scalar_select %p83, %s84, %s85
      %p89 = pneg %p83
      %p90 = scmp.eq.s32.totalorder %s25, 7
      %p91 = por %p89, %p90
      %p92 = scmp.ne.s32.totalorder %s84, %s87
      %p93 = scmp.eq.s32.totalorder %s25, 0
      %p94 = por %p92, %p93
      %p95 = scmp.ne.s32.totalorder %s84, %s87
      %p96 = scmp.eq.s32.totalorder %s30, 7
      %p97 = por %p95, %p96
      %p98 = scmp.ne.s32.totalorder %s87, %s88
      %p99 = scmp.eq.s32.totalorder %s30, 0
      %p100 = por %p98, %p99
      %p101 = scmp.ne.s32.totalorder %s87, %s88
      %p102 = scmp.eq.s32.totalorder %s31, 7
      %p103 = por %p101, %p102
      %p105 = scmp.ne.s32.totalorder %s88, %s104
      %p106 = scmp.eq.s32.totalorder %s31, 0
      %p107 = por %p105, %p106
      %s109 = sadd.s32 %s108, 1
      %p112 = scmp.eq.s32.totalorder %s25, 7
      %p113 = scmp.ne.s32.totalorder %s108, %s110
      %p114 = scmp.eq.s32.totalorder %s25, 0
      %p115 = por %p113, %p114
      %p116 = scmp.ne.s32.totalorder %s108, %s110
      %p117 = scmp.eq.s32.totalorder %s30, 7
      %p118 = por %p116, %p117
      %p119 = scmp.ne.s32.totalorder %s110, %s111
      %p120 = scmp.eq.s32.totalorder %s30, 0
      %p121 = por %p119, %p120
      %p122 = scmp.ne.s32.totalorder %s110, %s111
      %p123 = scmp.eq.s32.totalorder %s31, 7
      %p124 = por %p122, %p123
      %p126 = scmp.ne.s32.totalorder %s111, %s125
      %p127 = scmp.eq.s32.totalorder %s31, 0
      %p128 = por %p126, %p127
      %s129 = ssub.s32 %s32, %s51
      %s130 = ssub.s32 %s33, %s47
      %s131 = sor.u32 %s129, %s130
      %p132 = scmp.eq.s32.totalorder %s131, 0
      %s134 = sadd.s32 %s133, 1
      %s135 = scalar_select %p132, %s133, %s134
      %p138 = pneg %p132
      %p139 = scmp.eq.s32.totalorder %s25, 7
      %p140 = por %p138, %p139
      %p141 = scmp.ne.s32.totalorder %s133, %s136
      %p142 = scmp.eq.s32.totalorder %s25, 0
      %p143 = por %p141, %p142
      %p144 = scmp.ne.s32.totalorder %s133, %s136
      %p145 = scmp.eq.s32.totalorder %s30, 7
      %p146 = por %p144, %p145
      %p147 = scmp.ne.s32.totalorder %s136, %s137
      %p148 = scmp.eq.s32.totalorder %s30, 0
      %p149 = por %p147, %p148
      %p150 = scmp.ne.s32.totalorder %s136, %s137
      %p151 = scmp.eq.s32.totalorder %s31, 7
      %p152 = por %p150, %p151
      %p154 = scmp.ne.s32.totalorder %s137, %s153
      %p155 = scmp.eq.s32.totalorder %s31, 0
      %p156 = por %p154, %p155
      %s158 = sadd.s32 %s157, 1
      %p161 = scmp.eq.s32.totalorder %s25, 7
      %p162 = scmp.ne.s32.totalorder %s157, %s159
      %p163 = scmp.eq.s32.totalorder %s25, 0
      %p164 = por %p162, %p163
      %p165 = scmp.ne.s32.totalorder %s157, %s159
      %p166 = scmp.eq.s32.totalorder %s30, 7
      %p167 = por %p165, %p166
      %p168 = scmp.ne.s32.totalorder %s159, %s160
      %p169 = scmp.eq.s32.totalorder %s30, 0
      %p170 = por %p168, %p169
      %p171 = scmp.ne.s32.totalorder %s159, %s160
      %p172 = scmp.eq.s32.totalorder %s31, 7
      %p173 = por %p171, %p172
      %p175 = scmp.ne.s32.totalorder %s160, %s174
      %p176 = scmp.eq.s32.totalorder %s31, 0
      %p177 = por %p175, %p176
      %s179 = sadd.s32 %s178, 1
      %p182 = scmp.eq.s32.totalorder %s25, 7
      %p183 = scmp.ne.s32.totalorder %s178, %s180
      %p184 = scmp.eq.s32.totalorder %s25, 0
      %p185 = por %p183, %p184
      %p186 = scmp.ne.s32.totalorder %s178, %s180
      %p187 = scmp.eq.s32.totalorder %s30, 7
      %p188 = por %p186, %p187
      %p189 = scmp.ne.s32.totalorder %s180, %s181
      %p190 = scmp.eq.s32.totalorder %s30, 0
      %p191 = por %p189, %p190
      %p192 = scmp.ne.s32.totalorder %s180, %s181
      %p193 = scmp.eq.s32.totalorder %s31, 7
      %p194 = por %p192, %p193
      %p196 = scmp.ne.s32.totalorder %s181, %s195
      %p197 = scmp.eq.s32.totalorder %s31, 0
      %p198 = por %p196, %p197
      %s199 = ssub.s32 %s32, %s51
      %s200 = ssub.s32 %s33, %s47
      %s201 = sor.u32 %s199, %s200
      %p202 = scmp.eq.s32.totalorder %s201, 0
      %s204 = sadd.s32 %s203, 1
      %s205 = scalar_select %p202, %s203, %s204
      %p208 = pneg %p202
      %p209 = scmp.eq.s32.totalorder %s25, 7
      %p210 = por %p208, %p209
      %p211 = scmp.ne.s32.totalorder %s203, %s206
      %p212 = scmp.eq.s32.totalorder %s25, 0
      %p213 = por %p211, %p212
      %p214 = scmp.ne.s32.totalorder %s203, %s206
      %p215 = scmp.eq.s32.totalorder %s30, 7
      %p216 = por %p214, %p215
      %p217 = scmp.ne.s32.totalorder %s206, %s207
      %p218 = scmp.eq.s32.totalorder %s30, 0
      %p219 = por %p217, %p218
      %p220 = scmp.ne.s32.totalorder %s206, %s207
      %p221 = scmp.eq.s32.totalorder %s31, 7
      %p222 = por %p220, %p221
      %p224 = scmp.ne.s32.totalorder %s207, %s223
      %p225 = scmp.eq.s32.totalorder %s31, 0
      %p226 = por %p224, %p225
      %p227 = scmp.le.s32.totalorder 1, %s25
      %p228 = scmp.lt.s32.totalorder %s25, 9
      %p229 = pnand %p227, %p228
      %p230 = pneg %p229
      // Predicated region
      $region9: #{decoder_forward.18} parent=5 // pred_check
        _
      $region10: #{decoder_forward.18} parent=5 // pred_check_branch
        %232 = sbr.rel (%p229) target = $region12
      $region11: #{decoder_forward.18} parent=5 // pred_region
        %s233 = ssub.s32 %s25, 1
        // Predicated region
        $region13: #{decoder_forward.18} parent=11 // pred_check
          %p234 = pneg %p121
        $region14: #{decoder_forward.18} parent=11 // pred_check_branch
          %236 = sbr.rel (%p234) target = $region16
        $region15: #{decoder_forward.18} parent=11 // pred_region
          %s238 = ssub.s32 16, 16
          %239 = vsyncadd [#allocation7], %s238
          %s241 = sshll.u32 [#allocation8], 4
          %s242 = int_to_ptr.vmem [resolvable:$true] %s241
          %244 = dma.hbm_to_vmem [thread:$0]  %s2, 16, %s242, [#allocation7]
        $region16: #{decoder_forward.18} parent=11 // pred_fallthru
          _
        // Predicated region
        $region17: #{decoder_forward.18} parent=11 // pred_check
          %p245 = pneg %p170
        $region18: #{decoder_forward.18} parent=11 // pred_check_branch
          %247 = sbr.rel (%p245) target = $region20
        $region19: #{decoder_forward.18} parent=11 // pred_region
          %s249 = ssub.s32 16, 16
          %250 = vsyncadd [#allocation10], %s249
          %s252 = sshll.u32 [#allocation11], 4
          %s253 = int_to_ptr.vmem [resolvable:$true] %s252
          %255 = dma.hbm_to_vmem [thread:$0]  %s4, 16, %s253, [#allocation10]
        $region20: #{decoder_forward.18} parent=11 // pred_fallthru
          _
        // Predicated region
        $region21: #{decoder_forward.18} parent=11 // pred_check
          %p256 = pneg %p191
        $region22: #{decoder_forward.18} parent=11 // pred_check_branch
          %258 = sbr.rel (%p256) target = $region24
        $region23: #{decoder_forward.18} parent=11 // pred_region
          %s260 = ssub.s32 16, 16
          %261 = vsyncadd [#allocation13], %s260
          %s263 = sshll.u32 [#allocation12], 4
          %s264 = int_to_ptr.vmem [resolvable:$true] %s263
          %266 = dma.hbm_to_vmem [thread:$0]  %s5, 16, %s264, [#allocation13]
        $region24: #{decoder_forward.18} parent=11 // pred_fallthru
          _
      $region12: #{decoder_forward.18} parent=5 // pred_fallthru
        _
      %p267 = scmp.lt.s32.totalorder %s25, 8
      // Predicated region
      $region25: #{decoder_forward.18} parent=5 // pred_check
        %p268 = pneg %p267
      $region26: #{decoder_forward.18} parent=5 // pred_check_branch
        %270 = sbr.rel (%p268) target = $region28
      $region27: #{decoder_forward.18} parent=5 // pred_region
        // Predicated region
        $region29: #{decoder_forward.18} parent=27 // pred_check
          %p271 = pneg %p68
        $region30: #{decoder_forward.18} parent=27 // pred_check_branch
          %273 = sbr.rel (%p271) target = $region32
        $region31: #{decoder_forward.18} parent=27 // pred_region
          %s274 = sand.u32 %s58, 1
          %s275 = scalar_lea.sflag [#allocation4], %s274
          %s276 = sand.u32 %s58, 1
          %s277 = smul.addr %s276, 4
          %s278 = scalar_lea.vmem [#allocation3], %s277
          %s280 = ssub.s32 64, 64
          %281 = vsyncadd %s275, %s280
          %s282 = sadd.s32 %s33, %s34
          %s283 = smul.addr %s32, 4
          %s284 = sadd.s32 %s282, %s283
          %s285 = smul.addr %s284, 64
          %s286 = scalar_lea.hbm %s0, %s285
          %s288 = sshll.u32 %s278, 4
          %s289 = int_to_ptr.vmem [resolvable:$true] %s288
          %291 = dma.hbm_to_vmem [thread:$0]  %s286, 64, %s289, %s275
        $region32: #{decoder_forward.18} parent=27 // pred_fallthru
          _
        // Predicated region
        $region33: #{decoder_forward.18} parent=27 // pred_check
          %p292 = pneg %p94
        $region34: #{decoder_forward.18} parent=27 // pred_check_branch
          %294 = sbr.rel (%p292) target = $region36
        $region35: #{decoder_forward.18} parent=27 // pred_region
          %s295 = sand.u32 %s25, 1
          %s296 = scalar_lea.sflag [#allocation7], %s295
          %s297 = sand.u32 %s84, 1
          %s298 = smul.addr %s297, 4
          %s299 = scalar_lea.vmem [#allocation6], %s298
          %s301 = ssub.s32 64, 64
          %302 = vsyncadd %s296, %s301
          %s303 = smul.addr %s34, 64
          %s304 = scalar_lea.hbm %s1, %s303
          %s306 = sshll.u32 %s299, 4
          %s307 = int_to_ptr.vmem [resolvable:$true] %s306
          %309 = dma.hbm_to_vmem [thread:$0]  %s304, 64, %s307, %s296
        $region36: #{decoder_forward.18} parent=27 // pred_fallthru
          _
        // Predicated region
        $region37: #{decoder_forward.18} parent=27 // pred_check
          %p310 = pneg %p143
        $region38: #{decoder_forward.18} parent=27 // pred_check_branch
          %312 = sbr.rel (%p310) target = $region40
        $region39: #{decoder_forward.18} parent=27 // pred_region
          %s313 = sand.u32 %s25, 1
          %s314 = scalar_lea.sflag [#allocation10], %s313
          %s315 = sand.u32 %s133, 1
          %s316 = smul.addr %s315, 4
          %s317 = scalar_lea.vmem [#allocation9], %s316
          %s319 = ssub.s32 64, 64
          %320 = vsyncadd %s314, %s319
          %s321 = sadd.s32 %s33, %s32
          %s322 = smul.addr %s321, 64
          %s323 = scalar_lea.hbm %s3, %s322
          %s325 = sshll.u32 %s317, 4
          %s326 = int_to_ptr.vmem [resolvable:$true] %s325
          %328 = dma.hbm_to_vmem [thread:$0]  %s323, 64, %s326, %s314
        $region40: #{decoder_forward.18} parent=27 // pred_fallthru
          _
      $region28: #{decoder_forward.18} parent=5 // pred_fallthru
        _
      %p329 = scmp.le.s32.totalorder 1, %s25
      %p330 = scmp.lt.s32.totalorder %s25, 9
      %p331 = pnand %p329, %p330
      %p332 = pneg %p331
      // Predicated region
      $region41: #{decoder_forward.18} parent=5 // pred_check
        _
      $region42: #{decoder_forward.18} parent=5 // pred_check_branch
        %334 = sbr.rel (%p331) target = $region44
      $region43: #{decoder_forward.18} parent=5 // pred_region
        %s335 = ssub.s32 %s25, 1
        %s336 = sand.u32 %s61, 1
        %s337 = scalar_lea.sflag [#allocation4], %s336
        %s338 = sand.u32 %s61, 1
        %s339 = smul.addr %s338, 4
        %s340 = scalar_lea.vmem [#allocation3], %s339
        // Predicated region
        $region45: #{decoder_forward.18} parent=43 // pred_check
          %p341 = pneg %p74
        $region46: #{decoder_forward.18} parent=43 // pred_check_branch
          %343 = sbr.rel (%p341) target = $region48
        $region47: #{decoder_forward.18} parent=43 // pred_region
          %344 = dma.done %s337, 64
        $region48: #{decoder_forward.18} parent=43 // pred_fallthru
          _
        %s345 = sand.u32 %s30, 1
        %s346 = scalar_lea.sflag [#allocation7], %s345
        %s347 = sand.u32 %s87, 1
        %s348 = smul.addr %s347, 4
        %s349 = scalar_lea.vmem [#allocation6], %s348
        // Predicated region
        $region49: #{decoder_forward.18} parent=43 // pred_check
          %p350 = pneg %p100
        $region50: #{decoder_forward.18} parent=43 // pred_check_branch
          %352 = sbr.rel (%p350) target = $region52
        $region51: #{decoder_forward.18} parent=43 // pred_region
          %353 = dma.done %s346, 64
        $region52: #{decoder_forward.18} parent=43 // pred_fallthru
          _
        // Predicated region
        $region53: #{decoder_forward.18} parent=43 // pred_check
          %p354 = pneg %p121
        $region54: #{decoder_forward.18} parent=43 // pred_check_branch
          %356 = sbr.rel (%p354) target = $region56
        $region55: #{decoder_forward.18} parent=43 // pred_region
          %357 = dma.done [#allocation7], 16
        $region56: #{decoder_forward.18} parent=43 // pred_fallthru
          _
        %s358 = sand.u32 %s30, 1
        %s359 = scalar_lea.sflag [#allocation10], %s358
        %s360 = sand.u32 %s136, 1
        %s361 = smul.addr %s360, 4
        %s362 = scalar_lea.vmem [#allocation9], %s361
        // Predicated region
        $region57: #{decoder_forward.18} parent=43 // pred_check
          %p363 = pneg %p149
        $region58: #{decoder_forward.18} parent=43 // pred_check_branch
          %365 = sbr.rel (%p363) target = $region60
        $region59: #{decoder_forward.18} parent=43 // pred_region
          %366 = dma.done %s359, 64
        $region60: #{decoder_forward.18} parent=43 // pred_fallthru
          _
        // Predicated region
        $region61: #{decoder_forward.18} parent=43 // pred_check
          %p367 = pneg %p170
        $region62: #{decoder_forward.18} parent=43 // pred_check_branch
          %369 = sbr.rel (%p367) target = $region64
        $region63: #{decoder_forward.18} parent=43 // pred_region
          %370 = dma.done [#allocation10], 16
        $region64: #{decoder_forward.18} parent=43 // pred_fallthru
          _
        // Predicated region
        $region65: #{decoder_forward.18} parent=43 // pred_check
          %p371 = pneg %p191
        $region66: #{decoder_forward.18} parent=43 // pred_check_branch
          %373 = sbr.rel (%p371) target = $region68
        $region67: #{decoder_forward.18} parent=43 // pred_region
          %374 = dma.done [#allocation13], 16
        $region68: #{decoder_forward.18} parent=43 // pred_fallthru
          _
        %s375 = sand.u32 %s61, 1
        %s376 = scalar_lea.sflag [#allocation4], %s375
        %s377 = sand.u32 %s61, 1
        %s378 = smul.addr %s377, 4
        %s379 = scalar_lea.vmem [#allocation3], %s378
        %p380 = pneg %p74
        %p381 = pneg %p71
        %s382 = sand.u32 %s30, 1
        %s383 = scalar_lea.sflag [#allocation7], %s382
        %s384 = sand.u32 %s87, 1
        %s385 = smul.addr %s384, 4
        %s386 = scalar_lea.vmem [#allocation6], %s385
        %p387 = pneg %p100
        %p388 = pneg %p97
        %p389 = pneg %p121
        %p390 = pneg %p118
        %s391 = sand.u32 %s30, 1
        %s392 = scalar_lea.sflag [#allocation10], %s391
        %s393 = sand.u32 %s136, 1
        %s394 = smul.addr %s393, 4
        %s395 = scalar_lea.vmem [#allocation9], %s394
        %p396 = pneg %p149
        %p397 = pneg %p146
        %p398 = pneg %p170
        %p399 = pneg %p167
        %p400 = pneg %p191
        %p401 = pneg %p188
        %p402 = pneg %p219
        %p403 = pneg %p216
        %s404 = sand.u32 %s206, 1
        %s405 = scalar_lea.sflag [#allocation5], %s404
        %s406 = sand.u32 %s206, 1
        %s407 = smul.addr %s406, 4
        %s408 = scalar_lea.vmem [#allocation14], %s407
        %p410 = scmp.eq.s32.totalorder %s37, 0
        // Predicated region
        $region69: #{decoder_forward.18} parent=43 // pred_check
          %p411 = pneg %p410
        $region70: #{decoder_forward.18} parent=43 // pred_check_branch
          %413 = sbr.rel (%p411) target = $region72
        $region71: #{decoder_forward.18} parent=43 // pred_region
          %vm414 = vcmask 261120
          %415 = vst.msk [vmem:[#allocation2] sm:$0xff] %vm414, 0.0
        $region72: #{decoder_forward.18} parent=43 // pred_fallthru
          _
        %v416 = vld [vmem:[#allocation2] sm:$0xff]
        %v417 = vld [vmem:[%s340] sm:$0xf]
        %v418 = vld [vmem:[%s349] sm:$0xf]
        %vm419 = vcmask 64512
        %v421 = vsel %vm419, %v417, 0
        %vm423 = vcmask 1043456
        %v425 = vsel %vm423, %v418, 0
        %427 = vmatprep.subr.bf16.mxu0 0
        %428 = vmatpush1.bf16.msra.mxu0 %v425
        %429 = vmatprep.subr.bf16.mxu0 0
        %430 = vmatpush1.bf16.msra.mxu0 0
        %431 = vmatprep.subr.bf16.mxu0 0
        %432 = vmatpush1.bf16.msra.mxu0 0
        %433 = vmatprep.subr.bf16.mxu0 0
        %434 = vmatpush1.bf16.msra.mxu0 0
        %435 = vmatprep.subr.bf16.mxu0 0
        %436 = vmatpush1.bf16.msra.mxu0 0
        %437 = vmatprep.subr.bf16.mxu0 0
        %438 = vmatpush1.bf16.msra.mxu0 0
        %439 = vmatprep.subr.bf16.mxu0 0
        %440 = vmatpush1.bf16.msra.mxu0 0
        %441 = vmatprep.subr.bf16.mxu0 0
        %442 = vmatpush1.bf16.msra.mxu0 0
        %443 = vmatprep.subr.bf16.mxu0 0
        %444 = vmatpush1.bf16.msra.mxu0 0
        %445 = vmatprep.subr.bf16.mxu0 0
        %446 = vmatpush1.bf16.msra.mxu0 0
        %447 = vmatprep.subr.bf16.mxu0 0
        %448 = vmatpush1.bf16.msra.mxu0 0
        %449 = vmatprep.subr.bf16.mxu0 0
        %450 = vmatpush1.bf16.msra.mxu0 0
        %451 = vmatprep.subr.bf16.mxu0 0
        %452 = vmatpush1.bf16.msra.mxu0 0
        %453 = vmatprep.subr.bf16.mxu0 0
        %454 = vmatpush1.bf16.msra.mxu0 0
        %455 = vmatprep.subr.bf16.mxu0 0
        %456 = vmatpush1.bf16.msra.mxu0 0
        %457 = vmatprep.subr.bf16.mxu0 0
        %458 = vmatpush1.bf16.msra.mxu0 0
        %459 = vmatprep.mubr.bf16.mxu0 0
        %460 = vmatmul.mubr.bf16.gmra.mrb[0].mxu0 %v421
        %v461 = vpop.f32.mrb[0].mxu0
        %v462 = vadd.f32 0.0, %v461
        %v463 = vpop.f32.mrb[0].mxu0
        %v464 = vpop.f32.mrb[0].mxu0
        %v465 = vpop.f32.mrb[0].mxu0
        %466 = vdwg.mxu0
        %v467 = vadd.f32 %v416, %v462
        %vm468 = vcmask 261120
        %469 = vst.msk [vmem:[#allocation2] sm:$0xff] %vm468, %v467
        %p470 = scmp.eq.s32.totalorder %s37, 3
        // Predicated region
        $region73: #{decoder_forward.18} parent=43 // pred_check
          %p471 = pneg %p470
        $region74: #{decoder_forward.18} parent=43 // pred_check_branch
          %473 = sbr.rel (%p471) target = $region76
        $region75: #{decoder_forward.18} parent=43 // pred_region
          %v474 = vld [vmem:[#allocation2] sm:$0xff]
          %v475 = vld [vmem:[#allocation8] sm:$0x1]
          %v477 = vlaneseq
          %v478 = vshrl.u32 %v477, 7
          %v479 = vsub.s32 0, %v478
          %v480 = vrot.slane %v475, %v479
          %v482 = vadd.f32 %v474, %v480
          %v483 = vld [vmem:[%s362] sm:$0xf]
          %v484 = vunpack.c.l.bf16 %v483
          %v485 = vadd.f32 %v482, %v484
          %v486 = vsel %vm468, %v485, 0.0
          %487 = vadd.xlane.f32.xlu0 %v486
          %v488 = vpop.xlane.xlu0 %487
          %v489 = vrcp.pop 32.0
          %v490 = vmul.f32 %v488, %v489
          %v491 = vsub.f32 %v485, %v490
          %v492 = vmul.f32 %v491, %v491
          %v493 = vsel %vm468, %v492, 0.0
          %494 = vadd.xlane.f32.xlu0 %v493
          %v495 = vpop.xlane.xlu0 %494
          %v496 = vmul.f32 %v495, %v489
          %v497 = vadd.f32 %v496, 1e-05
          %v498 = vrsqrt.pop %v497
          %v499 = vmul.f32 %v491, %v498
          %v500 = vld [vmem:[#allocation11] sm:$0x1]
          %v502 = vlaneseq
          %v503 = vshrl.u32 %v502, 7
          %v504 = vsub.s32 0, %v503
          %v505 = vrot.slane %v500, %v504
          %v507 = vmul.f32 %v499, %v505
          %v508 = vld [vmem:[#allocation12] sm:$0x1]
          %v510 = vlaneseq
          %v511 = vshrl.u32 %v510, 7
          %v512 = vsub.s32 0, %v511
          %v513 = vrot.slane %v508, %v512
          %v515 = vadd.f32 %v507, %v513
          %v516 = vpack.c.bf16 %v515, %v515
          %vm517 = vcmask 257024
          %518 = vst.msk [vmem:[%s408] sm:$0xf] %vm517, %v516
        $region76: #{decoder_forward.18} parent=43 // pred_fallthru
          _
        %s519 = sand.u32 %s206, 1
        %s520 = scalar_lea.sflag [#allocation5], %s519
        %s521 = sand.u32 %s206, 1
        %s522 = smul.addr %s521, 4
        %s523 = scalar_lea.vmem [#allocation14], %s522
        // Predicated region
        $region77: #{decoder_forward.18} parent=43 // pred_check
          %p524 = pneg %p216
        $region78: #{decoder_forward.18} parent=43 // pred_check_branch
          %526 = sbr.rel (%p524) target = $region80
        $region79: #{decoder_forward.18} parent=43 // pred_region
          %s528 = ssub.s32 64, 64
          %529 = vsyncadd %s520, %s528
          %s530 = sadd.s32 %s36, %s35
          %s531 = smul.addr %s530, 64
          %s532 = scalar_lea.hbm %s6, %s531
          %s534 = sshll.u32 %s523, 4
          %s535 = int_to_ptr.vmem [resolvable:$true] %s534
          %537 = dma.vmem_to_hbm [thread:$0]  %s535, 64, %s532, %s520
        $region80: #{decoder_forward.18} parent=43 // pred_fallthru
          _
      $region44: #{decoder_forward.18} parent=5 // pred_fallthru
        _
      %p538 = scmp.le.s32.totalorder 2, %s25
      // Predicated region
      $region81: #{decoder_forward.18} parent=5 // pred_check
        %p539 = pneg %p538
      $region82: #{decoder_forward.18} parent=5 // pred_check_branch
        %541 = sbr.rel (%p539) target = $region84
      $region83: #{decoder_forward.18} parent=5 // pred_region
        %s542 = ssub.s32 %s25, 2
        // Predicated region
        $region85: #{decoder_forward.18} parent=83 // pred_check
          %p543 = pneg %p222
        $region86: #{decoder_forward.18} parent=83 // pred_check_branch
          %545 = sbr.rel (%p543) target = $region88
        $region87: #{decoder_forward.18} parent=83 // pred_region
          %s546 = sand.u32 %s207, 1
          %s547 = scalar_lea.sflag [#allocation5], %s546
          %s548 = sand.u32 %s207, 1
          %s549 = smul.addr %s548, 4
          %s550 = scalar_lea.vmem [#allocation14], %s549
          %551 = dma.done %s547, 64
        $region88: #{decoder_forward.18} parent=83 // pred_fallthru
          _
      $region84: #{decoder_forward.18} parent=5 // pred_fallthru
        _
    $region6: #{decoder_forward.18} parent=1 // loop_footer
      %s29 = sadd.s32 1, %s25
    $region7: #{decoder_forward.18} parent=1 // loop_footer_branch
      %24 = sbr.rel target = $region3
    $region8: #{decoder_forward.18} parent=1 // loop_exit
      _
    %552 = vsyncpa [#allocation4], 1
    %s553 = scalar_lea.sflag [#allocation4], 1
    %554 = vsyncpa %s553, 1
    %555 = vsyncpa [#allocation7], 1
    %s556 = scalar_lea.sflag [#allocation7], 1
    %557 = vsyncpa %s556, 1
    %558 = vsyncpa [#allocation10], 1
    %s559 = scalar_lea.sflag [#allocation10], 1
    %560 = vsyncpa %s559, 1
    %561 = vsyncpa [#allocation13], 1
    %562 = vsyncpa [#allocation5], 1
    %s563 = scalar_lea.sflag [#allocation5], 1
    %564 = vsyncpa %s563, 1

// kernel: decoder_forward.19
$region0: #{decoder_forward.19}
  #allocation0 [shape = 'u32[]', space=smem, size = 0x4, offset = 0x4, fixed_abs, tag = 'smem constant byte address 0x4 - core index']
  #allocation1 [shape = 'u32[144,128]{1,0:T(1,128)}', space=vmem, size = 0x12000, scoped, tag = 'internal scratch']
  #allocation2 [shape = 'f32[8,8]{1,0:T(8,128)}', space=vmem, size = 0x1000, scoped, tag = 'scratch operand']
  %s0 = inlined_call_operand.hbm [shape: bf16[2,8,32], index: 0, kind: input, shape index: {}]
  %s1 = inlined_call_operand.hbm [shape: bf16[4,32,8], index: 1, kind: input, shape index: {}]
  %s2 = inlined_call_operand.hbm [shape: f32[4,1,8], index: 2, kind: input, shape index: {}]
  %s3 = inlined_call_operand.hbm [shape: bf16[2,4,8,8], index: 3, kind: output, shape index: {}]
  %s4 = sld [smem:[#allocation0]]
  $region65: #{decoder_forward.19} parent=0
    _
  %s6 = ssub.s32 1, %s4
  %s7 = scalar_select 0, %s6, %s4
  $region1: #{decoder_forward.19} parent=0
    #allocation3 [shape = 'u8[4096]{0}', space=vmem, size = 0x1000, scoped, tag = 'input window, operand 0']
    #allocation4 [shape = 's32[2]{0}', space=sflag, size = 0x8, scoped, tag = 'scoped memory for decoder_forward.19']
    #allocation5 [shape = 's32[2]{0}', space=sflag, size = 0x8, scoped, tag = 'scoped memory for decoder_forward.19']
    #allocation6 [shape = 'u8[16384]{0}', space=vmem, size = 0x4000, scoped, tag = 'input window, operand 1']
    #allocation7 [shape = 's32[2]{0}', space=sflag, size = 0x8, scoped, tag = 'scoped memory for decoder_forward.19']
    #allocation8 [shape = 'u8[1024]{0}', space=vmem, size = 0x400, scoped, tag = 'input window, operand 2']
    #allocation9 [shape = 'u8[4096]{0}', space=vmem, size = 0x1000, scoped, tag = 'output window, operand 0']
    %8 = vsyncpa [#allocation4], 0
    %s9 = scalar_lea.sflag [#allocation4], 1
    %10 = vsyncpa %s9, 0
    %11 = vsyncpa [#allocation7], 0
    %s12 = scalar_lea.sflag [#allocation7], 1
    %13 = vsyncpa %s12, 0
    %14 = vsyncpa [#allocation5], 0
    %s15 = scalar_lea.sflag [#allocation5], 1
    %16 = vsyncpa %s15, 0
    loop: start=0, step=1, limit=10
    $region2: #{decoder_forward.19} parent=1 // loop_pre_header
      _
    $region3: #{decoder_forward.19} parent=1 // loop_header
      %s18 = sphi 0, %s22
      %p19 = scmp.ge.s32.totalorder %s18, 10
      %s25 = sphi 0, %s44
      %s26 = sphi 0, %s40
      %s27 = sphi 0, %s36
      %s28 = sphi 0, %s25
      %s29 = sphi 0, %s26
      %s30 = sphi 0, %s27
      %s31 = sphi 0, %s28
      %s32 = sphi 0, %s29
      %s33 = sphi 0, %s30
      %s49 = sphi 0, %s51
      %s52 = sphi 0, %s49
      %s53 = sphi 0, %s52
      %s69 = sphi 0, %s53
      %s77 = sphi 0, %s79
      %s80 = sphi 0, %s77
      %s81 = sphi 0, %s80
      %s97 = sphi 0, %s81
      %s103 = sphi 0, %s105
      %s106 = sphi 0, %s103
      %s107 = sphi 0, %s106
      %s123 = sphi 0, %s107
      %s131 = sphi 0, %s133
      %s134 = sphi 0, %s131
      %s135 = sphi 0, %s134
      %s151 = sphi 0, %s135
    $region4: #{decoder_forward.19} parent=1 // loop_header_branch
      %21 = sbr.rel (%p19) target = $region8
    $region5: #{decoder_forward.19} parent=1 // loop_body
      %s23 = ssub.s32 %s18, 1
      %s24 = ssub.s32 %s18, 2
      %s34 = sadd.s32 1, %s27
      %p35 = scmp.ge.s32.totalorder %s34, 1
      %s36 = scalar_select %p35, 0, %s34
      %s37 = sadd.s32 1, %s26
      %s38 = scalar_select %p35, %s37, %s26
      %p39 = scmp.ge.s32.totalorder %s38, 4
      %s40 = scalar_select %p39, 0, %s38
      %s41 = sadd.s32 1, %s25
      %s42 = scalar_select %p39, %s41, %s25
      %p43 = scmp.ge.s32.totalorder %s42, 2
      %s44 = scalar_select %p43, 0, %s42
      %s45 = ssub.s32 %s25, %s44
      %s46 = ssub.s32 %s27, %s36
      %s47 = sor.u32 %s45, %s46
      %p48 = scmp.eq.s32.totalorder %s47, 0
      %s50 = sadd.s32 %s49, 1
      %s51 = scalar_select %p48, %s49, %s50
      %p54 = pneg %p48
      %p55 = scmp.eq.s32.totalorder %s18, 7
      %p56 = por %p54, %p55
      %p57 = scmp.ne.s32.totalorder %s49, %s52
      %p58 = scmp.eq.s32.totalorder %s18, 0
      %p59 = por %p57, %p58
      %p60 = scmp.ne.s32.totalorder %s49, %s52
      %p61 = scmp.eq.s32.totalorder %s23, 7
      %p62 = por %p60, %p61
      %p63 = scmp.ne.s32.totalorder %s52, %s53
      %p64 = scmp.eq.s32.totalorder %s23, 0
      %p65 = por %p63, %p64
      %p66 = scmp.ne.s32.totalorder %s52, %s53
      %p67 = scmp.eq.s32.totalorder %s24, 7
      %p68 = por %p66, %p67
      %p70 = scmp.ne.s32.totalorder %s53, %s69
      %p71 = scmp.eq.s32.totalorder %s24, 0
      %p72 = por %p70, %p71
      %s73 = ssub.s32 %s26, %s40
      %s74 = ssub.s32 %s27, %s36
      %s75 = sor.u32 %s73, %s74
      %p76 = scmp.eq.s32.totalorder %s75, 0
      %s78 = sadd.s32 %s77, 1
      %s79 = scalar_select %p76, %s77, %s78
      %p82 = pneg %p76
      %p83 = scmp.eq.s32.totalorder %s18, 7
      %p84 = por %p82, %p83
      %p85 = scmp.ne.s32.totalorder %s77, %s80
      %p86 = scmp.eq.s32.totalorder %s18, 0
      %p87 = por %p85, %p86
      %p88 = scmp.ne.s32.totalorder %s77, %s80
      %p89 = scmp.eq.s32.totalorder %s23, 7
      %p90 = por %p88, %p89
      %p91 = scmp.ne.s32.totalorder %s80, %s81
      %p92 = scmp.eq.s32.totalorder %s23, 0
      %p93 = por %p91, %p92
      %p94 = scmp.ne.s32.totalorder %s80, %s81
      %p95 = scmp.eq.s32.totalorder %s24, 7
      %p96 = por %p94, %p95
      %p98 = scmp.ne.s32.totalorder %s81, %s97
      %p99 = scmp.eq.s32.totalorder %s24, 0
      %p100 = por %p98, %p99
      %s101 = ssub.s32 %s26, %s40
      %p102 = scmp.eq.s32.totalorder %s101, 0
      %s104 = sadd.s32 %s103, 1
      %s105 = scalar_select %p102, %s103, %s104
      %p108 = pneg %p102
      %p109 = scmp.eq.s32.totalorder %s18, 7
      %p110 = por %p108, %p109
      %p111 = scmp.ne.s32.totalorder %s103, %s106
      %p112 = scmp.eq.s32.totalorder %s18, 0
      %p113 = por %p111, %p112
      %p114 = scmp.ne.s32.totalorder %s103, %s106
      %p115 = scmp.eq.s32.totalorder %s23, 7
      %p116 = por %p114, %p115
      %p117 = scmp.ne.s32.totalorder %s106, %s107
      %p118 = scmp.eq.s32.totalorder %s23, 0
      %p119 = por %p117, %p118
      %p120 = scmp.ne.s32.totalorder %s106, %s107
      %p121 = scmp.eq.s32.totalorder %s24, 7
      %p122 = por %p120, %p121
      %p124 = scmp.ne.s32.totalorder %s107, %s123
      %p125 = scmp.eq.s32.totalorder %s24, 0
      %p126 = por %p124, %p125
      %s127 = ssub.s32 %s25, %s44
      %s128 = ssub.s32 %s26, %s40
      %s129 = sor.u32 %s127, %s128
      %p130 = scmp.eq.s32.totalorder %s129, 0
      %s132 = sadd.s32 %s131, 1
      %s133 = scalar_select %p130, %s131, %s132
      %p136 = pneg %p130
      %p137 = scmp.eq.s32.totalorder %s18, 7
      %p138 = por %p136, %p137
      %p139 = scmp.ne.s32.totalorder %s131, %s134
      %p140 = scmp.eq.s32.totalorder %s18, 0
      %p141 = por %p139, %p140
      %p142 = scmp.ne.s32.totalorder %s131, %s134
      %p143 = scmp.eq.s32.totalorder %s23, 7
      %p144 = por %p142, %p143
      %p145 = scmp.ne.s32.totalorder %s134, %s135
      %p146 = scmp.eq.s32.totalorder %s23, 0
      %p147 = por %p145, %p146
      %p148 = scmp.ne.s32.totalorder %s134, %s135
      %p149 = scmp.eq.s32.totalorder %s24, 7
      %p150 = por %p148, %p149
      %p152 = scmp.ne.s32.totalorder %s135, %s151
      %p153 = scmp.eq.s32.totalorder %s24, 0
      %p154 = por %p152, %p153
      %p155 = scmp.le.s32.totalorder 1, %s18
      %p156 = scmp.lt.s32.totalorder %s18, 9
      %p157 = pnand %p155, %p156
      %p158 = pneg %p157
      // Predicated region
      $region9: #{decoder_forward.19} parent=5 // pred_check
        _
      $region10: #{decoder_forward.19} parent=5 // pred_check_branch
        %160 = sbr.rel (%p157) target = $region12
      $region11: #{decoder_forward.19} parent=5 // pred_region
        %s161 = ssub.s32 %s18, 1
      $region12: #{decoder_forward.19} parent=5 // pred_fallthru
        _
      %p162 = scmp.lt.s32.totalorder %s18, 8
      // Predicated region
      $region13: #{decoder_forward.19} parent=5 // pred_check
        %p163 = pneg %p162
      $region14: #{decoder_forward.19} parent=5 // pred_check_branch
        %165 = sbr.rel (%p163) target = $region16
      $region15: #{decoder_forward.19} parent=5 // pred_region
        // Predicated region
        $region17: #{decoder_forward.19} parent=15 // pred_check
          %p166 = pneg %p59
        $region18: #{decoder_forward.19} parent=15 // pred_check_branch
          %168 = sbr.rel (%p166) target = $region20
        $region19: #{decoder_forward.19} parent=15 // pred_region
          %s169 = sand.u32 %s49, 1
          %s170 = scalar_lea.sflag [#allocation4], %s169
          %s171 = sand.u32 %s49, 1
          %s172 = smul.addr %s171, 4
          %s173 = scalar_lea.vmem [#allocation3], %s172
          %s175 = ssub.s32 64, 64
          %176 = vsyncadd %s170, %s175
          %s177 = sadd.s32 %s27, %s25
          %s178 = smul.addr %s177, 64
          %s179 = scalar_lea.hbm %s0, %s178
          %s181 = sshll.u32 %s173, 4
          %s182 = int_to_ptr.vmem [resolvable:$true] %s181
          %184 = dma.hbm_to_vmem [thread:$0]  %s179, 64, %s182, %s170
        $region20: #{decoder_forward.19} parent=15 // pred_fallthru
          _
        // Predicated region
        $region21: #{decoder_forward.19} parent=15 // pred_check
          %p185 = pneg %p87
        $region22: #{decoder_forward.19} parent=15 // pred_check_branch
          %187 = sbr.rel (%p185) target = $region24
        $region23: #{decoder_forward.19} parent=15 // pred_region
          %s188 = sand.u32 %s18, 1
          %s189 = scalar_lea.sflag [#allocation7], %s188
          %s190 = sand.u32 %s77, 1
          %s191 = smul.addr %s190, 16
          %s192 = scalar_lea.vmem [#allocation6], %s191
          %s193 = smul.u32 4, %s27
          %s195 = ssub.s32 256, 256
          %196 = vsyncadd %s189, %s195
          %s197 = smul.addr %s26, 4
          %s198 = sadd.s32 %s193, %s197
          %s199 = smul.addr %s198, 64
          %s200 = scalar_lea.hbm %s1, %s199
          %s201 = sshll.u32 %s192, 4
          %s202 = int_to_ptr.vmem [resolvable:$true] %s201
          %207 = dma.hbm_to_vmem [thread:$0]  %s200, 256, %s202, %s189, 64, 64, 4
        $region24: #{decoder_forward.19} parent=15 // pred_fallthru
          _
        // Predicated region
        $region25: #{decoder_forward.19} parent=15 // pred_check
          %p208 = pneg %p113
        $region26: #{decoder_forward.19} parent=15 // pred_check_branch
          %210 = sbr.rel (%p208) target = $region28
        $region27: #{decoder_forward.19} parent=15 // pred_region
          %s211 = sand.u32 %s18, 1
          %s212 = scalar_lea.sflag [#allocation7], %s211
          %s213 = sand.u32 %s103, 1
          %s214 = scalar_lea.vmem [#allocation8], %s213
          %s216 = ssub.s32 16, 16
          %217 = vsyncadd %s212, %s216
          %s218 = smul.addr %s26, 16
          %s219 = scalar_lea.hbm %s2, %s218
          %s221 = sshll.u32 %s214, 4
          %s222 = int_to_ptr.vmem [resolvable:$true] %s221
          %224 = dma.hbm_to_vmem [thread:$0]  %s219, 16, %s222, %s212
        $region28: #{decoder_forward.19} parent=15 // pred_fallthru
          _
      $region16: #{decoder_forward.19} parent=5 // pred_fallthru
        _
      %p225 = scmp.le.s32.totalorder 1, %s18
      %p226 = scmp.lt.s32.totalorder %s18, 9
      %p227 = pnand %p225, %p226
      %p228 = pneg %p227
      // Predicated region
      $region29: #{decoder_forward.19} parent=5 // pred_check
        _
      $region30: #{decoder_forward.19} parent=5 // pred_check_branch
        %230 = sbr.rel (%p227) target = $region32
      $region31: #{decoder_forward.19} parent=5 // pred_region
        %s231 = ssub.s32 %s18, 1
        %s232 = sand.u32 %s52, 1
        %s233 = scalar_lea.sflag [#allocation4], %s232
        %s234 = sand.u32 %s52, 1
        %s235 = smul.addr %s234, 4
        %s236 = scalar_lea.vmem [#allocation3], %s235
        // Predicated region
        $region33: #{decoder_forward.19} parent=31 // pred_check
          %p237 = pneg %p65
        $region34: #{decoder_forward.19} parent=31 // pred_check_branch
          %239 = sbr.rel (%p237) target = $region36
        $region35: #{decoder_forward.19} parent=31 // pred_region
          %240 = dma.done %s233, 64
        $region36: #{decoder_forward.19} parent=31 // pred_fallthru
          _
        %s241 = sand.u32 %s23, 1
        %s242 = scalar_lea.sflag [#allocation7], %s241
        %s243 = sand.u32 %s80, 1
        %s244 = smul.addr %s243, 16
        %s245 = scalar_lea.vmem [#allocation6], %s244
        // Predicated region
        $region37: #{decoder_forward.19} parent=31 // pred_check
          %p246 = pneg %p93
        $region38: #{decoder_forward.19} parent=31 // pred_check_branch
          %248 = sbr.rel (%p246) target = $region40
        $region39: #{decoder_forward.19} parent=31 // pred_region
          %249 = dma.done %s242, 256
        $region40: #{decoder_forward.19} parent=31 // pred_fallthru
          _
        %s250 = sand.u32 %s23, 1
        %s251 = scalar_lea.sflag [#allocation7], %s250
        %s252 = sand.u32 %s106, 1
        %s253 = scalar_lea.vmem [#allocation8], %s252
        // Predicated region
        $region41: #{decoder_forward.19} parent=31 // pred_check
          %p254 = pneg %p119
        $region42: #{decoder_forward.19} parent=31 // pred_check_branch
          %256 = sbr.rel (%p254) target = $region44
        $region43: #{decoder_forward.19} parent=31 // pred_region
          %257 = dma.done %s251, 16
        $region44: #{decoder_forward.19} parent=31 // pred_fallthru
          _
        %s258 = sand.u32 %s52, 1
        %s259 = scalar_lea.sflag [#allocation4], %s258
        %s260 = sand.u32 %s52, 1
        %s261 = smul.addr %s260, 4
        %s262 = scalar_lea.vmem [#allocation3], %s261
        %p263 = pneg %p65
        %p264 = pneg %p62
        %s265 = sand.u32 %s23, 1
        %s266 = scalar_lea.sflag [#allocation7], %s265
        %s267 = sand.u32 %s80, 1
        %s268 = smul.addr %s267, 16
        %s269 = scalar_lea.vmem [#allocation6], %s268
        %p270 = pneg %p93
        %p271 = pneg %p90
        %s272 = sand.u32 %s23, 1
        %s273 = scalar_lea.sflag [#allocation7], %s272
        %s274 = sand.u32 %s106, 1
        %s275 = scalar_lea.vmem [#allocation8], %s274
        %p276 = pneg %p119
        %p277 = pneg %p116
        %p278 = pneg %p147
        %p279 = pneg %p144
        %s280 = sand.u32 %s134, 1
        %s281 = scalar_lea.sflag [#allocation5], %s280
        %s282 = sand.u32 %s134, 1
        %s283 = smul.addr %s282, 4
        %s284 = scalar_lea.vmem [#allocation9], %s283
        %s285 = smul.u32 4, %s30
        %p287 = scmp.eq.s32.totalorder %s30, 0
        // Predicated region
        $region45: #{decoder_forward.19} parent=31 // pred_check
          %p288 = pneg %p287
        $region46: #{decoder_forward.19} parent=31 // pred_check_branch
          %290 = sbr.rel (%p288) target = $region48
        $region47: #{decoder_forward.19} parent=31 // pred_region
          %vm291 = vcmask 64512
          %292 = vst.msk [vmem:[#allocation2] sm:$0xff] %vm291, 0.0
        $region48: #{decoder_forward.19} parent=31 // pred_fallthru
          _
        %v293 = vld [vmem:[#allocation2] sm:$0xff]
        %v294 = vld [vmem:[%s236] sm:$0xf]
        %v295 = vld [vmem:[%s245] sm:$0xf]
        %v296 = vld [vmem:[%s245 + $0x4] sm:$0xf]
        %v297 = vld [vmem:[%s245 + $0x8] sm:$0xf]
        %v298 = vld [vmem:[%s245 + $0xc] sm:$0xf]
        %v303 = vunpack.c.l.b16 %v295
        %v304 = vunpack.c.l.b16 %v296
        %v305 = vunpack.c.l.b16 %v297
        %v306 = vunpack.c.l.b16 %v298
        %v307 = vpack.c.b16 %v304, %v303
        %v308 = vpack.c.b16 %v306, %v305
        %vm311 = vcmask 261120
        %v313 = vsel %vm311, %v294, 0
        %315 = vmatprep.subr.bf16.mxu0 0
        %316 = vmatpush1.bf16.msra.mxu0 %v307
        %317 = vmatprep.subr.bf16.mxu0 0
        %318 = vmatpush1.bf16.msra.mxu0 %v308
        %319 = vmatprep.subr.bf16.mxu0 0
        %320 = vmatpush1.bf16.msra.mxu0 0
        %321 = vmatprep.subr.bf16.mxu0 0
        %322 = vmatpush1.bf16.msra.mxu0 0
        %323 = vmatprep.subr.bf16.mxu0 0
        %324 = vmatpush1.bf16.msra.mxu0 0
        %325 = vmatprep.subr.bf16.mxu0 0
        %326 = vmatpush1.bf16.msra.mxu0 0
        %327 = vmatprep.subr.bf16.mxu0 0
        %328 = vmatpush1.bf16.msra.mxu0 0
        %329 = vmatprep.subr.bf16.mxu0 0
        %330 = vmatpush1.bf16.msra.mxu0 0
        %331 = vmatprep.subr.bf16.mxu0 0
        %332 = vmatpush1.bf16.msra.mxu0 0
        %333 = vmatprep.subr.bf16.mxu0 0
        %334 = vmatpush1.bf16.msra.mxu0 0
        %335 = vmatprep.subr.bf16.mxu0 0
        %336 = vmatpush1.bf16.msra.mxu0 0
        %337 = vmatprep.subr.bf16.mxu0 0
        %338 = vmatpush1.bf16.msra.mxu0 0
        %339 = vmatprep.subr.bf16.mxu0 0
        %340 = vmatpush1.bf16.msra.mxu0 0
        %341 = vmatprep.subr.bf16.mxu0 0
        %342 = vmatpush1.bf16.msra.mxu0 0
        %343 = vmatprep.subr.bf16.mxu0 0
        %344 = vmatpush1.bf16.msra.mxu0 0
        %345 = vmatprep.subr.bf16.mxu0 0
        %346 = vmatpush1.bf16.msra.mxu0 0
        %347 = vmatprep.mubr.bf16.mxu0 0
        %348 = vmatmul.mubr.bf16.gmra.mrb[0].mxu0 %v313
        %v349 = vpop.f32.mrb[0].mxu0
        %v350 = vadd.f32 0.0, %v349
        %v351 = vpop.f32.mrb[0].mxu0
        %v352 = vpop.f32.mrb[0].mxu0
        %v353 = vpop.f32.mrb[0].mxu0
        %354 = vdwg.mxu0
        %v355 = vadd.f32 %v293, %v350
        %vm356 = vcmask 64512
        %357 = vst.msk [vmem:[#allocation2] sm:$0xff] %vm356, %v355
        // Predicated region
        $region49: #{decoder_forward.19} parent=31 // pred_check
          %p358 = pneg %p287
        $region50: #{decoder_forward.19} parent=31 // pred_check_branch
          %360 = sbr.rel (%p358) target = $region52
        $region51: #{decoder_forward.19} parent=31 // pred_region
          %v361 = vld [vmem:[#allocation2] sm:$0xff]
          %v362 = vld [vmem:[%s253] sm:$0x1]
          %v364 = vlaneseq
          %v365 = vshrl.u32 %v364, 7
          %v366 = vsub.s32 0, %v365
          %v367 = vrot.slane %v362, %v366
          %v369 = vadd.f32 %v361, %v367
          %v370 = vpack.c.bf16 %v369, %v369
          %vm371 = vcmask 60416
          %372 = vst.msk [vmem:[%s284] sm:$0xf] %vm371, %v370
        $region52: #{decoder_forward.19} parent=31 // pred_fallthru
          _
        %s373 = sand.u32 %s134, 1
        %s374 = scalar_lea.sflag [#allocation5], %s373
        %s375 = sand.u32 %s134, 1
        %s376 = smul.addr %s375, 4
        %s377 = scalar_lea.vmem [#allocation9], %s376
        // Predicated region
        $region53: #{decoder_forward.19} parent=31 // pred_check
          %p378 = pneg %p144
        $region54: #{decoder_forward.19} parent=31 // pred_check_branch
          %380 = sbr.rel (%p378) target = $region56
        $region55: #{decoder_forward.19} parent=31 // pred_region
          %s382 = ssub.s32 64, 64
          %383 = vsyncadd %s374, %s382
          %s384 = smul.addr %s28, 4
          %s385 = sadd.s32 %s29, %s384
          %s386 = smul.addr %s385, 64
          %s387 = scalar_lea.hbm %s3, %s386
          %s389 = sshll.u32 %s377, 4
          %s390 = int_to_ptr.vmem [resolvable:$true] %s389
          %392 = dma.vmem_to_hbm [thread:$0]  %s390, 64, %s387, %s374
        $region56: #{decoder_forward.19} parent=31 // pred_fallthru
          _
      $region32: #{decoder_forward.19} parent=5 // pred_fallthru
        _
      %p393 = scmp.le.s32.totalorder 2, %s18
      // Predicated region
      $region57: #{decoder_forward.19} parent=5 // pred_check
        %p394 = pneg %p393
      $region58: #{decoder_forward.19} parent=5 // pred_check_branch
        %396 = sbr.rel (%p394) target = $region60
      $region59: #{decoder_forward.19} parent=5 // pred_region
        %s397 = ssub.s32 %s18, 2
        // Predicated region
        $region61: #{decoder_forward.19} parent=59 // pred_check
          %p398 = pneg %p150
        $region62: #{decoder_forward.19} parent=59 // pred_check_branch
          %400 = sbr.rel (%p398) target = $region64
        $region63: #{decoder_forward.19} parent=59 // pred_region
          %s401 = sand.u32 %s135, 1
          %s402 = scalar_lea.sflag [#allocation5], %s401
          %s403 = sand.u32 %s135, 1
          %s404 = smul.addr %s403, 4
          %s405 = scalar_lea.vmem [#allocation9], %s404
          %406 = dma.done %s402, 64
        $region64: #{decoder_forward.19} parent=59 // pred_fallthru
          _
      $region60: #{decoder_forward.19} parent=5 // pred_fallthru
        _
    $region6: #{decoder_forward.19} parent=1 // loop_footer
      %s22 = sadd.s32 1, %s18
    $region7: #{decoder_forward.19} parent=1 // loop_footer_branch
      %17 = sbr.rel target = $region3
    $region8: #{decoder_forward.19} parent=1 // loop_exit
      _
    %407 = vsyncpa [#allocation4], 1
    %s408 = scalar_lea.sflag [#allocation4], 1
    %409 = vsyncpa %s408, 1
    %410 = vsyncpa [#allocation7], 1
    %s411 = scalar_lea.sflag [#allocation7], 1
    %412 = vsyncpa %s411, 1
    %413 = vsyncpa [#allocation5], 1
    %s414 = scalar_lea.sflag [#allocation5], 1
    %415 = vsyncpa %s414, 1

// kernel: decoder_forward.17
$region0: #{decoder_forward.17}
  #allocation0 [shape = 'u32[]', space=smem, size = 0x4, offset = 0x4, fixed_abs, tag = 'smem constant byte address 0x4 - core index']
  #allocation1 [shape = 'u32[144,128]{1,0:T(1,128)}', space=vmem, size = 0x12000, scoped, tag = 'internal scratch']
  #allocation2 [shape = 'f32[8,1]{1,0:T(8,128)}', space=vmem, size = 0x1000, scoped, tag = 'scratch operand']
  #allocation3 [shape = 'f32[8,1]{1,0:T(8,128)}', space=vmem, size = 0x1000, scoped, tag = 'scratch operand']
  #allocation4 [shape = 'f32[8,8]{1,0:T(8,128)}', space=vmem, size = 0x1000, scoped, tag = 'scratch operand']
  %s0 = inlined_call_operand.hbm [shape: bf16[2,12,8,8], index: 0, kind: input, shape index: {}, may-alias: {0,1,2}]
  %s1 = inlined_call_operand.hbm [shape: bf16[2,12,8,8], index: 1, kind: input, shape index: {}, may-alias: {0,1,2}]
  %s2 = inlined_call_operand.hbm [shape: bf16[2,12,8,8], index: 2, kind: input, shape index: {}, may-alias: {0,1,2}]
  %s3 = inlined_call_operand.hbm [shape: bf16[2,4,8,8], index: 3, kind: output, shape index: {}]
  %s4 = sld [smem:[#allocation0]]
  $region69: #{decoder_forward.17} parent=0
    _
  %s6 = ssub.s32 1, %s4
  %s7 = scalar_select 0, %s6, %s4
  $region1: #{decoder_forward.17} parent=0
    #allocation5 [shape = 'u8[4096]{0}', space=vmem, size = 0x1000, scoped, tag = 'input window, operand 0']
    #allocation6 [shape = 's32[2]{0}', space=sflag, size = 0x8, scoped, tag = 'scoped memory for decoder_forward.17']
    #allocation7 [shape = 's32[2]{0}', space=sflag, size = 0x8, scoped, tag = 'scoped memory for decoder_forward.17']
    #allocation8 [shape = 'u8[4096]{0}', space=vmem, size = 0x1000, scoped, tag = 'input window, operand 1']
    #allocation9 [shape = 's32[2]{0}', space=sflag, size = 0x8, scoped, tag = 'scoped memory for decoder_forward.17']
    #allocation10 [shape = 'u8[4096]{0}', space=vmem, size = 0x1000, scoped, tag = 'input window, operand 2']
    #allocation11 [shape = 'u8[4096]{0}', space=vmem, size = 0x1000, scoped, tag = 'output window, operand 0']
    %8 = vsyncpa [#allocation6], 0
    %s9 = scalar_lea.sflag [#allocation6], 1
    %10 = vsyncpa %s9, 0
    %11 = vsyncpa [#allocation9], 0
    %s12 = scalar_lea.sflag [#allocation9], 1
    %13 = vsyncpa %s12, 0
    %14 = vsyncpa [#allocation7], 0
    %s15 = scalar_lea.sflag [#allocation7], 1
    %16 = vsyncpa %s15, 0
    loop: start=0, step=1, limit=10
    $region2: #{decoder_forward.17} parent=1 // loop_pre_header
      _
    $region3: #{decoder_forward.17} parent=1 // loop_header
      %s18 = sphi 0, %s22
      %p19 = scmp.ge.s32.totalorder %s18, 10
      %s25 = sphi 0, %s51
      %s26 = sphi 0, %s47
      %s27 = sphi 0, %s43
      %s28 = sphi 0, %s39
      %s29 = sphi 0, %s25
      %s30 = sphi 0, %s26
      %s31 = sphi 0, %s27
      %s32 = sphi 0, %s28
      %s33 = sphi 0, %s29
      %s34 = sphi 0, %s30
      %s35 = sphi 0, %s31
      %s36 = sphi 0, %s32
      %s58 = sphi 0, %s60
      %s61 = sphi 0, %s58
      %s62 = sphi 0, %s61
      %s78 = sphi 0, %s62
      %s90 = sphi 0, %s92
      %s93 = sphi 0, %s90
      %s94 = sphi 0, %s93
      %s110 = sphi 0, %s94
      %s122 = sphi 0, %s124
      %s125 = sphi 0, %s122
      %s126 = sphi 0, %s125
      %s142 = sphi 0, %s126
      %s152 = sphi 0, %s154
      %s155 = sphi 0, %s152
      %s156 = sphi 0, %s155
      %s172 = sphi 0, %s156
    $region4: #{decoder_forward.17} parent=1 // loop_header_branch
      %21 = sbr.rel (%p19) target = $region8
    $region5: #{decoder_forward.17} parent=1 // loop_body
      %s23 = ssub.s32 %s18, 1
      %s24 = ssub.s32 %s18, 2
      %s37 = sadd.s32 1, %s28
      %p38 = scmp.ge.s32.totalorder %s37, 1
      %s39 = scalar_select %p38, 0, %s37
      %s40 = sadd.s32 1, %s27
      %s41 = scalar_select %p38, %s40, %s27
      %p42 = scmp.ge.s32.totalorder %s41, 1
      %s43 = scalar_select %p42, 0, %s41
      %s44 = sadd.s32 1, %s26
      %s45 = scalar_select %p42, %s44, %s26
      %p46 = scmp.ge.s32.totalorder %s45, 4
      %s47 = scalar_select %p46, 0, %s45
      %s48 = sadd.s32 1, %s25
      %s49 = scalar_select %p46, %s48, %s25
      %p50 = scmp.ge.s32.totalorder %s49, 2
      %s51 = scalar_select %p50, 0, %s49
      %s52 = ssub.s32 %s25, %s51
      %s53 = ssub.s32 %s26, %s47
      %s54 = sor.u32 %s52, %s53
      %s55 = ssub.s32 %s27, %s43
      %s56 = sor.u32 %s54, %s55
      %p57 = scmp.eq.s32.totalorder %s56, 0
      %s59 = sadd.s32 %s58, 1
      %s60 = scalar_select %p57, %s58, %s59
      %p63 = pneg %p57
      %p64 = scmp.eq.s32.totalorder %s18, 7
      %p65 = por %p63, %p64
      %p66 = scmp.ne.s32.totalorder %s58, %s61
      %p67 = scmp.eq.s32.totalorder %s18, 0
      %p68 = por %p66, %p67
      %p69 = scmp.ne.s32.totalorder %s58, %s61
      %p70 = scmp.eq.s32.totalorder %s23, 7
      %p71 = por %p69, %p70
      %p72 = scmp.ne.s32.totalorder %s61, %s62
      %p73 = scmp.eq.s32.totalorder %s23, 0
      %p74 = por %p72, %p73
      %p75 = scmp.ne.s32.totalorder %s61, %s62
      %p76 = scmp.eq.s32.totalorder %s24, 7
      %p77 = por %p75, %p76
      %p79 = scmp.ne.s32.totalorder %s62, %s78
      %p80 = scmp.eq.s32.totalorder %s24, 0
      %p81 = por %p79, %p80
      %s82 = sadd.s32 %s26, 4
      %s83 = sadd.s32 %s47, 4
      %s84 = ssub.s32 %s25, %s51
      %s85 = ssub.s32 %s82, %s83
      %s86 = sor.u32 %s84, %s85
      %s87 = ssub.s32 %s28, %s39
      %s88 = sor.u32 %s86, %s87
      %p89 = scmp.eq.s32.totalorder %s88, 0
      %s91 = sadd.s32 %s90, 1
      %s92 = scalar_select %p89, %s90, %s91
      %p95 = pneg %p89
      %p96 = scmp.eq.s32.totalorder %s18, 7
      %p97 = por %p95, %p96
      %p98 = scmp.ne.s32.totalorder %s90, %s93
      %p99 = scmp.eq.s32.totalorder %s18, 0
      %p100 = por %p98, %p99
      %p101 = scmp.ne.s32.totalorder %s90, %s93
      %p102 = scmp.eq.s32.totalorder %s23, 7
      %p103 = por %p101, %p102
      %p104 = scmp.ne.s32.totalorder %s93, %s94
      %p105 = scmp.eq.s32.totalorder %s23, 0
      %p106 = por %p104, %p105
      %p107 = scmp.ne.s32.totalorder %s93, %s94
      %p108 = scmp.eq.s32.totalorder %s24, 7
      %p109 = por %p107, %p108
      %p111 = scmp.ne.s32.totalorder %s94, %s110
      %p112 = scmp.eq.s32.totalorder %s24, 0
      %p113 = por %p111, %p112
      %s114 = sadd.s32 %s26, 8
      %s115 = sadd.s32 %s47, 8
      %s116 = ssub.s32 %s25, %s51
      %s117 = ssub.s32 %s114, %s115
      %s118 = sor.u32 %s116, %s117
      %s119 = ssub.s32 %s28, %s39
      %s120 = sor.u32 %s118, %s119
      %p121 = scmp.eq.s32.totalorder %s120, 0
      %s123 = sadd.s32 %s122, 1
      %s124 = scalar_select %p121, %s122, %s123
      %p127 = pneg %p121
      %p128 = scmp.eq.s32.totalorder %s18, 7
      %p129 = por %p127, %p128
      %p130 = scmp.ne.s32.totalorder %s122, %s125
      %p131 = scmp.eq.s32.totalorder %s18, 0
      %p132 = por %p130, %p131
      %p133 = scmp.ne.s32.totalorder %s122, %s125
      %p134 = scmp.eq.s32.totalorder %s23, 7
      %p135 = por %p133, %p134
      %p136 = scmp.ne.s32.totalorder %s125, %s126
      %p137 = scmp.eq.s32.totalorder %s23, 0
      %p138 = por %p136, %p137
      %p139 = scmp.ne.s32.totalorder %s125, %s126
      %p140 = scmp.eq.s32.totalorder %s24, 7
      %p141 = por %p139, %p140
      %p143 = scmp.ne.s32.totalorder %s126, %s142
      %p144 = scmp.eq.s32.totalorder %s24, 0
      %p145 = por %p143, %p144
      %s146 = ssub.s32 %s25, %s51
      %s147 = ssub.s32 %s26, %s47
      %s148 = sor.u32 %s146, %s147
      %s149 = ssub.s32 %s27, %s43
      %s150 = sor.u32 %s148, %s149
      %p151 = scmp.eq.s32.totalorder %s150, 0
      %s153 = sadd.s32 %s152, 1
      %s154 = scalar_select %p151, %s152, %s153
      %p157 = pneg %p151
      %p158 = scmp.eq.s32.totalorder %s18, 7
      %p159 = por %p157, %p158
      %p160 = scmp.ne.s32.totalorder %s152, %s155
      %p161 = scmp.eq.s32.totalorder %s18, 0
      %p162 = por %p160, %p161
      %p163 = scmp.ne.s32.totalorder %s152, %s155
      %p164 = scmp.eq.s32.totalorder %s23, 7
      %p165 = por %p163, %p164
      %p166 = scmp.ne.s32.totalorder %s155, %s156
      %p167 = scmp.eq.s32.totalorder %s23, 0
      %p168 = por %p166, %p167
      %p169 = scmp.ne.s32.totalorder %s155, %s156
      %p170 = scmp.eq.s32.totalorder %s24, 7
      %p171 = por %p169, %p170
      %p173 = scmp.ne.s32.totalorder %s156, %s172
      %p174 = scmp.eq.s32.totalorder %s24, 0
      %p175 = por %p173, %p174
      %p176 = scmp.le.s32.totalorder 1, %s18
      %p177 = scmp.lt.s32.totalorder %s18, 9
      %p178 = pnand %p176, %p177
      %p179 = pneg %p178
      // Predicated region
      $region9: #{decoder_forward.17} parent=5 // pred_check
        _
      $region10: #{decoder_forward.17} parent=5 // pred_check_branch
        %181 = sbr.rel (%p178) target = $region12
      $region11: #{decoder_forward.17} parent=5 // pred_region
        %s182 = ssub.s32 %s18, 1
      $region12: #{decoder_forward.17} parent=5 // pred_fallthru
        _
      %p183 = scmp.lt.s32.totalorder %s18, 8
      // Predicated region
      $region13: #{decoder_forward.17} parent=5 // pred_check
        %p184 = pneg %p183
      $region14: #{decoder_forward.17} parent=5 // pred_check_branch
        %186 = sbr.rel (%p184) target = $region16
      $region15: #{decoder_forward.17} parent=5 // pred_region
        // Predicated region
        $region17: #{decoder_forward.17} parent=15 // pred_check
          %p187 = pneg %p68
        $region18: #{decoder_forward.17} parent=15 // pred_check_branch
          %189 = sbr.rel (%p187) target = $region20
        $region19: #{decoder_forward.17} parent=15 // pred_region
          %s190 = sand.u32 %s58, 1
          %s191 = scalar_lea.sflag [#allocation6], %s190
          %s192 = sand.u32 %s58, 1
          %s193 = smul.addr %s192, 4
          %s194 = scalar_lea.vmem [#allocation5], %s193
          %s196 = ssub.s32 64, 64
          %197 = vsyncadd %s191, %s196
          %s198 = sadd.s32 %s27, %s26
          %s199 = smul.addr %s25, 12
          %s200 = sadd.s32 %s198, %s199
          %s201 = smul.addr %s200, 64
          %s202 = scalar_lea.hbm %s0, %s201
          %s204 = sshll.u32 %s194, 4
          %s205 = int_to_ptr.vmem [resolvable:$true] %s204
          %207 = dma.hbm_to_vmem [thread:$0]  %s202, 64, %s205, %s191
        $region20: #{decoder_forward.17} parent=15 // pred_fallthru
          _
        // Predicated region
        $region21: #{decoder_forward.17} parent=15 // pred_check
          %p208 = pneg %p100
        $region22: #{decoder_forward.17} parent=15 // pred_check_branch
          %210 = sbr.rel (%p208) target = $region24
        $region23: #{decoder_forward.17} parent=15 // pred_region
          %s211 = sand.u32 %s18, 1
          %s212 = scalar_lea.sflag [#allocation9], %s211
          %s213 = sand.u32 %s90, 1
          %s214 = smul.addr %s213, 4
          %s215 = scalar_lea.vmem [#allocation8], %s214
          %s216 = sadd.s32 %s26, 4
          %s218 = ssub.s32 64, 64
          %219 = vsyncadd %s212, %s218
          %s220 = sadd.s32 %s28, %s216
          %s221 = smul.addr %s25, 12
          %s222 = sadd.s32 %s220, %s221
          %s223 = smul.addr %s222, 64
          %s224 = scalar_lea.hbm %s1, %s223
          %s226 = sshll.u32 %s215, 4
          %s227 = int_to_ptr.vmem [resolvable:$true] %s226
          %229 = dma.hbm_to_vmem [thread:$0]  %s224, 64, %s227, %s212
        $region24: #{decoder_forward.17} parent=15 // pred_fallthru
          _
        // Predicated region
        $region25: #{decoder_forward.17} parent=15 // pred_check
          %p230 = pneg %p132
        $region26: #{decoder_forward.17} parent=15 // pred_check_branch
          %232 = sbr.rel (%p230) target = $region28
        $region27: #{decoder_forward.17} parent=15 // pred_region
          %s233 = sand.u32 %s18, 1
          %s234 = scalar_lea.sflag [#allocation9], %s233
          %s235 = sand.u32 %s122, 1
          %s236 = smul.addr %s235, 4
          %s237 = scalar_lea.vmem [#allocation10], %s236
          %s238 = sadd.s32 %s26, 8
          %s240 = ssub.s32 64, 64
          %241 = vsyncadd %s234, %s240
          %s242 = sadd.s32 %s28, %s238
          %s243 = smul.addr %s25, 12
          %s244 = sadd.s32 %s242, %s243
          %s245 = smul.addr %s244, 64
          %s246 = scalar_lea.hbm %s2, %s245
          %s248 = sshll.u32 %s237, 4
          %s249 = int_to_ptr.vmem [resolvable:$true] %s248
          %251 = dma.hbm_to_vmem [thread:$0]  %s246, 64, %s249, %s234
        $region28: #{decoder_forward.17} parent=15 // pred_fallthru
          _
      $region16: #{decoder_forward.17} parent=5 // pred_fallthru
        _
      %p252 = scmp.le.s32.totalorder 1, %s18
      %p253 = scmp.lt.s32.totalorder %s18, 9
      %p254 = pnand %p252, %p253
      %p255 = pneg %p254
      // Predicated region
      $region29: #{decoder_forward.17} parent=5 // pred_check
        _
      $region30: #{decoder_forward.17} parent=5 // pred_check_branch
        %257 = sbr.rel (%p254) target = $region32
      $region31: #{decoder_forward.17} parent=5 // pred_region
        %s258 = ssub.s32 %s18, 1
        %s259 = sand.u32 %s61, 1
        %s260 = scalar_lea.sflag [#allocation6], %s259
        %s261 = sand.u32 %s61, 1
        %s262 = smul.addr %s261, 4
        %s263 = scalar_lea.vmem [#allocation5], %s262
        // Predicated region
        $region33: #{decoder_forward.17} parent=31 // pred_check
          %p264 = pneg %p74
        $region34: #{decoder_forward.17} parent=31 // pred_check_branch
          %266 = sbr.rel (%p264) target = $region36
        $region35: #{decoder_forward.17} parent=31 // pred_region
          %267 = dma.done %s260, 64
        $region36: #{decoder_forward.17} parent=31 // pred_fallthru
          _
        %s268 = sand.u32 %s23, 1
        %s269 = scalar_lea.sflag [#allocation9], %s268
        %s270 = sand.u32 %s93, 1
        %s271 = smul.addr %s270, 4
        %s272 = scalar_lea.vmem [#allocation8], %s271
        // Predicated region
        $region37: #{decoder_forward.17} parent=31 // pred_check
          %p273 = pneg %p106
        $region38: #{decoder_forward.17} parent=31 // pred_check_branch
          %275 = sbr.rel (%p273) target = $region40
        $region39: #{decoder_forward.17} parent=31 // pred_region
          %276 = dma.done %s269, 64
        $region40: #{decoder_forward.17} parent=31 // pred_fallthru
          _
        %s277 = sand.u32 %s23, 1
        %s278 = scalar_lea.sflag [#allocation9], %s277
        %s279 = sand.u32 %s125, 1
        %s280 = smul.addr %s279, 4
        %s281 = scalar_lea.vmem [#allocation10], %s280
        // Predicated region
        $region41: #{decoder_forward.17} parent=31 // pred_check
          %p282 = pneg %p138
        $region42: #{decoder_forward.17} parent=31 // pred_check_branch
          %284 = sbr.rel (%p282) target = $region44
        $region43: #{decoder_forward.17} parent=31 // pred_region
          %285 = dma.done %s278, 64
        $region44: #{decoder_forward.17} parent=31 // pred_fallthru
          _
        %s286 = sand.u32 %s61, 1
        %s287 = scalar_lea.sflag [#allocation6], %s286
        %s288 = sand.u32 %s61, 1
        %s289 = smul.addr %s288, 4
        %s290 = scalar_lea.vmem [#allocation5], %s289
        %p291 = pneg %p74
        %p292 = pneg %p71
        %s293 = sand.u32 %s23, 1
        %s294 = scalar_lea.sflag [#allocation9], %s293
        %s295 = sand.u32 %s93, 1
        %s296 = smul.addr %s295, 4
        %s297 = scalar_lea.vmem [#allocation8], %s296
        %p298 = pneg %p106
        %p299 = pneg %p103
        %s300 = sand.u32 %s23, 1
        %s301 = scalar_lea.sflag [#allocation9], %s300
        %s302 = sand.u32 %s125, 1
        %s303 = smul.addr %s302, 4
        %s304 = scalar_lea.vmem [#allocation10], %s303
        %p305 = pneg %p138
        %p306 = pneg %p135
        %p307 = pneg %p168
        %p308 = pneg %p165
        %s309 = sand.u32 %s155, 1
        %s310 = scalar_lea.sflag [#allocation7], %s309
        %s311 = sand.u32 %s155, 1
        %s312 = smul.addr %s311, 4
        %s313 = scalar_lea.vmem [#allocation11], %s312
        %s314 = sadd.s32 %s30, 4
        %s315 = sadd.s32 %s30, 8
        %p317 = scmp.eq.s32.totalorder %s32, 0
        // Predicated region
        $region45: #{decoder_forward.17} parent=31 // pred_check
          %p318 = pneg %p317
        $region46: #{decoder_forward.17} parent=31 // pred_check_branch
          %320 = sbr.rel (%p318) target = $region48
        $region47: #{decoder_forward.17} parent=31 // pred_region
          %vm321 = vcmask 7168
          %322 = vst.msk [vmem:[#allocation2] sm:$0xff] %vm321, -1e+30
          %323 = vst.msk [vmem:[#allocation3] sm:$0xff] %vm321, 0.0
          %vm324 = vcmask 64512
          %325 = vst.msk [vmem:[#allocation4] sm:$0xff] %vm324, 0.0
        $region48: #{decoder_forward.17} parent=31 // pred_fallthru
          _
        %s326 = smul.u32 %s31, 8
        %s327 = sadd.s32 %s326, 7
        %s328 = smul.u32 %s32, 8
        %p329 = scmp.ge.s32.totalorder %s327, %s328
        // Predicated region
        $region49: #{decoder_forward.17} parent=31 // pred_check
          %p330 = pneg %p329
        $region50: #{decoder_forward.17} parent=31 // pred_check_branch
          %332 = sbr.rel (%p330) target = $region52
        $region51: #{decoder_forward.17} parent=31 // pred_region
          %v333 = vld [vmem:[%s263] sm:$0xf]
          %v334 = vld [vmem:[%s272] sm:$0xf]
          %v335 = vld [vmem:[%s281] sm:$0xf]
          %vm336 = vcmask 64512
          %v338 = vsel %vm336, %v333, 0
          %v341 = vsel %vm336, %v334, 0
          %343 = vmatprep.subr.bf16.mxu0 0
          %344 = vmatpush1.bf16.xpose.msra.mxu0 %v341
          %345 = vmatprep.subr.bf16.mxu0 0
          %346 = vmatpush1.bf16.xpose.msra.mxu0 0
          %347 = vmatprep.subr.bf16.mxu0 0
          %348 = vmatpush1.bf16.xpose.msra.mxu0 0
          %349 = vmatprep.subr.bf16.mxu0 0
          %350 = vmatpush1.bf16.xpose.msra.mxu0 0
          %351 = vmatprep.subr.bf16.mxu0 0
          %352 = vmatpush1.bf16.xpose.msra.mxu0 0
          %353 = vmatprep.subr.bf16.mxu0 0
          %354 = vmatpush1.bf16.xpose.msra.mxu0 0
          %355 = vmatprep.subr.bf16.mxu0 0
          %356 = vmatpush1.bf16.xpose.msra.mxu0 0
          %357 = vmatprep.subr.bf16.mxu0 0
          %358 = vmatpush1.bf16.xpose.msra.mxu0 0
          %359 = vmatprep.subr.bf16.mxu0 0
          %360 = vmatpush1.bf16.xpose.msra.mxu0 0
          %361 = vmatprep.subr.bf16.mxu0 0
          %362 = vmatpush1.bf16.xpose.msra.mxu0 0
          %363 = vmatprep.subr.bf16.mxu0 0
          %364 = vmatpush1.bf16.xpose.msra.mxu0 0
          %365 = vmatprep.subr.bf16.mxu0 0
          %366 = vmatpush1.bf16.xpose.msra.mxu0 0
          %367 = vmatprep.subr.bf16.mxu0 0
          %368 = vmatpush1.bf16.xpose.msra.mxu0 0
          %369 = vmatprep.subr.bf16.mxu0 0
          %370 = vmatpush1.bf16.xpose.msra.mxu0 0
          %371 = vmatprep.subr.bf16.mxu0 0
          %372 = vmatpush1.bf16.xpose.msra.mxu0 0
          %373 = vmatprep.subr.bf16.mxu0 0
          %374 = vmatpush1.bf16.xpose.msra.mxu0 0
          %375 = vmatprep.mubr.bf16.mxu0 0
          %376 = vmatmul.mubr.bf16.gmra.mrb[0].mxu0 %v338
          %v377 = vpop.f32.mrb[0].mxu0
          %v378 = vadd.f32 0.0, %v377
          %v379 = vpop.f32.mrb[0].mxu0
          %v380 = vpop.f32.mrb[0].mxu0
          %v381 = vpop.f32.mrb[0].mxu0
          %382 = vdwg.mxu0
          %v383 = vlaneseq
          %v384 = vshrl.u32 %v383, 7
          %v385 = vstv %s326
          %v386 = vadd.s32 %v385, %v384
          %v387 = vlaneseq
          %v388 = vand.u32 %v387, 127
          %v389 = vstv %s328
          %v390 = vadd.s32 %v389, %v388
          %vm391 = vcmp.le.s32.totalorder %v390, %v386
          %v392 = vsel %vm391, %v378, -1e+30
          %v393 = vld [vmem:[#allocation2] sm:$0xff]
          %v394 = vsel %vm336, %v392, -inf
          %395 = vmax.xlane.f32.xlu0 %v394
          %v396 = vpop.xlane.xlu0 %395
          %v397 = vmax.f32 %v393, %v396
          %v398 = vsub.f32 %v393, %v397
          %v399 = vmul.f32 %v398, 1.442695
          %v400 = vpow.pop %v399
          %402 = vset.pattern.permute.xlu0 0
          %403 = vperm.xlu0 %402, %v397
          %v404 = vpop.permute.xlu0 %403
          %v406 = vsub.f32 %v392, %v404
          %v407 = vmul.f32 %v406, 1.442695
          %v408 = vpow.pop %v407
          %v409 = vld [vmem:[#allocation3] sm:$0xff]
          %v410 = vmul.f32 %v400, %v409
          %v411 = vsel %vm336, %v408, 0.0
          %412 = vadd.xlane.f32.xlu0 %v411
          %v413 = vpop.xlane.xlu0 %412
          %v414 = vadd.f32 %v410, %v413
          %vm415 = vcmask 7168
          %416 = vst.msk [vmem:[#allocation3] sm:$0xff] %vm415, %v414
          %v417 = vld [vmem:[#allocation4] sm:$0xff]
          %419 = vset.pattern.permute.xlu0 0
          %420 = vperm.xlu0 %419, %v400
          %v421 = vpop.permute.xlu0 %420
          %v423 = vmul.f32 %v421, %v417
          %v424 = vpack.c.bf16 %v408, %v408
          %v426 = vsel %vm336, %v424, 0
          %vm428 = vcmask 1043456
          %v430 = vsel %vm428, %v335, 0
          %432 = vmatprep.subr.bf16.mxu0 0
          %433 = vmatpush1.bf16.msra.mxu0 %v430
          %434 = vmatprep.subr.bf16.mxu0 0
          %435 = vmatpush1.bf16.msra.mxu0 0
          %436 = vmatprep.subr.bf16.mxu0 0
          %437 = vmatpush1.bf16.msra.mxu0 0
          %438 = vmatprep.subr.bf16.mxu0 0
          %439 = vmatpush1.bf16.msra.mxu0 0
          %440 = vmatprep.subr.bf16.mxu0 0
          %441 = vmatpush1.bf16.msra.mxu0 0
          %442 = vmatprep.subr.bf16.mxu0 0
          %443 = vmatpush1.bf16.msra.mxu0 0
          %444 = vmatprep.subr.bf16.mxu0 0
          %445 = vmatpush1.bf16.msra.mxu0 0
          %446 = vmatprep.subr.bf16.mxu0 0
          %447 = vmatpush1.bf16.msra.mxu0 0
          %448 = vmatprep.subr.bf16.mxu0 0
          %449 = vmatpush1.bf16.msra.mxu0 0
          %450 = vmatprep.subr.bf16.mxu0 0
          %451 = vmatpush1.bf16.msra.mxu0 0
          %452 = vmatprep.subr.bf16.mxu0 0
          %453 = vmatpush1.bf16.msra.mxu0 0
          %454 = vmatprep.subr.bf16.mxu0 0
          %455 = vmatpush1.bf16.msra.mxu0 0
          %456 = vmatprep.subr.bf16.mxu0 0
          %457 = vmatpush1.bf16.msra.mxu0 0
          %458 = vmatprep.subr.bf16.mxu0 0
          %459 = vmatpush1.bf16.msra.mxu0 0
          %460 = vmatprep.subr.bf16.mxu0 0
          %461 = vmatpush1.bf16.msra.mxu0 0
          %462 = vmatprep.subr.bf16.mxu0 0
          %463 = vmatpush1.bf16.msra.mxu0 0
          %464 = vmatprep.mubr.bf16.mxu0 0
          %465 = vmatmul.mubr.bf16.gmra.mrb[0].mxu0 %v426
          %v466 = vpop.f32.mrb[0].mxu0
          %v467 = vadd.f32 0.0, %v466
          %v468 = vpop.f32.mrb[0].mxu0
          %v469 = vpop.f32.mrb[0].mxu0
          %v470 = vpop.f32.mrb[0].mxu0
          %471 = vdwg.mxu0
          %v472 = vadd.f32 %v423, %v467
          %473 = vst.msk [vmem:[#allocation4] sm:$0xff] %vm336, %v472
          %474 = vst.msk [vmem:[#allocation2] sm:$0xff] %vm415, %v397
        $region52: #{decoder_forward.17} parent=31 // pred_fallthru
          _
        // Predicated region
        $region53: #{decoder_forward.17} parent=31 // pred_check
          %p475 = pneg %p317
        $region54: #{decoder_forward.17} parent=31 // pred_check_branch
          %477 = sbr.rel (%p475) target = $region56
        $region55: #{decoder_forward.17} parent=31 // pred_region
          %v478 = vld [vmem:[#allocation4] sm:$0xff]
          %v479 = vld [vmem:[#allocation3] sm:$0xff]
          %v480 = vrcp.pop %v479
          %482 = vset.pattern.permute.xlu0 0
          %483 = vperm.xlu0 %482, %v480
          %v484 = vpop.permute.xlu0 %483
          %v486 = vmul.f32 %v478, %v484
          %v487 = vpack.c.bf16 %v486, %v486
          %vm488 = vcmask 60416
          %489 = vst.msk [vmem:[%s313] sm:$0xf] %vm488, %v487
        $region56: #{decoder_forward.17} parent=31 // pred_fallthru
          _
        %s490 = sand.u32 %s155, 1
        %s491 = scalar_lea.sflag [#allocation7], %s490
        %s492 = sand.u32 %s155, 1
        %s493 = smul.addr %s492, 4
        %s494 = scalar_lea.vmem [#allocation11], %s493
        // Predicated region
        $region57: #{decoder_forward.17} parent=31 // pred_check
          %p495 = pneg %p165
        $region58: #{decoder_forward.17} parent=31 // pred_check_branch
          %497 = sbr.rel (%p495) target = $region60
        $region59: #{decoder_forward.17} parent=31 // pred_region
          %s499 = ssub.s32 64, 64
          %500 = vsyncadd %s491, %s499
          %s501 = sadd.s32 %s31, %s30
          %s502 = smul.addr %s29, 4
          %s503 = sadd.s32 %s501, %s502
          %s504 = smul.addr %s503, 64
          %s505 = scalar_lea.hbm %s3, %s504
          %s507 = sshll.u32 %s494, 4
          %s508 = int_to_ptr.vmem [resolvable:$true] %s507
          %510 = dma.vmem_to_hbm [thread:$0]  %s508, 64, %s505, %s491
        $region60: #{decoder_forward.17} parent=31 // pred_fallthru
          _
      $region32: #{decoder_forward.17} parent=5 // pred_fallthru
        _
      %p511 = scmp.le.s32.totalorder 2, %s18
      // Predicated region
      $region61: #{decoder_forward.17} parent=5 // pred_check
        %p512 = pneg %p511
      $region62: #{decoder_forward.17} parent=5 // pred_check_branch
        %514 = sbr.rel (%p512) target = $region64
      $region63: #{decoder_forward.17} parent=5 // pred_region
        %s515 = ssub.s32 %s18, 2
        // Predicated region
        $region65: #{decoder_forward.17} parent=63 // pred_check
          %p516 = pneg %p171
        $region66: #{decoder_forward.17} parent=63 // pred_check_branch
          %518 = sbr.rel (%p516) target = $region68
        $region67: #{decoder_forward.17} parent=63 // pred_region
          %s519 = sand.u32 %s156, 1
          %s520 = scalar_lea.sflag [#allocation7], %s519
          %s521 = sand.u32 %s156, 1
          %s522 = smul.addr %s521, 4
          %s523 = scalar_lea.vmem [#allocation11], %s522
          %524 = dma.done %s520, 64
        $region68: #{decoder_forward.17} parent=63 // pred_fallthru
          _
      $region64: #{decoder_forward.17} parent=5 // pred_fallthru
        _
    $region6: #{decoder_forward.17} parent=1 // loop_footer
      %s22 = sadd.s32 1, %s18
    $region7: #{decoder_forward.17} parent=1 // loop_footer_branch
      %17 = sbr.rel target = $region3
    $region8: #{decoder_forward.17} parent=1 // loop_exit
      _
    %525 = vsyncpa [#allocation6], 1
    %s526 = scalar_lea.sflag [#allocation6], 1
    %527 = vsyncpa %s526, 1
    %528 = vsyncpa [#allocation9], 1
    %s529 = scalar_lea.sflag [#allocation9], 1
    %530 = vsyncpa %s529, 1
    %531 = vsyncpa [#allocation7], 1
    %s532 = scalar_lea.sflag [#allocation7], 1
    %533 = vsyncpa %s532, 1

// kernel: decoder_forward.20
$region0: #{decoder_forward.20}
  #allocation0 [shape = 'u32[]', space=smem, size = 0x4, offset = 0x4, fixed_abs, tag = 'smem constant byte address 0x4 - core index']
  #allocation1 [shape = 'u32[144,128]{1,0:T(1,128)}', space=vmem, size = 0x12000, scoped, tag = 'internal scratch']
  #allocation2 [shape = 'f32[8,8]{1,0:T(8,128)}', space=vmem, size = 0x1000, scoped, tag = 'scratch operand']
  %s0 = inlined_call_operand.hbm [shape: bf16[2,8,32], index: 0, kind: input, shape index: {}]
  %s1 = inlined_call_operand.hbm [shape: bf16[8,32,8], index: 1, kind: input, shape index: {}]
  %s2 = inlined_call_operand.hbm [shape: f32[8,1,8], index: 2, kind: input, shape index: {}]
  %s3 = inlined_call_operand.hbm [shape: bf16[2,8,8,8], index: 3, kind: output, shape index: {}]
  %s4 = sld [smem:[#allocation0]]
  $region65: #{decoder_forward.20} parent=0
    _
  %s6 = ssub.s32 1, %s4
  %s7 = scalar_select 0, %s6, %s4
  $region1: #{decoder_forward.20} parent=0
    #allocation3 [shape = 'u8[4096]{0}', space=vmem, size = 0x1000, scoped, tag = 'input window, operand 0']
    #allocation4 [shape = 's32[2]{0}', space=sflag, size = 0x8, scoped, tag = 'scoped memory for decoder_forward.20']
    #allocation5 [shape = 's32[2]{0}', space=sflag, size = 0x8, scoped, tag = 'scoped memory for decoder_forward.20']
    #allocation6 [shape = 'u8[16384]{0}', space=vmem, size = 0x4000, scoped, tag = 'input window, operand 1']
    #allocation7 [shape = 's32[2]{0}', space=sflag, size = 0x8, scoped, tag = 'scoped memory for decoder_forward.20']
    #allocation8 [shape = 'u8[1024]{0}', space=vmem, size = 0x400, scoped, tag = 'input window, operand 2']
    #allocation9 [shape = 'u8[4096]{0}', space=vmem, size = 0x1000, scoped, tag = 'output window, operand 0']
    %8 = vsyncpa [#allocation4], 0
    %s9 = scalar_lea.sflag [#allocation4], 1
    %10 = vsyncpa %s9, 0
    %11 = vsyncpa [#allocation7], 0
    %s12 = scalar_lea.sflag [#allocation7], 1
    %13 = vsyncpa %s12, 0
    %14 = vsyncpa [#allocation5], 0
    %s15 = scalar_lea.sflag [#allocation5], 1
    %16 = vsyncpa %s15, 0
    loop: start=0, step=1, limit=18
    $region2: #{decoder_forward.20} parent=1 // loop_pre_header
      _
    $region3: #{decoder_forward.20} parent=1 // loop_header
      %s18 = sphi 0, %s22
      %p19 = scmp.ge.s32.totalorder %s18, 18
      %s25 = sphi 0, %s44
      %s26 = sphi 0, %s40
      %s27 = sphi 0, %s36
      %s28 = sphi 0, %s25
      %s29 = sphi 0, %s26
      %s30 = sphi 0, %s27
      %s31 = sphi 0, %s28
      %s32 = sphi 0, %s29
      %s33 = sphi 0, %s30
      %s49 = sphi 0, %s51
      %s52 = sphi 0, %s49
      %s53 = sphi 0, %s52
      %s69 = sphi 0, %s53
      %s77 = sphi 0, %s79
      %s80 = sphi 0, %s77
      %s81 = sphi 0, %s80
      %s97 = sphi 0, %s81
      %s103 = sphi 0, %s105
      %s106 = sphi 0, %s103
      %s107 = sphi 0, %s106
      %s123 = sphi 0, %s107
      %s131 = sphi 0, %s133
      %s134 = sphi 0, %s131
      %s135 = sphi 0, %s134
      %s151 = sphi 0, %s135
    $region4: #{decoder_forward.20} parent=1 // loop_header_branch
      %21 = sbr.rel (%p19) target = $region8
    $region5: #{decoder_forward.20} parent=1 // loop_body
      %s23 = ssub.s32 %s18, 1
      %s24 = ssub.s32 %s18, 2
      %s34 = sadd.s32 1, %s27
      %p35 = scmp.ge.s32.totalorder %s34, 1
      %s36 = scalar_select %p35, 0, %s34
      %s37 = sadd.s32 1, %s26
      %s38 = scalar_select %p35, %s37, %s26
      %p39 = scmp.ge.s32.totalorder %s38, 8
      %s40 = scalar_select %p39, 0, %s38
      %s41 = sadd.s32 1, %s25
      %s42 = scalar_select %p39, %s41, %s25
      %p43 = scmp.ge.s32.totalorder %s42, 2
      %s44 = scalar_select %p43, 0, %s42
      %s45 = ssub.s32 %s25, %s44
      %s46 = ssub.s32 %s27, %s36
      %s47 = sor.u32 %s45, %s46
      %p48 = scmp.eq.s32.totalorder %s47, 0
      %s50 = sadd.s32 %s49, 1
      %s51 = scalar_select %p48, %s49, %s50
      %p54 = pneg %p48
      %p55 = scmp.eq.s32.totalorder %s18, 15
      %p56 = por %p54, %p55
      %p57 = scmp.ne.s32.totalorder %s49, %s52
      %p58 = scmp.eq.s32.totalorder %s18, 0
      %p59 = por %p57, %p58
      %p60 = scmp.ne.s32.totalorder %s49, %s52
      %p61 = scmp.eq.s32.totalorder %s23, 15
      %p62 = por %p60, %p61
      %p63 = scmp.ne.s32.totalorder %s52, %s53
      %p64 = scmp.eq.s32.totalorder %s23, 0
      %p65 = por %p63, %p64
      %p66 = scmp.ne.s32.totalorder %s52, %s53
      %p67 = scmp.eq.s32.totalorder %s24, 15
      %p68 = por %p66, %p67
      %p70 = scmp.ne.s32.totalorder %s53, %s69
      %p71 = scmp.eq.s32.totalorder %s24, 0
      %p72 = por %p70, %p71
      %s73 = ssub.s32 %s26, %s40
      %s74 = ssub.s32 %s27, %s36
      %s75 = sor.u32 %s73, %s74
      %p76 = scmp.eq.s32.totalorder %s75, 0
      %s78 = sadd.s32 %s77, 1
      %s79 = scalar_select %p76, %s77, %s78
      %p82 = pneg %p76
      %p83 = scmp.eq.s32.totalorder %s18, 15
      %p84 = por %p82, %p83
      %p85 = scmp.ne.s32.totalorder %s77, %s80
      %p86 = scmp.eq.s32.totalorder %s18, 0
      %p87 = por %p85, %p86
      %p88 = scmp.ne.s32.totalorder %s77, %s80
      %p89 = scmp.eq.s32.totalorder %s23, 15
      %p90 = por %p88, %p89
      %p91 = scmp.ne.s32.totalorder %s80, %s81
      %p92 = scmp.eq.s32.totalorder %s23, 0
      %p93 = por %p91, %p92
      %p94 = scmp.ne.s32.totalorder %s80, %s81
      %p95 = scmp.eq.s32.totalorder %s24, 15
      %p96 = por %p94, %p95
      %p98 = scmp.ne.s32.totalorder %s81, %s97
      %p99 = scmp.eq.s32.totalorder %s24, 0
      %p100 = por %p98, %p99
      %s101 = ssub.s32 %s26, %s40
      %p102 = scmp.eq.s32.totalorder %s101, 0
      %s104 = sadd.s32 %s103, 1
      %s105 = scalar_select %p102, %s103, %s104
      %p108 = pneg %p102
      %p109 = scmp.eq.s32.totalorder %s18, 15
      %p110 = por %p108, %p109
      %p111 = scmp.ne.s32.totalorder %s103, %s106
      %p112 = scmp.eq.s32.totalorder %s18, 0
      %p113 = por %p111, %p112
      %p114 = scmp.ne.s32.totalorder %s103, %s106
      %p115 = scmp.eq.s32.totalorder %s23, 15
      %p116 = por %p114, %p115
      %p117 = scmp.ne.s32.totalorder %s106, %s107
      %p118 = scmp.eq.s32.totalorder %s23, 0
      %p119 = por %p117, %p118
      %p120 = scmp.ne.s32.totalorder %s106, %s107
      %p121 = scmp.eq.s32.totalorder %s24, 15
      %p122 = por %p120, %p121
      %p124 = scmp.ne.s32.totalorder %s107, %s123
      %p125 = scmp.eq.s32.totalorder %s24, 0
      %p126 = por %p124, %p125
      %s127 = ssub.s32 %s25, %s44
      %s128 = ssub.s32 %s26, %s40
      %s129 = sor.u32 %s127, %s128
      %p130 = scmp.eq.s32.totalorder %s129, 0
      %s132 = sadd.s32 %s131, 1
      %s133 = scalar_select %p130, %s131, %s132
      %p136 = pneg %p130
      %p137 = scmp.eq.s32.totalorder %s18, 15
      %p138 = por %p136, %p137
      %p139 = scmp.ne.s32.totalorder %s131, %s134
      %p140 = scmp.eq.s32.totalorder %s18, 0
      %p141 = por %p139, %p140
      %p142 = scmp.ne.s32.totalorder %s131, %s134
      %p143 = scmp.eq.s32.totalorder %s23, 15
      %p144 = por %p142, %p143
      %p145 = scmp.ne.s32.totalorder %s134, %s135
      %p146 = scmp.eq.s32.totalorder %s23, 0
      %p147 = por %p145, %p146
      %p148 = scmp.ne.s32.totalorder %s134, %s135
      %p149 = scmp.eq.s32.totalorder %s24, 15
      %p150 = por %p148, %p149
      %p152 = scmp.ne.s32.totalorder %s135, %s151
      %p153 = scmp.eq.s32.totalorder %s24, 0
      %p154 = por %p152, %p153
      %p155 = scmp.le.s32.totalorder 1, %s18
      %p156 = scmp.lt.s32.totalorder %s18, 17
      %p157 = pnand %p155, %p156
      %p158 = pneg %p157
      // Predicated region
      $region9: #{decoder_forward.20} parent=5 // pred_check
        _
      $region10: #{decoder_forward.20} parent=5 // pred_check_branch
        %160 = sbr.rel (%p157) target = $region12
      $region11: #{decoder_forward.20} parent=5 // pred_region
        %s161 = ssub.s32 %s18, 1
      $region12: #{decoder_forward.20} parent=5 // pred_fallthru
        _
      %p162 = scmp.lt.s32.totalorder %s18, 16
      // Predicated region
      $region13: #{decoder_forward.20} parent=5 // pred_check
        %p163 = pneg %p162
      $region14: #{decoder_forward.20} parent=5 // pred_check_branch
        %165 = sbr.rel (%p163) target = $region16
      $region15: #{decoder_forward.20} parent=5 // pred_region
        // Predicated region
        $region17: #{decoder_forward.20} parent=15 // pred_check
          %p166 = pneg %p59
        $region18: #{decoder_forward.20} parent=15 // pred_check_branch
          %168 = sbr.rel (%p166) target = $region20
        $region19: #{decoder_forward.20} parent=15 // pred_region
          %s169 = sand.u32 %s49, 1
          %s170 = scalar_lea.sflag [#allocation4], %s169
          %s171 = sand.u32 %s49, 1
          %s172 = smul.addr %s171, 4
          %s173 = scalar_lea.vmem [#allocation3], %s172
          %s175 = ssub.s32 64, 64
          %176 = vsyncadd %s170, %s175
          %s177 = sadd.s32 %s27, %s25
          %s178 = smul.addr %s177, 64
          %s179 = scalar_lea.hbm %s0, %s178
          %s181 = sshll.u32 %s173, 4
          %s182 = int_to_ptr.vmem [resolvable:$true] %s181
          %184 = dma.hbm_to_vmem [thread:$0]  %s179, 64, %s182, %s170
        $region20: #{decoder_forward.20} parent=15 // pred_fallthru
          _
        // Predicated region
        $region21: #{decoder_forward.20} parent=15 // pred_check
          %p185 = pneg %p87
        $region22: #{decoder_forward.20} parent=15 // pred_check_branch
          %187 = sbr.rel (%p185) target = $region24
        $region23: #{decoder_forward.20} parent=15 // pred_region
          %s188 = sand.u32 %s18, 1
          %s189 = scalar_lea.sflag [#allocation7], %s188
          %s190 = sand.u32 %s77, 1
          %s191 = smul.addr %s190, 16
          %s192 = scalar_lea.vmem [#allocation6], %s191
          %s193 = smul.u32 4, %s27
          %s195 = ssub.s32 256, 256
          %196 = vsyncadd %s189, %s195
          %s197 = smul.addr %s26, 4
          %s198 = sadd.s32 %s193, %s197
          %s199 = smul.addr %s198, 64
          %s200 = scalar_lea.hbm %s1, %s199
          %s201 = sshll.u32 %s192, 4
          %s202 = int_to_ptr.vmem [resolvable:$true] %s201
          %207 = dma.hbm_to_vmem [thread:$0]  %s200, 256, %s202, %s189, 64, 64, 4
        $region24: #{decoder_forward.20} parent=15 // pred_fallthru
          _
        // Predicated region
        $region25: #{decoder_forward.20} parent=15 // pred_check
          %p208 = pneg %p113
        $region26: #{decoder_forward.20} parent=15 // pred_check_branch
          %210 = sbr.rel (%p208) target = $region28
        $region27: #{decoder_forward.20} parent=15 // pred_region
          %s211 = sand.u32 %s18, 1
          %s212 = scalar_lea.sflag [#allocation7], %s211
          %s213 = sand.u32 %s103, 1
          %s214 = scalar_lea.vmem [#allocation8], %s213
          %s216 = ssub.s32 16, 16
          %217 = vsyncadd %s212, %s216
          %s218 = smul.addr %s26, 16
          %s219 = scalar_lea.hbm %s2, %s218
          %s221 = sshll.u32 %s214, 4
          %s222 = int_to_ptr.vmem [resolvable:$true] %s221
          %224 = dma.hbm_to_vmem [thread:$0]  %s219, 16, %s222, %s212
        $region28: #{decoder_forward.20} parent=15 // pred_fallthru
          _
      $region16: #{decoder_forward.20} parent=5 // pred_fallthru
        _
      %p225 = scmp.le.s32.totalorder 1, %s18
      %p226 = scmp.lt.s32.totalorder %s18, 17
      %p227 = pnand %p225, %p226
      %p228 = pneg %p227
      // Predicated region
      $region29: #{decoder_forward.20} parent=5 // pred_check
        _
      $region30: #{decoder_forward.20} parent=5 // pred_check_branch
        %230 = sbr.rel (%p227) target = $region32
      $region31: #{decoder_forward.20} parent=5 // pred_region
        %s231 = ssub.s32 %s18, 1
        %s232 = sand.u32 %s52, 1
        %s233 = scalar_lea.sflag [#allocation4], %s232
        %s234 = sand.u32 %s52, 1
        %s235 = smul.addr %s234, 4
        %s236 = scalar_lea.vmem [#allocation3], %s235
        // Predicated region
        $region33: #{decoder_forward.20} parent=31 // pred_check
          %p237 = pneg %p65
        $region34: #{decoder_forward.20} parent=31 // pred_check_branch
          %239 = sbr.rel (%p237) target = $region36
        $region35: #{decoder_forward.20} parent=31 // pred_region
          %240 = dma.done %s233, 64
        $region36: #{decoder_forward.20} parent=31 // pred_fallthru
          _
        %s241 = sand.u32 %s23, 1
        %s242 = scalar_lea.sflag [#allocation7], %s241
        %s243 = sand.u32 %s80, 1
        %s244 = smul.addr %s243, 16
        %s245 = scalar_lea.vmem [#allocation6], %s244
        // Predicated region
        $region37: #{decoder_forward.20} parent=31 // pred_check
          %p246 = pneg %p93
        $region38: #{decoder_forward.20} parent=31 // pred_check_branch
          %248 = sbr.rel (%p246) target = $region40
        $region39: #{decoder_forward.20} parent=31 // pred_region
          %249 = dma.done %s242, 256
        $region40: #{decoder_forward.20} parent=31 // pred_fallthru
          _
        %s250 = sand.u32 %s23, 1
        %s251 = scalar_lea.sflag [#allocation7], %s250
        %s252 = sand.u32 %s106, 1
        %s253 = scalar_lea.vmem [#allocation8], %s252
        // Predicated region
        $region41: #{decoder_forward.20} parent=31 // pred_check
          %p254 = pneg %p119
        $region42: #{decoder_forward.20} parent=31 // pred_check_branch
          %256 = sbr.rel (%p254) target = $region44
        $region43: #{decoder_forward.20} parent=31 // pred_region
          %257 = dma.done %s251, 16
        $region44: #{decoder_forward.20} parent=31 // pred_fallthru
          _
        %s258 = sand.u32 %s52, 1
        %s259 = scalar_lea.sflag [#allocation4], %s258
        %s260 = sand.u32 %s52, 1
        %s261 = smul.addr %s260, 4
        %s262 = scalar_lea.vmem [#allocation3], %s261
        %p263 = pneg %p65
        %p264 = pneg %p62
        %s265 = sand.u32 %s23, 1
        %s266 = scalar_lea.sflag [#allocation7], %s265
        %s267 = sand.u32 %s80, 1
        %s268 = smul.addr %s267, 16
        %s269 = scalar_lea.vmem [#allocation6], %s268
        %p270 = pneg %p93
        %p271 = pneg %p90
        %s272 = sand.u32 %s23, 1
        %s273 = scalar_lea.sflag [#allocation7], %s272
        %s274 = sand.u32 %s106, 1
        %s275 = scalar_lea.vmem [#allocation8], %s274
        %p276 = pneg %p119
        %p277 = pneg %p116
        %p278 = pneg %p147
        %p279 = pneg %p144
        %s280 = sand.u32 %s134, 1
        %s281 = scalar_lea.sflag [#allocation5], %s280
        %s282 = sand.u32 %s134, 1
        %s283 = smul.addr %s282, 4
        %s284 = scalar_lea.vmem [#allocation9], %s283
        %s285 = smul.u32 4, %s30
        %p287 = scmp.eq.s32.totalorder %s30, 0
        // Predicated region
        $region45: #{decoder_forward.20} parent=31 // pred_check
          %p288 = pneg %p287
        $region46: #{decoder_forward.20} parent=31 // pred_check_branch
          %290 = sbr.rel (%p288) target = $region48
        $region47: #{decoder_forward.20} parent=31 // pred_region
          %vm291 = vcmask 64512
          %292 = vst.msk [vmem:[#allocation2] sm:$0xff] %vm291, 0.0
        $region48: #{decoder_forward.20} parent=31 // pred_fallthru
          _
        %v293 = vld [vmem:[#allocation2] sm:$0xff]
        %v294 = vld [vmem:[%s236] sm:$0xf]
        %v295 = vld [vmem:[%s245] sm:$0xf]
        %v296 = vld [vmem:[%s245 + $0x4] sm:$0xf]
        %v297 = vld [vmem:[%s245 + $0x8] sm:$0xf]
        %v298 = vld [vmem:[%s245 + $0xc] sm:$0xf]
        %v303 = vunpack.c.l.b16 %v295
        %v304 = vunpack.c.l.b16 %v296
        %v305 = vunpack.c.l.b16 %v297
        %v306 = vunpack.c.l.b16 %v298
        %v307 = vpack.c.b16 %v304, %v303
        %v308 = vpack.c.b16 %v306, %v305
        %vm311 = vcmask 261120
        %v313 = vsel %vm311, %v294, 0
        %315 = vmatprep.subr.bf16.mxu0 0
        %316 = vmatpush1.bf16.msra.mxu0 %v307
        %317 = vmatprep.subr.bf16.mxu0 0
        %318 = vmatpush1.bf16.msra.mxu0 %v308
        %319 = vmatprep.subr.bf16.mxu0 0
        %320 = vmatpush1.bf16.msra.mxu0 0
        %321 = vmatprep.subr.bf16.mxu0 0
        %322 = vmatpush1.bf16.msra.mxu0 0
        %323 = vmatprep.subr.bf16.mxu0 0
        %324 = vmatpush1.bf16.msra.mxu0 0
        %325 = vmatprep.subr.bf16.mxu0 0
        %326 = vmatpush1.bf16.msra.mxu0 0
        %327 = vmatprep.subr.bf16.mxu0 0
        %328 = vmatpush1.bf16.msra.mxu0 0
        %329 = vmatprep.subr.bf16.mxu0 0
        %330 = vmatpush1.bf16.msra.mxu0 0
        %331 = vmatprep.subr.bf16.mxu0 0
        %332 = vmatpush1.bf16.msra.mxu0 0
        %333 = vmatprep.subr.bf16.mxu0 0
        %334 = vmatpush1.bf16.msra.mxu0 0
        %335 = vmatprep.subr.bf16.mxu0 0
        %336 = vmatpush1.bf16.msra.mxu0 0
        %337 = vmatprep.subr.bf16.mxu0 0
        %338 = vmatpush1.bf16.msra.mxu0 0
        %339 = vmatprep.subr.bf16.mxu0 0
        %340 = vmatpush1.bf16.msra.mxu0 0
        %341 = vmatprep.subr.bf16.mxu0 0
        %342 = vmatpush1.bf16.msra.mxu0 0
        %343 = vmatprep.subr.bf16.mxu0 0
        %344 = vmatpush1.bf16.msra.mxu0 0
        %345 = vmatprep.subr.bf16.mxu0 0
        %346 = vmatpush1.bf16.msra.mxu0 0
        %347 = vmatprep.mubr.bf16.mxu0 0
        %348 = vmatmul.mubr.bf16.gmra.mrb[0].mxu0 %v313
        %v349 = vpop.f32.mrb[0].mxu0
        %v350 = vadd.f32 0.0, %v349
        %v351 = vpop.f32.mrb[0].mxu0
        %v352 = vpop.f32.mrb[0].mxu0
        %v353 = vpop.f32.mrb[0].mxu0
        %354 = vdwg.mxu0
        %v355 = vadd.f32 %v293, %v350
        %vm356 = vcmask 64512
        %357 = vst.msk [vmem:[#allocation2] sm:$0xff] %vm356, %v355
        // Predicated region
        $region49: #{decoder_forward.20} parent=31 // pred_check
          %p358 = pneg %p287
        $region50: #{decoder_forward.20} parent=31 // pred_check_branch
          %360 = sbr.rel (%p358) target = $region52
        $region51: #{decoder_forward.20} parent=31 // pred_region
          %v361 = vld [vmem:[#allocation2] sm:$0xff]
          %v362 = vld [vmem:[%s253] sm:$0x1]
          %v364 = vlaneseq
          %v365 = vshrl.u32 %v364, 7
          %v366 = vsub.s32 0, %v365
          %v367 = vrot.slane %v362, %v366
          %v369 = vadd.f32 %v361, %v367
          %v370 = vpack.c.bf16 %v369, %v369
          %vm371 = vcmask 60416
          %372 = vst.msk [vmem:[%s284] sm:$0xf] %vm371, %v370
        $region52: #{decoder_forward.20} parent=31 // pred_fallthru
          _
        %s373 = sand.u32 %s134, 1
        %s374 = scalar_lea.sflag [#allocation5], %s373
        %s375 = sand.u32 %s134, 1
        %s376 = smul.addr %s375, 4
        %s377 = scalar_lea.vmem [#allocation9], %s376
        // Predicated region
        $region53: #{decoder_forward.20} parent=31 // pred_check
          %p378 = pneg %p144
        $region54: #{decoder_forward.20} parent=31 // pred_check_branch
          %380 = sbr.rel (%p378) target = $region56
        $region55: #{decoder_forward.20} parent=31 // pred_region
          %s382 = ssub.s32 64, 64
          %383 = vsyncadd %s374, %s382
          %s384 = smul.addr %s28, 8
          %s385 = sadd.s32 %s29, %s384
          %s386 = smul.addr %s385, 64
          %s387 = scalar_lea.hbm %s3, %s386
          %s389 = sshll.u32 %s377, 4
          %s390 = int_to_ptr.vmem [resolvable:$true] %s389
          %392 = dma.vmem_to_hbm [thread:$0]  %s390, 64, %s387, %s374
        $region56: #{decoder_forward.20} parent=31 // pred_fallthru
          _
      $region32: #{decoder_forward.20} parent=5 // pred_fallthru
        _
      %p393 = scmp.le.s32.totalorder 2, %s18
      // Predicated region
      $region57: #{decoder_forward.20} parent=5 // pred_check
        %p394 = pneg %p393
      $region58: #{decoder_forward.20} parent=5 // pred_check_branch
        %396 = sbr.rel (%p394) target = $region60
      $region59: #{decoder_forward.20} parent=5 // pred_region
        %s397 = ssub.s32 %s18, 2
        // Predicated region
        $region61: #{decoder_forward.20} parent=59 // pred_check
          %p398 = pneg %p150
        $region62: #{decoder_forward.20} parent=59 // pred_check_branch
          %400 = sbr.rel (%p398) target = $region64
        $region63: #{decoder_forward.20} parent=59 // pred_region
          %s401 = sand.u32 %s135, 1
          %s402 = scalar_lea.sflag [#allocation5], %s401
          %s403 = sand.u32 %s135, 1
          %s404 = smul.addr %s403, 4
          %s405 = scalar_lea.vmem [#allocation9], %s404
          %406 = dma.done %s402, 64
        $region64: #{decoder_forward.20} parent=59 // pred_fallthru
          _
      $region60: #{decoder_forward.20} parent=5 // pred_fallthru
        _
    $region6: #{decoder_forward.20} parent=1 // loop_footer
      %s22 = sadd.s32 1, %s18
    $region7: #{decoder_forward.20} parent=1 // loop_footer_branch
      %17 = sbr.rel target = $region3
    $region8: #{decoder_forward.20} parent=1 // loop_exit
      _
    %407 = vsyncpa [#allocation4], 1
    %s408 = scalar_lea.sflag [#allocation4], 1
    %409 = vsyncpa %s408, 1
    %410 = vsyncpa [#allocation7], 1
    %s411 = scalar_lea.sflag [#allocation7], 1
    %412 = vsyncpa %s411, 1
    %413 = vsyncpa [#allocation5], 1
    %s414 = scalar_lea.sflag [#allocation5], 1
    %415 = vsyncpa %s414, 1

// kernel: decoder_forward.21
$region0: #{decoder_forward.21}
  #allocation0 [shape = 'u32[]', space=smem, size = 0x4, offset = 0x4, fixed_abs, tag = 'smem constant byte address 0x4 - core index']
  #allocation1 [shape = 'u32[144,128]{1,0:T(1,128)}', space=vmem, size = 0x12000, scoped, tag = 'internal scratch']
  #allocation2 [shape = 'f32[8,1]{1,0:T(8,128)}', space=vmem, size = 0x1000, scoped, tag = 'scratch operand']
  #allocation3 [shape = 'f32[8,1]{1,0:T(8,128)}', space=vmem, size = 0x1000, scoped, tag = 'scratch operand']
  #allocation4 [shape = 'f32[8,8]{1,0:T(8,128)}', space=vmem, size = 0x1000, scoped, tag = 'scratch operand']
  %s0 = inlined_call_operand.hbm [shape: bf16[2,4,8,8], index: 0, kind: input, shape index: {}]
  %s1 = inlined_call_operand.hbm [shape: bf16[2,8,8,8], index: 1, kind: input, shape index: {}, may-alias: {1,2}]
  %s2 = inlined_call_operand.hbm [shape: bf16[2,8,8,8], index: 2, kind: input, shape index: {}, may-alias: {1,2}]
  %s3 = inlined_call_operand.hbm [shape: bf16[2,4,8,8], index: 3, kind: output, shape index: {}]
  %s4 = sld [smem:[#allocation0]]
  $region65: #{decoder_forward.21} parent=0
    _
  %s6 = ssub.s32 1, %s4
  %s7 = scalar_select 0, %s6, %s4
  $region1: #{decoder_forward.21} parent=0
    #allocation5 [shape = 'u8[4096]{0}', space=vmem, size = 0x1000, scoped, tag = 'input window, operand 0']
    #allocation6 [shape = 's32[2]{0}', space=sflag, size = 0x8, scoped, tag = 'scoped memory for decoder_forward.21']
    #allocation7 [shape = 's32[2]{0}', space=sflag, size = 0x8, scoped, tag = 'scoped memory for decoder_forward.21']
    #allocation8 [shape = 'u8[4096]{0}', space=vmem, size = 0x1000, scoped, tag = 'input window, operand 1']
    #allocation9 [shape = 's32[2]{0}', space=sflag, size = 0x8, scoped, tag = 'scoped memory for decoder_forward.21']
    #allocation10 [shape = 'u8[4096]{0}', space=vmem, size = 0x1000, scoped, tag = 'input window, operand 2']
    #allocation11 [shape = 'u8[4096]{0}', space=vmem, size = 0x1000, scoped, tag = 'output window, operand 0']
    %8 = vsyncpa [#allocation6], 0
    %s9 = scalar_lea.sflag [#allocation6], 1
    %10 = vsyncpa %s9, 0
    %11 = vsyncpa [#allocation9], 0
    %s12 = scalar_lea.sflag [#allocation9], 1
    %13 = vsyncpa %s12, 0
    %14 = vsyncpa [#allocation7], 0
    %s15 = scalar_lea.sflag [#allocation7], 1
    %16 = vsyncpa %s15, 0
    loop: start=0, step=1, limit=10
    $region2: #{decoder_forward.21} parent=1 // loop_pre_header
      _
    $region3: #{decoder_forward.21} parent=1 // loop_header
      %s18 = sphi 0, %s22
      %p19 = scmp.ge.s32.totalorder %s18, 10
      %s25 = sphi 0, %s51
      %s26 = sphi 0, %s47
      %s27 = sphi 0, %s43
      %s28 = sphi 0, %s39
      %s29 = sphi 0, %s25
      %s30 = sphi 0, %s26
      %s31 = sphi 0, %s27
      %s32 = sphi 0, %s28
      %s33 = sphi 0, %s29
      %s34 = sphi 0, %s30
      %s35 = sphi 0, %s31
      %s36 = sphi 0, %s32
      %s58 = sphi 0, %s60
      %s61 = sphi 0, %s58
      %s62 = sphi 0, %s61
      %s78 = sphi 0, %s62
      %s88 = sphi 0, %s90
      %s91 = sphi 0, %s88
      %s92 = sphi 0, %s91
      %s108 = sphi 0, %s92
      %s120 = sphi 0, %s122
      %s123 = sphi 0, %s120
      %s124 = sphi 0, %s123
      %s140 = sphi 0, %s124
      %s150 = sphi 0, %s152
      %s153 = sphi 0, %s150
      %s154 = sphi 0, %s153
      %s170 = sphi 0, %s154
    $region4: #{decoder_forward.21} parent=1 // loop_header_branch
      %21 = sbr.rel (%p19) target = $region8
    $region5: #{decoder_forward.21} parent=1 // loop_body
      %s23 = ssub.s32 %s18, 1
      %s24 = ssub.s32 %s18, 2
      %s37 = sadd.s32 1, %s28
      %p38 = scmp.ge.s32.totalorder %s37, 1
      %s39 = scalar_select %p38, 0, %s37
      %s40 = sadd.s32 1, %s27
      %s41 = scalar_select %p38, %s40, %s27
      %p42 = scmp.ge.s32.totalorder %s41, 1
      %s43 = scalar_select %p42, 0, %s41
      %s44 = sadd.s32 1, %s26
      %s45 = scalar_select %p42, %s44, %s26
      %p46 = scmp.ge.s32.totalorder %s45, 4
      %s47 = scalar_select %p46, 0, %s45
      %s48 = sadd.s32 1, %s25
      %s49 = scalar_select %p46, %s48, %s25
      %p50 = scmp.ge.s32.totalorder %s49, 2
      %s51 = scalar_select %p50, 0, %s49
      %s52 = ssub.s32 %s25, %s51
      %s53 = ssub.s32 %s26, %s47
      %s54 = sor.u32 %s52, %s53
      %s55 = ssub.s32 %s27, %s43
      %s56 = sor.u32 %s54, %s55
      %p57 = scmp.eq.s32.totalorder %s56, 0
      %s59 = sadd.s32 %s58, 1
      %s60 = scalar_select %p57, %s58, %s59
      %p63 = pneg %p57
      %p64 = scmp.eq.s32.totalorder %s18, 7
      %p65 = por %p63, %p64
      %p66 = scmp.ne.s32.totalorder %s58, %s61
      %p67 = scmp.eq.s32.totalorder %s18, 0
      %p68 = por %p66, %p67
      %p69 = scmp.ne.s32.totalorder %s58, %s61
      %p70 = scmp.eq.s32.totalorder %s23, 7
      %p71 = por %p69, %p70
      %p72 = scmp.ne.s32.totalorder %s61, %s62
      %p73 = scmp.eq.s32.totalorder %s23, 0
      %p74 = por %p72, %p73
      %p75 = scmp.ne.s32.totalorder %s61, %s62
      %p76 = scmp.eq.s32.totalorder %s24, 7
      %p77 = por %p75, %p76
      %p79 = scmp.ne.s32.totalorder %s62, %s78
      %p80 = scmp.eq.s32.totalorder %s24, 0
      %p81 = por %p79, %p80
      %s82 = ssub.s32 %s25, %s51
      %s83 = ssub.s32 %s26, %s47
      %s84 = sor.u32 %s82, %s83
      %s85 = ssub.s32 %s28, %s39
      %s86 = sor.u32 %s84, %s85
      %p87 = scmp.eq.s32.totalorder %s86, 0
      %s89 = sadd.s32 %s88, 1
      %s90 = scalar_select %p87, %s88, %s89
      %p93 = pneg %p87
      %p94 = scmp.eq.s32.totalorder %s18, 7
      %p95 = por %p93, %p94
      %p96 = scmp.ne.s32.totalorder %s88, %s91
      %p97 = scmp.eq.s32.totalorder %s18, 0
      %p98 = por %p96, %p97
      %p99 = scmp.ne.s32.totalorder %s88, %s91
      %p100 = scmp.eq.s32.totalorder %s23, 7
      %p101 = por %p99, %p100
      %p102 = scmp.ne.s32.totalorder %s91, %s92
      %p103 = scmp.eq.s32.totalorder %s23, 0
      %p104 = por %p102, %p103
      %p105 = scmp.ne.s32.totalorder %s91, %s92
      %p106 = scmp.eq.s32.totalorder %s24, 7
      %p107 = por %p105, %p106
      %p109 = scmp.ne.s32.totalorder %s92, %s108
      %p110 = scmp.eq.s32.totalorder %s24, 0
      %p111 = por %p109, %p110
      %s112 = sadd.s32 %s26, 4
      %s113 = sadd.s32 %s47, 4
      %s114 = ssub.s32 %s25, %s51
      %s115 = ssub.s32 %s112, %s113
      %s116 = sor.u32 %s114, %s115
      %s117 = ssub.s32 %s28, %s39
      %s118 = sor.u32 %s116, %s117
      %p119 = scmp.eq.s32.totalorder %s118, 0
      %s121 = sadd.s32 %s120, 1
      %s122 = scalar_select %p119, %s120, %s121
      %p125 = pneg %p119
      %p126 = scmp.eq.s32.totalorder %s18, 7
      %p127 = por %p125, %p126
      %p128 = scmp.ne.s32.totalorder %s120, %s123
      %p129 = scmp.eq.s32.totalorder %s18, 0
      %p130 = por %p128, %p129
      %p131 = scmp.ne.s32.totalorder %s120, %s123
      %p132 = scmp.eq.s32.totalorder %s23, 7
      %p133 = por %p131, %p132
      %p134 = scmp.ne.s32.totalorder %s123, %s124
      %p135 = scmp.eq.s32.totalorder %s23, 0
      %p136 = por %p134, %p135
      %p137 = scmp.ne.s32.totalorder %s123, %s124
      %p138 = scmp.eq.s32.totalorder %s24, 7
      %p139 = por %p137, %p138
      %p141 = scmp.ne.s32.totalorder %s124, %s140
      %p142 = scmp.eq.s32.totalorder %s24, 0
      %p143 = por %p141, %p142
      %s144 = ssub.s32 %s25, %s51
      %s145 = ssub.s32 %s26, %s47
      %s146 = sor.u32 %s144, %s145
      %s147 = ssub.s32 %s27, %s43
      %s148 = sor.u32 %s146, %s147
      %p149 = scmp.eq.s32.totalorder %s148, 0
      %s151 = sadd.s32 %s150, 1
      %s152 = scalar_select %p149, %s150, %s151
      %p155 = pneg %p149
      %p156 = scmp.eq.s32.totalorder %s18, 7
      %p157 = por %p155, %p156
      %p158 = scmp.ne.s32.totalorder %s150, %s153
      %p159 = scmp.eq.s32.totalorder %s18, 0
      %p160 = por %p158, %p159
      %p161 = scmp.ne.s32.totalorder %s150, %s153
      %p162 = scmp.eq.s32.totalorder %s23, 7
      %p163 = por %p161, %p162
      %p164 = scmp.ne.s32.totalorder %s153, %s154
      %p165 = scmp.eq.s32.totalorder %s23, 0
      %p166 = por %p164, %p165
      %p167 = scmp.ne.s32.totalorder %s153, %s154
      %p168 = scmp.eq.s32.totalorder %s24, 7
      %p169 = por %p167, %p168
      %p171 = scmp.ne.s32.totalorder %s154, %s170
      %p172 = scmp.eq.s32.totalorder %s24, 0
      %p173 = por %p171, %p172
      %p174 = scmp.le.s32.totalorder 1, %s18
      %p175 = scmp.lt.s32.totalorder %s18, 9
      %p176 = pnand %p174, %p175
      %p177 = pneg %p176
      // Predicated region
      $region9: #{decoder_forward.21} parent=5 // pred_check
        _
      $region10: #{decoder_forward.21} parent=5 // pred_check_branch
        %179 = sbr.rel (%p176) target = $region12
      $region11: #{decoder_forward.21} parent=5 // pred_region
        %s180 = ssub.s32 %s18, 1
      $region12: #{decoder_forward.21} parent=5 // pred_fallthru
        _
      %p181 = scmp.lt.s32.totalorder %s18, 8
      // Predicated region
      $region13: #{decoder_forward.21} parent=5 // pred_check
        %p182 = pneg %p181
      $region14: #{decoder_forward.21} parent=5 // pred_check_branch
        %184 = sbr.rel (%p182) target = $region16
      $region15: #{decoder_forward.21} parent=5 // pred_region
        // Predicated region
        $region17: #{decoder_forward.21} parent=15 // pred_check
          %p185 = pneg %p68
        $region18: #{decoder_forward.21} parent=15 // pred_check_branch
          %187 = sbr.rel (%p185) target = $region20
        $region19: #{decoder_forward.21} parent=15 // pred_region
          %s188 = sand.u32 %s58, 1
          %s189 = scalar_lea.sflag [#allocation6], %s188
          %s190 = sand.u32 %s58, 1
          %s191 = smul.addr %s190, 4
          %s192 = scalar_lea.vmem [#allocation5], %s191
          %s194 = ssub.s32 64, 64
          %195 = vsyncadd %s189, %s194
          %s196 = sadd.s32 %s27, %s26
          %s197 = smul.addr %s25, 4
          %s198 = sadd.s32 %s196, %s197
          %s199 = smul.addr %s198, 64
          %s200 = scalar_lea.hbm %s0, %s199
          %s202 = sshll.u32 %s192, 4
          %s203 = int_to_ptr.vmem [resolvable:$true] %s202
          %205 = dma.hbm_to_vmem [thread:$0]  %s200, 64, %s203, %s189
        $region20: #{decoder_forward.21} parent=15 // pred_fallthru
          _
        // Predicated region
        $region21: #{decoder_forward.21} parent=15 // pred_check
          %p206 = pneg %p98
        $region22: #{decoder_forward.21} parent=15 // pred_check_branch
          %208 = sbr.rel (%p206) target = $region24
        $region23: #{decoder_forward.21} parent=15 // pred_region
          %s209 = sand.u32 %s18, 1
          %s210 = scalar_lea.sflag [#allocation9], %s209
          %s211 = sand.u32 %s88, 1
          %s212 = smul.addr %s211, 4
          %s213 = scalar_lea.vmem [#allocation8], %s212
          %s215 = ssub.s32 64, 64
          %216 = vsyncadd %s210, %s215
          %s217 = sadd.s32 %s28, %s26
          %s218 = smul.addr %s25, 8
          %s219 = sadd.s32 %s217, %s218
          %s220 = smul.addr %s219, 64
          %s221 = scalar_lea.hbm %s1, %s220
          %s223 = sshll.u32 %s213, 4
          %s224 = int_to_ptr.vmem [resolvable:$true] %s223
          %226 = dma.hbm_to_vmem [thread:$0]  %s221, 64, %s224, %s210
        $region24: #{decoder_forward.21} parent=15 // pred_fallthru
          _
        // Predicated region
        $region25: #{decoder_forward.21} parent=15 // pred_check
          %p227 = pneg %p130
        $region26: #{decoder_forward.21} parent=15 // pred_check_branch
          %229 = sbr.rel (%p227) target = $region28
        $region27: #{decoder_forward.21} parent=15 // pred_region
          %s230 = sand.u32 %s18, 1
          %s231 = scalar_lea.sflag [#allocation9], %s230
          %s232 = sand.u32 %s120, 1
          %s233 = smul.addr %s232, 4
          %s234 = scalar_lea.vmem [#allocation10], %s233
          %s235 = sadd.s32 %s26, 4
          %s237 = ssub.s32 64, 64
          %238 = vsyncadd %s231, %s237
          %s239 = sadd.s32 %s28, %s235
          %s240 = smul.addr %s25, 8
          %s241 = sadd.s32 %s239, %s240
          %s242 = smul.addr %s241, 64
          %s243 = scalar_lea.hbm %s2, %s242
          %s245 = sshll.u32 %s234, 4
          %s246 = int_to_ptr.vmem [resolvable:$true] %s245
          %248 = dma.hbm_to_vmem [thread:$0]  %s243, 64, %s246, %s231
        $region28: #{decoder_forward.21} parent=15 // pred_fallthru
          _
      $region16: #{decoder_forward.21} parent=5 // pred_fallthru
        _
      %p249 = scmp.le.s32.totalorder 1, %s18
      %p250 = scmp.lt.s32.totalorder %s18, 9
      %p251 = pnand %p249, %p250
      %p252 = pneg %p251
      // Predicated region
      $region29: #{decoder_forward.21} parent=5 // pred_check
        _
      $region30: #{decoder_forward.21} parent=5 // pred_check_branch
        %254 = sbr.rel (%p251) target = $region32
      $region31: #{decoder_forward.21} parent=5 // pred_region
        %s255 = ssub.s32 %s18, 1
        %s256 = sand.u32 %s61, 1
        %s257 = scalar_lea.sflag [#allocation6], %s256
        %s258 = sand.u32 %s61, 1
        %s259 = smul.addr %s258, 4
        %s260 = scalar_lea.vmem [#allocation5], %s259
        // Predicated region
        $region33: #{decoder_forward.21} parent=31 // pred_check
          %p261 = pneg %p74
        $region34: #{decoder_forward.21} parent=31 // pred_check_branch
          %263 = sbr.rel (%p261) target = $region36
        $region35: #{decoder_forward.21} parent=31 // pred_region
          %264 = dma.done %s257, 64
        $region36: #{decoder_forward.21} parent=31 // pred_fallthru
          _
        %s265 = sand.u32 %s23, 1
        %s266 = scalar_lea.sflag [#allocation9], %s265
        %s267 = sand.u32 %s91, 1
        %s268 = smul.addr %s267, 4
        %s269 = scalar_lea.vmem [#allocation8], %s268
        // Predicated region
        $region37: #{decoder_forward.21} parent=31 // pred_check
          %p270 = pneg %p104
        $region38: #{decoder_forward.21} parent=31 // pred_check_branch
          %272 = sbr.rel (%p270) target = $region40
        $region39: #{decoder_forward.21} parent=31 // pred_region
          %273 = dma.done %s266, 64
        $region40: #{decoder_forward.21} parent=31 // pred_fallthru
          _
        %s274 = sand.u32 %s23, 1
        %s275 = scalar_lea.sflag [#allocation9], %s274
        %s276 = sand.u32 %s123, 1
        %s277 = smul.addr %s276, 4
        %s278 = scalar_lea.vmem [#allocation10], %s277
        // Predicated region
        $region41: #{decoder_forward.21} parent=31 // pred_check
          %p279 = pneg %p136
        $region42: #{decoder_forward.21} parent=31 // pred_check_branch
          %281 = sbr.rel (%p279) target = $region44
        $region43: #{decoder_forward.21} parent=31 // pred_region
          %282 = dma.done %s275, 64
        $region44: #{decoder_forward.21} parent=31 // pred_fallthru
          _
        %s283 = sand.u32 %s61, 1
        %s284 = scalar_lea.sflag [#allocation6], %s283
        %s285 = sand.u32 %s61, 1
        %s286 = smul.addr %s285, 4
        %s287 = scalar_lea.vmem [#allocation5], %s286
        %p288 = pneg %p74
        %p289 = pneg %p71
        %s290 = sand.u32 %s23, 1
        %s291 = scalar_lea.sflag [#allocation9], %s290
        %s292 = sand.u32 %s91, 1
        %s293 = smul.addr %s292, 4
        %s294 = scalar_lea.vmem [#allocation8], %s293
        %p295 = pneg %p104
        %p296 = pneg %p101
        %s297 = sand.u32 %s23, 1
        %s298 = scalar_lea.sflag [#allocation9], %s297
        %s299 = sand.u32 %s123, 1
        %s300 = smul.addr %s299, 4
        %s301 = scalar_lea.vmem [#allocation10], %s300
        %p302 = pneg %p136
        %p303 = pneg %p133
        %p304 = pneg %p166
        %p305 = pneg %p163
        %s306 = sand.u32 %s153, 1
        %s307 = scalar_lea.sflag [#allocation7], %s306
        %s308 = sand.u32 %s153, 1
        %s309 = smul.addr %s308, 4
        %s310 = scalar_lea.vmem [#allocation11], %s309
        %s311 = sadd.s32 %s30, 4
        %p313 = scmp.eq.s32.totalorder %s32, 0
        // Predicated region
        $region45: #{decoder_forward.21} parent=31 // pred_check
          %p314 = pneg %p313
        $region46: #{decoder_forward.21} parent=31 // pred_check_branch
          %316 = sbr.rel (%p314) target = $region48
        $region47: #{decoder_forward.21} parent=31 // pred_region
          %vm317 = vcmask 7168
          %318 = vst.msk [vmem:[#allocation2] sm:$0xff] %vm317, -1e+30
          %319 = vst.msk [vmem:[#allocation3] sm:$0xff] %vm317, 0.0
          %vm320 = vcmask 64512
          %321 = vst.msk [vmem:[#allocation4] sm:$0xff] %vm320, 0.0
        $region48: #{decoder_forward.21} parent=31 // pred_fallthru
          _
        %v322 = vld [vmem:[%s260] sm:$0xf]
        %v323 = vld [vmem:[%s269] sm:$0xf]
        %v324 = vld [vmem:[%s278] sm:$0xf]
        %vm325 = vcmask 64512
        %v327 = vsel %vm325, %v322, 0
        %v330 = vsel %vm325, %v323, 0
        %332 = vmatprep.subr.bf16.mxu0 0
        %333 = vmatpush1.bf16.xpose.msra.mxu0 %v330
        %334 = vmatprep.subr.bf16.mxu0 0
        %335 = vmatpush1.bf16.xpose.msra.mxu0 0
        %336 = vmatprep.subr.bf16.mxu0 0
        %337 = vmatpush1.bf16.xpose.msra.mxu0 0
        %338 = vmatprep.subr.bf16.mxu0 0
        %339 = vmatpush1.bf16.xpose.msra.mxu0 0
        %340 = vmatprep.subr.bf16.mxu0 0
        %341 = vmatpush1.bf16.xpose.msra.mxu0 0
        %342 = vmatprep.subr.bf16.mxu0 0
        %343 = vmatpush1.bf16.xpose.msra.mxu0 0
        %344 = vmatprep.subr.bf16.mxu0 0
        %345 = vmatpush1.bf16.xpose.msra.mxu0 0
        %346 = vmatprep.subr.bf16.mxu0 0
        %347 = vmatpush1.bf16.xpose.msra.mxu0 0
        %348 = vmatprep.subr.bf16.mxu0 0
        %349 = vmatpush1.bf16.xpose.msra.mxu0 0
        %350 = vmatprep.subr.bf16.mxu0 0
        %351 = vmatpush1.bf16.xpose.msra.mxu0 0
        %352 = vmatprep.subr.bf16.mxu0 0
        %353 = vmatpush1.bf16.xpose.msra.mxu0 0
        %354 = vmatprep.subr.bf16.mxu0 0
        %355 = vmatpush1.bf16.xpose.msra.mxu0 0
        %356 = vmatprep.subr.bf16.mxu0 0
        %357 = vmatpush1.bf16.xpose.msra.mxu0 0
        %358 = vmatprep.subr.bf16.mxu0 0
        %359 = vmatpush1.bf16.xpose.msra.mxu0 0
        %360 = vmatprep.subr.bf16.mxu0 0
        %361 = vmatpush1.bf16.xpose.msra.mxu0 0
        %362 = vmatprep.subr.bf16.mxu0 0
        %363 = vmatpush1.bf16.xpose.msra.mxu0 0
        %364 = vmatprep.mubr.bf16.mxu0 0
        %365 = vmatmul.mubr.bf16.gmra.mrb[0].mxu0 %v327
        %v366 = vpop.f32.mrb[0].mxu0
        %v367 = vadd.f32 0.0, %v366
        %v368 = vpop.f32.mrb[0].mxu0
        %v369 = vpop.f32.mrb[0].mxu0
        %v370 = vpop.f32.mrb[0].mxu0
        %371 = vdwg.mxu0
        %v372 = vld [vmem:[#allocation2] sm:$0xff]
        %v373 = vsel %vm325, %v367, -inf
        %374 = vmax.xlane.f32.xlu0 %v373
        %v375 = vpop.xlane.xlu0 %374
        %v376 = vmax.f32 %v372, %v375
        %v377 = vsub.f32 %v372, %v376
        %v378 = vmul.f32 %v377, 1.442695
        %v379 = vpow.pop %v378
        %381 = vset.pattern.permute.xlu0 0
        %382 = vperm.xlu0 %381, %v376
        %v383 = vpop.permute.xlu0 %382
        %v385 = vsub.f32 %v367, %v383
        %v386 = vmul.f32 %v385, 1.442695
        %v387 = vpow.pop %v386
        %v388 = vld [vmem:[#allocation3] sm:$0xff]
        %v389 = vmul.f32 %v379, %v388
        %v390 = vsel %vm325, %v387, 0.0
        %391 = vadd.xlane.f32.xlu0 %v390
        %v392 = vpop.xlane.xlu0 %391
        %v393 = vadd.f32 %v389, %v392
        %vm394 = vcmask 7168
        %395 = vst.msk [vmem:[#allocation3] sm:$0xff] %vm394, %v393
        %v396 = vld [vmem:[#allocation4] sm:$0xff]
        %398 = vset.pattern.permute.xlu0 0
        %399 = vperm.xlu0 %398, %v379
        %v400 = vpop.permute.xlu0 %399
        %v402 = vmul.f32 %v400, %v396
        %v403 = vpack.c.bf16 %v387, %v387
        %v405 = vsel %vm325, %v403, 0
        %vm407 = vcmask 1043456
        %v409 = vsel %vm407, %v324, 0
        %411 = vmatprep.subr.bf16.mxu0 0
        %412 = vmatpush1.bf16.msra.mxu0 %v409
        %413 = vmatprep.subr.bf16.mxu0 0
        %414 = vmatpush1.bf16.msra.mxu0 0
        %415 = vmatprep.subr.bf16.mxu0 0
        %416 = vmatpush1.bf16.msra.mxu0 0
        %417 = vmatprep.subr.bf16.mxu0 0
        %418 = vmatpush1.bf16.msra.mxu0 0
        %419 = vmatprep.subr.bf16.mxu0 0
        %420 = vmatpush1.bf16.msra.mxu0 0
        %421 = vmatprep.subr.bf16.mxu0 0
        %422 = vmatpush1.bf16.msra.mxu0 0
        %423 = vmatprep.subr.bf16.mxu0 0
        %424 = vmatpush1.bf16.msra.mxu0 0
        %425 = vmatprep.subr.bf16.mxu0 0
        %426 = vmatpush1.bf16.msra.mxu0 0
        %427 = vmatprep.subr.bf16.mxu0 0
        %428 = vmatpush1.bf16.msra.mxu0 0
        %429 = vmatprep.subr.bf16.mxu0 0
        %430 = vmatpush1.bf16.msra.mxu0 0
        %431 = vmatprep.subr.bf16.mxu0 0
        %432 = vmatpush1.bf16.msra.mxu0 0
        %433 = vmatprep.subr.bf16.mxu0 0
        %434 = vmatpush1.bf16.msra.mxu0 0
        %435 = vmatprep.subr.bf16.mxu0 0
        %436 = vmatpush1.bf16.msra.mxu0 0
        %437 = vmatprep.subr.bf16.mxu0 0
        %438 = vmatpush1.bf16.msra.mxu0 0
        %439 = vmatprep.subr.bf16.mxu0 0
        %440 = vmatpush1.bf16.msra.mxu0 0
        %441 = vmatprep.subr.bf16.mxu0 0
        %442 = vmatpush1.bf16.msra.mxu0 0
        %443 = vmatprep.mubr.bf16.mxu0 0
        %444 = vmatmul.mubr.bf16.gmra.mrb[0].mxu0 %v405
        %v445 = vpop.f32.mrb[0].mxu0
        %v446 = vadd.f32 0.0, %v445
        %v447 = vpop.f32.mrb[0].mxu0
        %v448 = vpop.f32.mrb[0].mxu0
        %v449 = vpop.f32.mrb[0].mxu0
        %450 = vdwg.mxu0
        %v451 = vadd.f32 %v402, %v446
        %452 = vst.msk [vmem:[#allocation4] sm:$0xff] %vm325, %v451
        %453 = vst.msk [vmem:[#allocation2] sm:$0xff] %vm394, %v376
        // Predicated region
        $region49: #{decoder_forward.21} parent=31 // pred_check
          %p454 = pneg %p313
        $region50: #{decoder_forward.21} parent=31 // pred_check_branch
          %456 = sbr.rel (%p454) target = $region52
        $region51: #{decoder_forward.21} parent=31 // pred_region
          %v457 = vld [vmem:[#allocation4] sm:$0xff]
          %v458 = vld [vmem:[#allocation3] sm:$0xff]
          %v459 = vrcp.pop %v458
          %461 = vset.pattern.permute.xlu0 0
          %462 = vperm.xlu0 %461, %v459
          %v463 = vpop.permute.xlu0 %462
          %v465 = vmul.f32 %v457, %v463
          %v466 = vpack.c.bf16 %v465, %v465
          %vm467 = vcmask 60416
          %468 = vst.msk [vmem:[%s310] sm:$0xf] %vm467, %v466
        $region52: #{decoder_forward.21} parent=31 // pred_fallthru
          _
        %s469 = sand.u32 %s153, 1
        %s470 = scalar_lea.sflag [#allocation7], %s469
        %s471 = sand.u32 %s153, 1
        %s472 = smul.addr %s471, 4
        %s473 = scalar_lea.vmem [#allocation11], %s472
        // Predicated region
        $region53: #{decoder_forward.21} parent=31 // pred_check
          %p474 = pneg %p163
        $region54: #{decoder_forward.21} parent=31 // pred_check_branch
          %476 = sbr.rel (%p474) target = $region56
        $region55: #{decoder_forward.21} parent=31 // pred_region
          %s478 = ssub.s32 64, 64
          %479 = vsyncadd %s470, %s478
          %s480 = sadd.s32 %s31, %s30
          %s481 = smul.addr %s29, 4
          %s482 = sadd.s32 %s480, %s481
          %s483 = smul.addr %s482, 64
          %s484 = scalar_lea.hbm %s3, %s483
          %s486 = sshll.u32 %s473, 4
          %s487 = int_to_ptr.vmem [resolvable:$true] %s486
          %489 = dma.vmem_to_hbm [thread:$0]  %s487, 64, %s484, %s470
        $region56: #{decoder_forward.21} parent=31 // pred_fallthru
          _
      $region32: #{decoder_forward.21} parent=5 // pred_fallthru
        _
      %p490 = scmp.le.s32.totalorder 2, %s18
      // Predicated region
      $region57: #{decoder_forward.21} parent=5 // pred_check
        %p491 = pneg %p490
      $region58: #{decoder_forward.21} parent=5 // pred_check_branch
        %493 = sbr.rel (%p491) target = $region60
      $region59: #{decoder_forward.21} parent=5 // pred_region
        %s494 = ssub.s32 %s18, 2
        // Predicated region
        $region61: #{decoder_forward.21} parent=59 // pred_check
          %p495 = pneg %p169
        $region62: #{decoder_forward.21} parent=59 // pred_check_branch
          %497 = sbr.rel (%p495) target = $region64
        $region63: #{decoder_forward.21} parent=59 // pred_region
          %s498 = sand.u32 %s154, 1
          %s499 = scalar_lea.sflag [#allocation7], %s498
          %s500 = sand.u32 %s154, 1
          %s501 = smul.addr %s500, 4
          %s502 = scalar_lea.vmem [#allocation11], %s501
          %503 = dma.done %s499, 64
        $region64: #{decoder_forward.21} parent=59 // pred_fallthru
          _
      $region60: #{decoder_forward.21} parent=5 // pred_fallthru
        _
    $region6: #{decoder_forward.21} parent=1 // loop_footer
      %s22 = sadd.s32 1, %s18
    $region7: #{decoder_forward.21} parent=1 // loop_footer_branch
      %17 = sbr.rel target = $region3
    $region8: #{decoder_forward.21} parent=1 // loop_exit
      _
    %504 = vsyncpa [#allocation6], 1
    %s505 = scalar_lea.sflag [#allocation6], 1
    %506 = vsyncpa %s505, 1
    %507 = vsyncpa [#allocation9], 1
    %s508 = scalar_lea.sflag [#allocation9], 1
    %509 = vsyncpa %s508, 1
    %510 = vsyncpa [#allocation7], 1
    %s511 = scalar_lea.sflag [#allocation7], 1
    %512 = vsyncpa %s511, 1

// kernel: decoder_forward.23
$region0: #{decoder_forward.23}
  #allocation0 [shape = 'u32[]', space=smem, size = 0x4, offset = 0x4, fixed_abs, tag = 'smem constant byte address 0x4 - core index']
  #allocation1 [shape = 'u32[144,128]{1,0:T(1,128)}', space=vmem, size = 0x12000, scoped, tag = 'internal scratch']
  #allocation2 [shape = 'f32[8,32]{1,0:T(8,128)}', space=vmem, size = 0x1000, scoped, tag = 'scratch operand']
  %s0 = inlined_call_operand.hbm [shape: bf16[2,1,8,32], index: 0, kind: input, shape index: {}, may-alias: {0,3}]
  %s1 = inlined_call_operand.hbm [shape: bf16[1,32,32], index: 1, kind: input, shape index: {}]
  %s2 = inlined_call_operand.hbm [shape: f32[1,32], index: 2, kind: input, shape index: {}]
  %s3 = inlined_call_operand.hbm [shape: bf16[2,8,32], index: 3, kind: input, shape index: {}, may-alias: {0,3}]
  %s4 = inlined_call_operand.hbm [shape: f32[1,32], index: 4, kind: input, shape index: {}]
  %s5 = inlined_call_operand.hbm [shape: f32[1,32], index: 5, kind: input, shape index: {}]
  %s6 = inlined_call_operand.hbm [shape: bf16[2,8,32], index: 6, kind: output, shape index: {}]
  %s7 = sld [smem:[#allocation0]]
  $region89: #{decoder_forward.23} parent=0
    _
  %s9 = ssub.s32 1, %s7
  %s10 = scalar_select 0, %s9, %s7
  $region1: #{decoder_forward.23} parent=0
    #allocation3 [shape = 'u8[4096]{0}', space=vmem, size = 0x1000, scoped, tag = 'input window, operand 0']
    #allocation4 [shape = 's32[2]{0}', space=sflag, size = 0x8, scoped, tag = 'scoped memory for decoder_forward.23']
    #allocation5 [shape = 's32[2]{0}', space=sflag, size = 0x8, scoped, tag = 'scoped memory for decoder_forward.23']
    #allocation6 [shape = 'u8[8192]{0}', space=vmem, size = 0x2000, scoped, tag = 'input window, operand 1, single buffered']
    #allocation7 [shape = 's32[1]{0}', space=sflag, size = 0x4, scoped, tag = 'scoped memory for decoder_forward.23']
    #allocation8 [shape = 'u8[512]{0}', space=vmem, size = 0x400, scoped, tag = 'input window, operand 2, single buffered']
    #allocation9 [shape = 'u8[4096]{0}', space=vmem, size = 0x1000, scoped, tag = 'input window, operand 3']
    #allocation10 [shape = 's32[2]{0}', space=sflag, size = 0x8, scoped, tag = 'scoped memory for decoder_forward.23']
    #allocation11 [shape = 'u8[512]{0}', space=vmem, size = 0x400, scoped, tag = 'input window, operand 4, single buffered']
    #allocation12 [shape = 'u8[512]{0}', space=vmem, size = 0x400, scoped, tag = 'input window, operand 5, single buffered']
    #allocation13 [shape = 's32[1]{0}', space=sflag, size = 0x4, scoped, tag = 'scoped memory for decoder_forward.23']
    #allocation14 [shape = 'u8[4096]{0}', space=vmem, size = 0x1000, scoped, tag = 'output window, operand 0']
    %11 = vsyncpa [#allocation4], 0
    %s12 = scalar_lea.sflag [#allocation4], 1
    %13 = vsyncpa %s12, 0
    %14 = vsyncpa [#allocation7], 0
    %15 = vsyncpa [#allocation10], 0
    %s16 = scalar_lea.sflag [#allocation10], 1
    %17 = vsyncpa %s16, 0
    %18 = vsyncpa [#allocation13], 0
    %19 = vsyncpa [#allocation5], 0
    %s20 = scalar_lea.sflag [#allocation5], 1
    %21 = vsyncpa %s20, 0
    loop: start=0, step=1, limit=4
    $region2: #{decoder_forward.23} parent=1 // loop_pre_header
      _
    $region3: #{decoder_forward.23} parent=1 // loop_header
      %s23 = sphi 0, %s27
      %p24 = scmp.ge.s32.totalorder %s23, 4
      %s30 = sphi 0, %s49
      %s31 = sphi 0, %s45
      %s32 = sphi 0, %s41
      %s33 = sphi 0, %s30
      %s34 = sphi 0, %s31
      %s35 = sphi 0, %s32
      %s36 = sphi 0, %s33
      %s37 = sphi 0, %s34
      %s38 = sphi 0, %s35
      %s56 = sphi 0, %s58
      %s59 = sphi 0, %s56
      %s60 = sphi 0, %s59
      %s76 = sphi 0, %s60
      %s82 = sphi 0, %s84
      %s85 = sphi 0, %s82
      %s86 = sphi 0, %s85
      %s102 = sphi 0, %s86
      %s106 = sphi 0, %s106
      %s108 = sphi 0, %s106
      %s109 = sphi 0, %s108
      %s123 = sphi 0, %s109
      %s131 = sphi 0, %s133
      %s134 = sphi 0, %s131
      %s135 = sphi 0, %s134
      %s151 = sphi 0, %s135
      %s155 = sphi 0, %s155
      %s157 = sphi 0, %s155
      %s158 = sphi 0, %s157
      %s172 = sphi 0, %s158
      %s176 = sphi 0, %s176
      %s178 = sphi 0, %s176
      %s179 = sphi 0, %s178
      %s193 = sphi 0, %s179
      %s201 = sphi 0, %s203
      %s204 = sphi 0, %s201
      %s205 = sphi 0, %s204
      %s221 = sphi 0, %s205
    $region4: #{decoder_forward.23} parent=1 // loop_header_branch
      %26 = sbr.rel (%p24) target = $region8
    $region5: #{decoder_forward.23} parent=1 // loop_body
      %s28 = ssub.s32 %s23, 1
      %s29 = ssub.s32 %s23, 2
      %s39 = sadd.s32 1, %s32
      %p40 = scmp.ge.s32.totalorder %s39, 1
      %s41 = scalar_select %p40, 0, %s39
      %s42 = sadd.s32 1, %s31
      %s43 = scalar_select %p40, %s42, %s31
      %p44 = scmp.ge.s32.totalorder %s43, 1
      %s45 = scalar_select %p44, 0, %s43
      %s46 = sadd.s32 1, %s30
      %s47 = scalar_select %p44, %s46, %s30
      %p48 = scmp.ge.s32.totalorder %s47, 2
      %s49 = scalar_select %p48, 0, %s47
      %s50 = ssub.s32 %s30, %s49
      %s51 = ssub.s32 %s32, %s41
      %s52 = sor.u32 %s50, %s51
      %s53 = ssub.s32 %s31, %s45
      %s54 = sor.u32 %s52, %s53
      %p55 = scmp.eq.s32.totalorder %s54, 0
      %s57 = sadd.s32 %s56, 1
      %s58 = scalar_select %p55, %s56, %s57
      %p61 = pneg %p55
      %p62 = scmp.eq.s32.totalorder %s23, 1
      %p63 = por %p61, %p62
      %p64 = scmp.ne.s32.totalorder %s56, %s59
      %p65 = scmp.eq.s32.totalorder %s23, 0
      %p66 = por %p64, %p65
      %p67 = scmp.ne.s32.totalorder %s56, %s59
      %p68 = scmp.eq.s32.totalorder %s28, 1
      %p69 = por %p67, %p68
      %p70 = scmp.ne.s32.totalorder %s59, %s60
      %p71 = scmp.eq.s32.totalorder %s28, 0
      %p72 = por %p70, %p71
      %p73 = scmp.ne.s32.totalorder %s59, %s60
      %p74 = scmp.eq.s32.totalorder %s29, 1
      %p75 = por %p73, %p74
      %p77 = scmp.ne.s32.totalorder %s60, %s76
      %p78 = scmp.eq.s32.totalorder %s29, 0
      %p79 = por %p77, %p78
      %s80 = ssub.s32 %s32, %s41
      %p81 = scmp.eq.s32.totalorder %s80, 0
      %s83 = sadd.s32 %s82, 1
      %s84 = scalar_select %p81, %s82, %s83
      %p87 = pneg %p81
      %p88 = scmp.eq.s32.totalorder %s23, 1
      %p89 = por %p87, %p88
      %p90 = scmp.ne.s32.totalorder %s82, %s85
      %p91 = scmp.eq.s32.totalorder %s23, 0
      %p92 = por %p90, %p91
      %p93 = scmp.ne.s32.totalorder %s82, %s85
      %p94 = scmp.eq.s32.totalorder %s28, 1
      %p95 = por %p93, %p94
      %p96 = scmp.ne.s32.totalorder %s85, %s86
      %p97 = scmp.eq.s32.totalorder %s28, 0
      %p98 = por %p96, %p97
      %p99 = scmp.ne.s32.totalorder %s85, %s86
      %p100 = scmp.eq.s32.totalorder %s29, 1
      %p101 = por %p99, %p100
      %p103 = scmp.ne.s32.totalorder %s86, %s102
      %p104 = scmp.eq.s32.totalorder %s29, 0
      %p105 = por %p103, %p104
      %s107 = sadd.s32 %s106, 1
      %p110 = scmp.eq.s32.totalorder %s23, 1
      %p111 = scmp.ne.s32.totalorder %s106, %s108
      %p112 = scmp.eq.s32.totalorder %s23, 0
      %p113 = por %p111, %p112
      %p114 = scmp.ne.s32.totalorder %s106, %s108
      %p115 = scmp.eq.s32.totalorder %s28, 1
      %p116 = por %p114, %p115
      %p117 = scmp.ne.s32.totalorder %s108, %s109
      %p118 = scmp.eq.s32.totalorder %s28, 0
      %p119 = por %p117, %p118
      %p120 = scmp.ne.s32.totalorder %s108, %s109
      %p121 = scmp.eq.s32.totalorder %s29, 1
      %p122 = por %p120, %p121
      %p124 = scmp.ne.s32.totalorder %s109, %s123
      %p125 = scmp.eq.s32.totalorder %s29, 0
      %p126 = por %p124, %p125
      %s127 = ssub.s32 %s30, %s49
      %s128 = ssub.s32 %s31, %s45
      %s129 = sor.u32 %s127, %s128
      %p130 = scmp.eq.s32.totalorder %s129, 0
      %s132 = sadd.s32 %s131, 1
      %s133 = scalar_select %p130, %s131, %s132
      %p136 = pneg %p130
      %p137 = scmp.eq.s32.totalorder %s23, 1
      %p138 = por %p136, %p137
      %p139 = scmp.ne.s32.totalorder %s131, %s134
      %p140 = scmp.eq.s32.totalorder %s23, 0
      %p141 = por %p139, %p140
      %p142 = scmp.ne.s32.totalorder %s131, %s134
      %p143 = scmp.eq.s32.totalorder %s28, 1
      %p144 = por %p142, %p143
      %p145 = scmp.ne.s32.totalorder %s134, %s135
      %p146 = scmp.eq.s32.totalorder %s28, 0
      %p147 = por %p145, %p146
      %p148 = scmp.ne.s32.totalorder %s134, %s135
      %p149 = scmp.eq.s32.totalorder %s29, 1
      %p150 = por %p148, %p149
      %p152 = scmp.ne.s32.totalorder %s135, %s151
      %p153 = scmp.eq.s32.totalorder %s29, 0
      %p154 = por %p152, %p153
      %s156 = sadd.s32 %s155, 1
      %p159 = scmp.eq.s32.totalorder %s23, 1
      %p160 = scmp.ne.s32.totalorder %s155, %s157
      %p161 = scmp.eq.s32.totalorder %s23, 0
      %p162 = por %p160, %p161
      %p163 = scmp.ne.s32.totalorder %s155, %s157
      %p164 = scmp.eq.s32.totalorder %s28, 1
      %p165 = por %p163, %p164
      %p166 = scmp.ne.s32.totalorder %s157, %s158
      %p167 = scmp.eq.s32.totalorder %s28, 0
      %p168 = por %p166, %p167
      %p169 = scmp.ne.s32.totalorder %s157, %s158
      %p170 = scmp.eq.s32.totalorder %s29, 1
      %p171 = por %p169, %p170
      %p173 = scmp.ne.s32.totalorder %s158, %s172
      %p174 = scmp.eq.s32.totalorder %s29, 0
      %p175 = por %p173, %p174
      %s177 = sadd.s32 %s176, 1
      %p180 = scmp.eq.s32.totalorder %s23, 1
      %p181 = scmp.ne.s32.totalorder %s176, %s178
      %p182 = scmp.eq.s32.totalorder %s23, 0
      %p183 = por %p181, %p182
      %p184 = scmp.ne.s32.totalorder %s176, %s178
      %p185 = scmp.eq.s32.totalorder %s28, 1
      %p186 = por %p184, %p185
      %p187 = scmp.ne.s32.totalorder %s178, %s179
      %p188 = scmp.eq.s32.totalorder %s28, 0
      %p189 = por %p187, %p188
      %p190 = scmp.ne.s32.totalorder %s178, %s179
      %p191 = scmp.eq.s32.totalorder %s29, 1
      %p192 = por %p190, %p191
      %p194 = scmp.ne.s32.totalorder %s179, %s193
      %p195 = scmp.eq.s32.totalorder %s29, 0
      %p196 = por %p194, %p195
      %s197 = ssub.s32 %s30, %s49
      %s198 = ssub.s32 %s31, %s45
      %s199 = sor.u32 %s197, %s198
      %p200 = scmp.eq.s32.totalorder %s199, 0
      %s202 = sadd.s32 %s201, 1
      %s203 = scalar_select %p200, %s201, %s202
      %p206 = pneg %p200
      %p207 = scmp.eq.s32.totalorder %s23, 1
      %p208 = por %p206, %p207
      %p209 = scmp.ne.s32.totalorder %s201, %s204
      %p210 = scmp.eq.s32.totalorder %s23, 0
      %p211 = por %p209, %p210
      %p212 = scmp.ne.s32.totalorder %s201, %s204
      %p213 = scmp.eq.s32.totalorder %s28, 1
      %p214 = por %p212, %p213
      %p215 = scmp.ne.s32.totalorder %s204, %s205
      %p216 = scmp.eq.s32.totalorder %s28, 0
      %p217 = por %p215, %p216
      %p218 = scmp.ne.s32.totalorder %s204, %s205
      %p219 = scmp.eq.s32.totalorder %s29, 1
      %p220 = por %p218, %p219
      %p222 = scmp.ne.s32.totalorder %s205, %s221
      %p223 = scmp.eq.s32.totalorder %s29, 0
      %p224 = por %p222, %p223
      %p225 = scmp.le.s32.totalorder 1, %s23
      %p226 = scmp.lt.s32.totalorder %s23, 3
      %p227 = pnand %p225, %p226
      %p228 = pneg %p227
      // Predicated region
      $region9: #{decoder_forward.23} parent=5 // pred_check
        _
      $region10: #{decoder_forward.23} parent=5 // pred_check_branch
        %230 = sbr.rel (%p227) target = $region12
      $region11: #{decoder_forward.23} parent=5 // pred_region
        %s231 = ssub.s32 %s23, 1
        // Predicated region
        $region13: #{decoder_forward.23} parent=11 // pred_check
          %p232 = pneg %p98
        $region14: #{decoder_forward.23} parent=11 // pred_check_branch
          %234 = sbr.rel (%p232) target = $region16
        $region15: #{decoder_forward.23} parent=11 // pred_region
          %s236 = ssub.s32 256, 256
          %237 = vsyncadd [#allocation7], %s236
          %s238 = smul.addr %s35, 4
          %s239 = smul.addr %s238, 64
          %s240 = scalar_lea.hbm %s1, %s239
          %s241 = sshll.u32 [#allocation6], 4
          %s242 = int_to_ptr.vmem [resolvable:$true] %s241
          %247 = dma.hbm_to_vmem [thread:$0]  %s240, 256, %s242, [#allocation7], 64, 64, 4
        $region16: #{decoder_forward.23} parent=11 // pred_fallthru
          _
        // Predicated region
        $region17: #{decoder_forward.23} parent=11 // pred_check
          %p248 = pneg %p119
        $region18: #{decoder_forward.23} parent=11 // pred_check_branch
          %250 = sbr.rel (%p248) target = $region20
        $region19: #{decoder_forward.23} parent=11 // pred_region
          %s252 = ssub.s32 16, 16
          %253 = vsyncadd [#allocation7], %s252
          %s255 = sshll.u32 [#allocation8], 4
          %s256 = int_to_ptr.vmem [resolvable:$true] %s255
          %258 = dma.hbm_to_vmem [thread:$0]  %s2, 16, %s256, [#allocation7]
        $region20: #{decoder_forward.23} parent=11 // pred_fallthru
          _
        // Predicated region
        $region21: #{decoder_forward.23} parent=11 // pred_check
          %p259 = pneg %p168
        $region22: #{decoder_forward.23} parent=11 // pred_check_branch
          %261 = sbr.rel (%p259) target = $region24
        $region23: #{decoder_forward.23} parent=11 // pred_region
          %s263 = ssub.s32 16, 16
          %264 = vsyncadd [#allocation10], %s263
          %s266 = sshll.u32 [#allocation11], 4
          %s267 = int_to_ptr.vmem [resolvable:$true] %s266
          %269 = dma.hbm_to_vmem [thread:$0]  %s4, 16, %s267, [#allocation10]
        $region24: #{decoder_forward.23} parent=11 // pred_fallthru
          _
        // Predicated region
        $region25: #{decoder_forward.23} parent=11 // pred_check
          %p270 = pneg %p189
        $region26: #{decoder_forward.23} parent=11 // pred_check_branch
          %272 = sbr.rel (%p270) target = $region28
        $region27: #{decoder_forward.23} parent=11 // pred_region
          %s274 = ssub.s32 16, 16
          %275 = vsyncadd [#allocation13], %s274
          %s277 = sshll.u32 [#allocation12], 4
          %s278 = int_to_ptr.vmem [resolvable:$true] %s277
          %280 = dma.hbm_to_vmem [thread:$0]  %s5, 16, %s278, [#allocation13]
        $region28: #{decoder_forward.23} parent=11 // pred_fallthru
          _
      $region12: #{decoder_forward.23} parent=5 // pred_fallthru
        _
      %p281 = scmp.lt.s32.totalorder %s23, 2
      // Predicated region
      $region29: #{decoder_forward.23} parent=5 // pred_check
        %p282 = pneg %p281
      $region30: #{decoder_forward.23} parent=5 // pred_check_branch
        %284 = sbr.rel (%p282) target = $region32
      $region31: #{decoder_forward.23} parent=5 // pred_region
        // Predicated region
        $region33: #{decoder_forward.23} parent=31 // pred_check
          %p285 = pneg %p66
        $region34: #{decoder_forward.23} parent=31 // pred_check_branch
          %287 = sbr.rel (%p285) target = $region36
        $region35: #{decoder_forward.23} parent=31 // pred_region
          %s288 = sand.u32 %s56, 1
          %s289 = scalar_lea.sflag [#allocation4], %s288
          %s290 = sand.u32 %s56, 1
          %s291 = smul.addr %s290, 4
          %s292 = scalar_lea.vmem [#allocation3], %s291
          %s294 = ssub.s32 64, 64
          %295 = vsyncadd %s289, %s294
          %s296 = sadd.s32 %s31, %s32
          %s297 = sadd.s32 %s296, %s30
          %s298 = smul.addr %s297, 64
          %s299 = scalar_lea.hbm %s0, %s298
          %s301 = sshll.u32 %s292, 4
          %s302 = int_to_ptr.vmem [resolvable:$true] %s301
          %304 = dma.hbm_to_vmem [thread:$0]  %s299, 64, %s302, %s289
        $region36: #{decoder_forward.23} parent=31 // pred_fallthru
          _
        // Predicated region
        $region37: #{decoder_forward.23} parent=31 // pred_check
          %p305 = pneg %p141
        $region38: #{decoder_forward.23} parent=31 // pred_check_branch
          %307 = sbr.rel (%p305) target = $region40
        $region39: #{decoder_forward.23} parent=31 // pred_region
          %s308 = sand.u32 %s23, 1
          %s309 = scalar_lea.sflag [#allocation10], %s308
          %s310 = sand.u32 %s131, 1
          %s311 = smul.addr %s310, 4
          %s312 = scalar_lea.vmem [#allocation9], %s311
          %s314 = ssub.s32 64, 64
          %315 = vsyncadd %s309, %s314
          %s316 = sadd.s32 %s31, %s30
          %s317 = smul.addr %s316, 64
          %s318 = scalar_lea.hbm %s3, %s317
          %s320 = sshll.u32 %s312, 4
          %s321 = int_to_ptr.vmem [resolvable:$true] %s320
          %323 = dma.hbm_to_vmem [thread:$0]  %s318, 64, %s321, %s309
        $region40: #{decoder_forward.23} parent=31 // pred_fallthru
          _
      $region32: #{decoder_forward.23} parent=5 // pred_fallthru
        _
      %p324 = scmp.le.s32.totalorder 1, %s23
      %p325 = scmp.lt.s32.totalorder %s23, 3
      %p326 = pnand %p324, %p325
      %p327 = pneg %p326
      // Predicated region
      $region41: #{decoder_forward.23} parent=5 // pred_check
        _
      $region42: #{decoder_forward.23} parent=5 // pred_check_branch
        %329 = sbr.rel (%p326) target = $region44
      $region43: #{decoder_forward.23} parent=5 // pred_region
        %s330 = ssub.s32 %s23, 1
        %s331 = sand.u32 %s59, 1
        %s332 = scalar_lea.sflag [#allocation4], %s331
        %s333 = sand.u32 %s59, 1
        %s334 = smul.addr %s333, 4
        %s335 = scalar_lea.vmem [#allocation3], %s334
        // Predicated region
        $region45: #{decoder_forward.23} parent=43 // pred_check
          %p336 = pneg %p72
        $region46: #{decoder_forward.23} parent=43 // pred_check_branch
          %338 = sbr.rel (%p336) target = $region48
        $region47: #{decoder_forward.23} parent=43 // pred_region
          %339 = dma.done %s332, 64
        $region48: #{decoder_forward.23} parent=43 // pred_fallthru
          _
        // Predicated region
        $region49: #{decoder_forward.23} parent=43 // pred_check
          %p340 = pneg %p98
        $region50: #{decoder_forward.23} parent=43 // pred_check_branch
          %342 = sbr.rel (%p340) target = $region52
        $region51: #{decoder_forward.23} parent=43 // pred_region
          %343 = dma.done [#allocation7], 256
        $region52: #{decoder_forward.23} parent=43 // pred_fallthru
          _
        // Predicated region
        $region53: #{decoder_forward.23} parent=43 // pred_check
          %p344 = pneg %p119
        $region54: #{decoder_forward.23} parent=43 // pred_check_branch
          %346 = sbr.rel (%p344) target = $region56
        $region55: #{decoder_forward.23} parent=43 // pred_region
          %347 = dma.done [#allocation7], 16
        $region56: #{decoder_forward.23} parent=43 // pred_fallthru
          _
        %s348 = sand.u32 %s28, 1
        %s349 = scalar_lea.sflag [#allocation10], %s348
        %s350 = sand.u32 %s134, 1
        %s351 = smul.addr %s350, 4
        %s352 = scalar_lea.vmem [#allocation9], %s351
        // Predicated region
        $region57: #{decoder_forward.23} parent=43 // pred_check
          %p353 = pneg %p147
        $region58: #{decoder_forward.23} parent=43 // pred_check_branch
          %355 = sbr.rel (%p353) target = $region60
        $region59: #{decoder_forward.23} parent=43 // pred_region
          %356 = dma.done %s349, 64
        $region60: #{decoder_forward.23} parent=43 // pred_fallthru
          _
        // Predicated region
        $region61: #{decoder_forward.23} parent=43 // pred_check
          %p357 = pneg %p168
        $region62: #{decoder_forward.23} parent=43 // pred_check_branch
          %359 = sbr.rel (%p357) target = $region64
        $region63: #{decoder_forward.23} parent=43 // pred_region
          %360 = dma.done [#allocation10], 16
        $region64: #{decoder_forward.23} parent=43 // pred_fallthru
          _
        // Predicated region
        $region65: #{decoder_forward.23} parent=43 // pred_check
          %p361 = pneg %p189
        $region66: #{decoder_forward.23} parent=43 // pred_check_branch
          %363 = sbr.rel (%p361) target = $region68
        $region67: #{decoder_forward.23} parent=43 // pred_region
          %364 = dma.done [#allocation13], 16
        $region68: #{decoder_forward.23} parent=43 // pred_fallthru
          _
        %s365 = sand.u32 %s59, 1
        %s366 = scalar_lea.sflag [#allocation4], %s365
        %s367 = sand.u32 %s59, 1
        %s368 = smul.addr %s367, 4
        %s369 = scalar_lea.vmem [#allocation3], %s368
        %p370 = pneg %p72
        %p371 = pneg %p69
        %p372 = pneg %p98
        %p373 = pneg %p95
        %p374 = pneg %p119
        %p375 = pneg %p116
        %s376 = sand.u32 %s28, 1
        %s377 = scalar_lea.sflag [#allocation10], %s376
        %s378 = sand.u32 %s134, 1
        %s379 = smul.addr %s378, 4
        %s380 = scalar_lea.vmem [#allocation9], %s379
        %p381 = pneg %p147
        %p382 = pneg %p144
        %p383 = pneg %p168
        %p384 = pneg %p165
        %p385 = pneg %p189
        %p386 = pneg %p186
        %p387 = pneg %p217
        %p388 = pneg %p214
        %s389 = sand.u32 %s204, 1
        %s390 = scalar_lea.sflag [#allocation5], %s389
        %s391 = sand.u32 %s204, 1
        %s392 = smul.addr %s391, 4
        %s393 = scalar_lea.vmem [#allocation14], %s392
        %p395 = scmp.eq.s32.totalorder %s35, 0
        // Predicated region
        $region69: #{decoder_forward.23} parent=43 // pred_check
          %p396 = pneg %p395
        $region70: #{decoder_forward.23} parent=43 // pred_check_branch
          %398 = sbr.rel (%p396) target = $region72
        $region71: #{decoder_forward.23} parent=43 // pred_region
          %vm399 = vcmask 261120
          %400 = vst.msk [vmem:[#allocation2] sm:$0xff] %vm399, 0.0
        $region72: #{decoder_forward.23} parent=43 // pred_fallthru
          _
        %v401 = vld [vmem:[#allocation2] sm:$0xff]
        %v402 = vld [vmem:[%s335] sm:$0xf]
        %v403 = vld [vmem:[#allocation6] sm:$0xf]
        %v404 = vld [vmem:[#allocation6 + $0x4] sm:$0xf]
        %v405 = vld [vmem:[#allocation6 + $0x8] sm:$0xf]
        %v406 = vld [vmem:[#allocation6 + $0xc] sm:$0xf]
        %v411 = vunpack.c.l.b16 %v403
        %v412 = vunpack.c.l.b16 %v404
        %v413 = vunpack.c.l.b16 %v405
        %v414 = vunpack.c.l.b16 %v406
        %v415 = vpack.c.b16 %v412, %v411
        %v416 = vpack.c.b16 %v414, %v413
        %vm419 = vcmask 261120
        %v421 = vsel %vm419, %v402, 0
        %423 = vmatprep.subr.bf16.mxu0 0
        %424 = vmatpush1.bf16.msra.mxu0 %v415
        %425 = vmatprep.subr.bf16.mxu0 0
        %426 = vmatpush1.bf16.msra.mxu0 %v416
        %427 = vmatprep.subr.bf16.mxu0 0
        %428 = vmatpush1.bf16.msra.mxu0 0
        %429 = vmatprep.subr.bf16.mxu0 0
        %430 = vmatpush1.bf16.msra.mxu0 0
        %431 = vmatprep.subr.bf16.mxu0 0
        %432 = vmatpush1.bf16.msra.mxu0 0
        %433 = vmatprep.subr.bf16.mxu0 0
        %434 = vmatpush1.bf16.msra.mxu0 0
        %435 = vmatprep.subr.bf16.mxu0 0
        %436 = vmatpush1.bf16.msra.mxu0 0
        %437 = vmatprep.subr.bf16.mxu0 0
        %438 = vmatpush1.bf16.msra.mxu0 0
        %439 = vmatprep.subr.bf16.mxu0 0
        %440 = vmatpush1.bf16.msra.mxu0 0
        %441 = vmatprep.subr.bf16.mxu0 0
        %442 = vmatpush1.bf16.msra.mxu0 0
        %443 = vmatprep.subr.bf16.mxu0 0
        %444 = vmatpush1.bf16.msra.mxu0 0
        %445 = vmatprep.subr.bf16.mxu0 0
        %446 = vmatpush1.bf16.msra.mxu0 0
        %447 = vmatprep.subr.bf16.mxu0 0
        %448 = vmatpush1.bf16.msra.mxu0 0
        %449 = vmatprep.subr.bf16.mxu0 0
        %450 = vmatpush1.bf16.msra.mxu0 0
        %451 = vmatprep.subr.bf16.mxu0 0
        %452 = vmatpush1.bf16.msra.mxu0 0
        %453 = vmatprep.subr.bf16.mxu0 0
        %454 = vmatpush1.bf16.msra.mxu0 0
        %455 = vmatprep.mubr.bf16.mxu0 0
        %456 = vmatmul.mubr.bf16.gmra.mrb[0].mxu0 %v421
        %v457 = vpop.f32.mrb[0].mxu0
        %v458 = vadd.f32 0.0, %v457
        %v459 = vpop.f32.mrb[0].mxu0
        %v460 = vpop.f32.mrb[0].mxu0
        %v461 = vpop.f32.mrb[0].mxu0
        %462 = vdwg.mxu0
        %v463 = vadd.f32 %v401, %v458
        %464 = vst.msk [vmem:[#allocation2] sm:$0xff] %vm419, %v463
        // Predicated region
        $region73: #{decoder_forward.23} parent=43 // pred_check
          %p465 = pneg %p395
        $region74: #{decoder_forward.23} parent=43 // pred_check_branch
          %467 = sbr.rel (%p465) target = $region76
        $region75: #{decoder_forward.23} parent=43 // pred_region
          %v468 = vld [vmem:[#allocation2] sm:$0xff]
          %v469 = vld [vmem:[#allocation8] sm:$0x1]
          %v471 = vlaneseq
          %v472 = vshrl.u32 %v471, 7
          %v473 = vsub.s32 0, %v472
          %v474 = vrot.slane %v469, %v473
          %v476 = vadd.f32 %v468, %v474
          %v477 = vld [vmem:[%s352] sm:$0xf]
          %v478 = vunpack.c.l.bf16 %v477
          %v479 = vadd.f32 %v476, %v478
          %v480 = vsel %vm419, %v479, 0.0
          %481 = vadd.xlane.f32.xlu0 %v480
          %v482 = vpop.xlane.xlu0 %481
          %v483 = vrcp.pop 32.0
          %v484 = vmul.f32 %v482, %v483
          %v485 = vsub.f32 %v479, %v484
          %v486 = vmul.f32 %v485, %v485
          %v487 = vsel %vm419, %v486, 0.0
          %488 = vadd.xlane.f32.xlu0 %v487
          %v489 = vpop.xlane.xlu0 %488
          %v490 = vmul.f32 %v489, %v483
          %v491 = vadd.f32 %v490, 1e-05
          %v492 = vrsqrt.pop %v491
          %v493 = vmul.f32 %v485, %v492
          %v494 = vld [vmem:[#allocation11] sm:$0x1]
          %v496 = vlaneseq
          %v497 = vshrl.u32 %v496, 7
          %v498 = vsub.s32 0, %v497
          %v499 = vrot.slane %v494, %v498
          %v501 = vmul.f32 %v493, %v499
          %v502 = vld [vmem:[#allocation12] sm:$0x1]
          %v504 = vlaneseq
          %v505 = vshrl.u32 %v504, 7
          %v506 = vsub.s32 0, %v505
          %v507 = vrot.slane %v502, %v506
          %v509 = vadd.f32 %v501, %v507
          %v510 = vpack.c.bf16 %v509, %v509
          %vm511 = vcmask 257024
          %512 = vst.msk [vmem:[%s393] sm:$0xf] %vm511, %v510
        $region76: #{decoder_forward.23} parent=43 // pred_fallthru
          _
        %s513 = sand.u32 %s204, 1
        %s514 = scalar_lea.sflag [#allocation5], %s513
        %s515 = sand.u32 %s204, 1
        %s516 = smul.addr %s515, 4
        %s517 = scalar_lea.vmem [#allocation14], %s516
        // Predicated region
        $region77: #{decoder_forward.23} parent=43 // pred_check
          %p518 = pneg %p214
        $region78: #{decoder_forward.23} parent=43 // pred_check_branch
          %520 = sbr.rel (%p518) target = $region80
        $region79: #{decoder_forward.23} parent=43 // pred_region
          %s522 = ssub.s32 64, 64
          %523 = vsyncadd %s514, %s522
          %s524 = sadd.s32 %s34, %s33
          %s525 = smul.addr %s524, 64
          %s526 = scalar_lea.hbm %s6, %s525
          %s528 = sshll.u32 %s517, 4
          %s529 = int_to_ptr.vmem [resolvable:$true] %s528
          %531 = dma.vmem_to_hbm [thread:$0]  %s529, 64, %s526, %s514
        $region80: #{decoder_forward.23} parent=43 // pred_fallthru
          _
      $region44: #{decoder_forward.23} parent=5 // pred_fallthru
        _
      %p532 = scmp.le.s32.totalorder 2, %s23
      // Predicated region
      $region81: #{decoder_forward.23} parent=5 // pred_check
        %p533 = pneg %p532
      $region82: #{decoder_forward.23} parent=5 // pred_check_branch
        %535 = sbr.rel (%p533) target = $region84
      $region83: #{decoder_forward.23} parent=5 // pred_region
        %s536 = ssub.s32 %s23, 2
        // Predicated region
        $region85: #{decoder_forward.23} parent=83 // pred_check
          %p537 = pneg %p220
        $region86: #{decoder_forward.23} parent=83 // pred_check_branch
          %539 = sbr.rel (%p537) target = $region88
        $region87: #{decoder_forward.23} parent=83 // pred_region
          %s540 = sand.u32 %s205, 1
          %s541 = scalar_lea.sflag [#allocation5], %s540
          %s542 = sand.u32 %s205, 1
          %s543 = smul.addr %s542, 4
          %s544 = scalar_lea.vmem [#allocation14], %s543
          %545 = dma.done %s541, 64
        $region88: #{decoder_forward.23} parent=83 // pred_fallthru
          _
      $region84: #{decoder_forward.23} parent=5 // pred_fallthru
        _
    $region6: #{decoder_forward.23} parent=1 // loop_footer
      %s27 = sadd.s32 1, %s23
    $region7: #{decoder_forward.23} parent=1 // loop_footer_branch
      %22 = sbr.rel target = $region3
    $region8: #{decoder_forward.23} parent=1 // loop_exit
      _
    %546 = vsyncpa [#allocation4], 1
    %s547 = scalar_lea.sflag [#allocation4], 1
    %548 = vsyncpa %s547, 1
    %549 = vsyncpa [#allocation7], 1
    %550 = vsyncpa [#allocation10], 1
    %s551 = scalar_lea.sflag [#allocation10], 1
    %552 = vsyncpa %s551, 1
    %553 = vsyncpa [#allocation13], 1
    %554 = vsyncpa [#allocation5], 1
    %s555 = scalar_lea.sflag [#allocation5], 1
    %556 = vsyncpa %s555, 1

</llo_original>
